<compile_context>
chip_gen: v7x
topology: tpu7x:2x2x1
jax: 0.10.0
libtpu: 0.0.40
codegen_flags: <defaults>
</compile_context>

<pallas_src>
import math

import numpy as np
import jax
import jax.numpy as jnp
from jax.experimental import pallas as pl
from jax.experimental.pallas import tpu as pltpu

BITWIDTH = 8
SEQ_LEN = 2 ** BITWIDTH

LANE_CANDIDATES = (512, 256, 128)   # exact-fit lane widths (multiples of 128)
DEFAULT_LANES = 512
MAX_TILE_ROWS = 256                 # tile height per time chunk (f32 rows)
MAX_TT = 8                          # bitstream cycles processed per grid step


# ----------------------------------------------------------------------------
# Deterministic constant-bit setup (host-side glue, plain numpy).
# Reproduces RNG("Sobol", dim) -> SourceGen(unipolar) -> BSGen(bs_idx).
# ----------------------------------------------------------------------------
_JOE_KUO = {                     # dim -> (s, a, m[1..s])  (standard Sobol dirs)
    2: (1, 0, [1]),
    3: (2, 1, [1, 3]),
    4: (3, 1, [1, 3, 1]),
    5: (3, 2, [1, 1, 1]),
}


def _sobol_points(n, dim):
    """Unscrambled Sobol sequence, shape (n, dim), first point = 0."""
    L = max(1, int(math.ceil(math.log2(max(n, 2)))))
    pts = np.zeros((n, dim), dtype=np.float64)
    for d in range(1, dim + 1):
        V = [0] * (L + 1)
        if d == 1:
            for i in range(1, L + 1):
                V[i] = 1 << (32 - i)
        else:
            s, a, m = _JOE_KUO[d]
            mm = [0] + m
            for i in range(1, min(s, L) + 1):
                V[i] = mm[i] << (32 - i)
            for i in range(s + 1, L + 1):
                V[i] = V[i - s] ^ (V[i - s] >> s)
                for k in range(1, s):
                    V[i] ^= ((a >> (s - 1 - k)) & 1) * V[i - k]
        X = 0
        pts[0, d - 1] = 0.0
        for i in range(1, n):
            c, v = 1, i - 1
            while v & 1:
                v >>= 1
                c += 1
            X ^= V[c]
            pts[i, d - 1] = X / 2.0 ** 32
    return pts


_SOBOL_CACHE = {}


def _rng_seq(dim):
    if dim not in _SOBOL_CACHE:
        _SOBOL_CACHE[dim] = _sobol_points(SEQ_LEN, dim)[:, dim - 1] * SEQ_LEN
    return _SOBOL_CACHE[dim]


def _constant_bits_seq(bs_idx0, T):
    """BSGen bits for the four series-expansion constants, cycles bs_idx0..+T-1.

    Returns float32 array (T, 4) with columns [n2_c, n3_c, n4_c, n5_c]."""
    probs = [62.0 / 153.0, 17.0 / 42.0, 2.0 / 5.0, 1.0 / 3.0]   # n2..n5
    dims = [1, 2, 3, 4]                                          # rng_dim .. +3
    out = np.zeros((T, 4), np.float32)
    for j, (p, d) in enumerate(zip(probs, dims)):
        rng_seq = _rng_seq(d)                                    # RNG()
        source = round(p * SEQ_LEN)                              # SourceGen (unipolar)
        for t in range(T):
            out[t, j] = 1.0 if source > rng_seq[(bs_idx0 + t) % SEQ_LEN] else 0.0
    return out


# ----------------------------------------------------------------------------
# Pallas kernel.  Grid = (spatial tile s [parallel], time chunk tc [arbitrary]).
# The delay registers are ring buffers in VMEM scratch:
#   xs[k]  holds x[t']  with t' = latest cycle < t such that t' % 8 == k
#   ds[k]  holds n1[t'] with t' = latest cycle < t such that t' % 3 == k
# so  input_4d4_1 = xs[(t+4)%8],  input_4d4_2 = xs[t%8] (read before write),
#     d1 = ds[(t+2)%3], d2 = ds[(t+1)%3], d3 = ds[t%3] (read before write).
# State is DMA'd HBM<->scratch once per spatial tile.
# ----------------------------------------------------------------------------
def _make_kernel(tile_r, tt_chunk):
    def kernel(cbits_ref, phase_ref, x_ref, xs_hbm, ds_hbm,
               out_ref, xs_out_hbm, ds_out_hbm,
               xs_ref, ds_ref, sem):
        s = pl.program_id(0)
        tc = pl.program_id(1)
        row0 = s * tile_r

        # Pull this spatial tile's carried register state into VMEM scratch
        # once, at the first time chunk.
        @pl.when(tc == 0)
        def _():
            cx = pltpu.make_async_copy(
                xs_hbm.at[:, pl.ds(row0, tile_r), :], xs_ref, sem.at[0])
            cd = pltpu.make_async_copy(
                ds_hbm.at[:, pl.ds(row0, tile_r), :], ds_ref, sem.at[1])
            cx.start()
            cd.start()
            cx.wait()
            cd.wait()

        base = phase_ref[0] + tc * tt_chunk      # global ring cursor of cycle 0

        for tt in range(tt_chunk):               # static unroll over the chunk
            t_local = tc * tt_chunk + tt         # cycle index within this call
            ring = base + tt                     # global cycle index
            sx = ring % 8                        # xs ring slot (holds x[t-8])
            sd = ring % 3                        # ds ring slot (holds n1[t-3])

            n2_c = cbits_ref[4 * t_local]        # per-cycle constant bits (SMEM)
            n3_c = cbits_ref[4 * t_local + 1]
            n4_c = cbits_ref[4 * t_local + 2]
            n5_c = cbits_ref[4 * t_local + 3]

            x = x_ref[tt]                        # this cycle's input bits
            in_4d4_2 = xs_ref[sx]                # x delayed 8 cycles (read before overwrite)
            in_4d4_1 = xs_ref[(sx + 4) % 8]      # x delayed 4 cycles
            d3 = ds_ref[sd]                      # n1 delayed 3 cycles (read before overwrite)
            d2 = ds_ref[(sd + 1) % 3]            # n1 delayed 2 cycles
            d1 = ds_ref[(sd + 2) % 3]            # n1 delayed 1 cycle

            # AND/NOT chain (AND == * on {0,1}, NOT == 1 - x).
            n1 = x * in_4d4_1                    # input_x & input_4d4_1
            n2 = 1.0 - n2_c * n1                 # 1 - (n_2_c & n1)
            n3 = 1.0 - n2 * (n3_c * d1)          # 1 - (n_2 & n_3_c & d1)
            n4 = 1.0 - n3 * (n4_c * d2)          # 1 - (n_3 & n_4_c & d2)
            n5 = 1.0 - n4 * (n5_c * d3)          # 1 - (n_4 & n_5_c & d3)
            out_ref[tt] = n5 * in_4d4_2          # n_5 & input_4d4_2

            # Ring-buffer writes replace the 11 shift assignments.
            xs_ref[sx] = x
            ds_ref[sd] = n1

        # Write the carried state back to HBM once, after the last time chunk.
        @pl.when(tc == pl.num_programs(1) - 1)
        def _():
            cx = pltpu.make_async_copy(
                xs_ref, xs_out_hbm.at[:, pl.ds(row0, tile_r), :], sem.at[0])
            cd = pltpu.make_async_copy(
                ds_ref, ds_out_hbm.at[:, pl.ds(row0, tile_r), :], sem.at[1])
            cx.start()
            cd.start()
            cx.wait()
            cd.wait()

    return kernel


# ----------------------------------------------------------------------------
# Layout helpers
# ----------------------------------------------------------------------------
def _choose_layout(n):
    """Pick (lanes, rows_pad) for the lane-dense 2-D slab; avoid padding when
    an exact fit exists."""
    for lanes in LANE_CANDIDATES:
        rows = n // lanes
        if rows > 0 and n % lanes == 0 and rows % 8 == 0:
            return lanes, rows                       # exact fit, no pad copy
    lanes = DEFAULT_LANES
    rows = (n + lanes - 1) // lanes
    rows = max(8, ((rows + 7) // 8) * 8)
    return lanes, rows


def _choose_tile_rows(rows_pad):
    """Largest tile height (multiple of 8, <= MAX_TILE_ROWS) dividing rows_pad,
    preferring >= 2 spatial tiles (megacore / v7x dual TC) when possible."""
    tile = 8
    for cand in range(min(MAX_TILE_ROWS, rows_pad), 7, -8):
        if rows_pad % cand == 0:
            tile = cand
            break
    if tile == rows_pad and rows_pad >= 16:
        half = (rows_pad // 2) // 8 * 8
        for cand in range(half, 7, -8):
            if rows_pad % cand == 0:
                tile = cand
                break
    return tile


# ----------------------------------------------------------------------------
# Wrapper
# ----------------------------------------------------------------------------
def tanh_comb_forward(x_seq, state=None, bs_idx0=0):
    """Run T consecutive tanhComb forward steps in a single pallas_call.

    x_seq : (T, *shape) array of {0,1} bitstream tensors, one per clock cycle
            (T = 1 reproduces a single PyTorch `forward`).
    state : None (module __init__ state: all registers zero) or the dict
            returned by a previous call (streaming across calls).
    Returns (out_seq, new_state); out_seq has x_seq's shape, dtype float32.
    """
    # TODO(synk): the bitstream is kept as f32 {0,1} to match the module's
    # float stype; bf16/int8 or bit-packed uint32 storage would cut HBM
    # traffic 2-32x on this bandwidth-bound op (tile rounding changes to 16/32).
    x_seq = jnp.asarray(x_seq, jnp.float32)
    assert x_seq.ndim >= 2, "x_seq needs a leading time axis"
    T = int(x_seq.shape[0])
    orig_shape = tuple(x_seq.shape[1:])
    n = int(np.prod(orig_shape))

    lanes, rows_pad = _choose_layout(n)
    tile_r = _choose_tile_rows(rows_pad)
    padded_n = rows_pad * lanes

    flat = x_seq.reshape(T, n)
    if padded_n != n:
        # TODO(synk): a masked tail tile in-kernel would avoid this extra HBM
        # copy of the input for ragged sizes.
        flat = jnp.pad(flat, ((0, 0), (0, padded_n - n)))
    x3d = flat.reshape(T, rows_pad, lanes)

    if state is None:
        xs = jnp.zeros((8, rows_pad, lanes), jnp.float32)   # x delay ring
        ds = jnp.zeros((3, rows_pad, lanes), jnp.float32)   # n1 delay ring
        step0 = 0
    else:
        xs, ds = state["xs"], state["ds"]
        bs_idx0 = int(state["bs_idx"])      # plain Python ints in the state dict
        step0 = int(state["step"])
        assert xs.shape == (8, rows_pad, lanes) and ds.shape == (3, rows_pad, lanes)

    # Cycles per grid step: largest divisor of T that is <= MAX_TT.
    tt_chunk = 1
    for cand in range(min(MAX_TT, T), 0, -1):
        if T % cand == 0:
            tt_chunk = cand
            break

    cbits = jnp.asarray(_constant_bits_seq(bs_idx0, T).reshape(-1), jnp.float32)  # (4*T,)
    phase = jnp.asarray([step0], jnp.int32)                                       # ring cursor

    grid = (rows_pad // tile_r, T // tt_chunk)   # spatial tiles (parallel) x time chunks

    kernel = _make_kernel(tile_r, tt_chunk)

    out3d, xs_new, ds_new = pl.pallas_call(
        kernel,
        out_shape=(
            jax.ShapeDtypeStruct((T, rows_pad, lanes), jnp.float32),
            jax.ShapeDtypeStruct((8, rows_pad, lanes), jnp.float32),
            jax.ShapeDtypeStruct((3, rows_pad, lanes), jnp.float32),
        ),
        grid=grid,
        in_specs=[
            pl.BlockSpec(memory_space=pltpu.MemorySpace.SMEM),                  # cbits (4*T,)
            pl.BlockSpec(memory_space=pltpu.MemorySpace.SMEM),                  # ring phase (1,)
            pl.BlockSpec((tt_chunk, tile_r, lanes), lambda s, t: (t, s, 0)),    # input stream
            pl.BlockSpec(memory_space=pl.ANY),                                  # xs state (HBM)
            pl.BlockSpec(memory_space=pl.ANY),                                  # ds state (HBM)
        ],
        out_specs=(
            pl.BlockSpec((tt_chunk, tile_r, lanes), lambda s, t: (t, s, 0)),    # output stream
            pl.BlockSpec(memory_space=pl.ANY),                                  # xs state out
            pl.BlockSpec(memory_space=pl.ANY),                                  # ds state out
        ),
        scratch_shapes=[
            pltpu.VMEM((8, tile_r, lanes), jnp.float32),    # xs ring working copy
            pltpu.VMEM((3, tile_r, lanes), jnp.float32),    # ds ring working copy
            pltpu.SemaphoreType.DMA((2,)),
        ],
        input_output_aliases={3: 1, 4: 2},                  # share the state HBM buffers
        compiler_params=pltpu.CompilerParams(
            dimension_semantics=("parallel", "arbitrary"),
            vmem_limit_bytes=48 * 1024 * 1024,
        ),
        cost_estimate=pl.CostEstimate(
            flops=15 * T * padded_n,
            transcendentals=0,
            bytes_accessed=(2 * T + 22) * padded_n * 4,
        ),
    )(cbits, phase, x3d, xs, ds)

    if padded_n != n:
        out = out3d.reshape(T, padded_n)[:, :n].reshape((T,) + orig_shape)
    else:
        out = out3d.reshape((T,) + orig_shape)
    new_state = {"xs": xs_new, "ds": ds_new,
                 "bs_idx": bs_idx0 + T, "step": step0 + T}
    return out, new_state


# ----------------------------------------------------------------------------
# Pure numpy reference: step-by-step emulation of the PyTorch module with
# tensor-valued registers (exactly the module's forward + .data shifts).
# ----------------------------------------------------------------------------
def tanh_comb_ref(x_seq, bs_idx0=0):
    x_seq = np.asarray(x_seq, np.float32)
    T = x_seq.shape[0]
    z = np.zeros_like(x_seq[0])
    i41_1 = i42_1 = i43_1 = i44_1 = z
    i41_2 = i42_2 = i43_2 = i44_2 = z
    d1 = d2 = d3 = z
    cbits = _constant_bits_seq(bs_idx0, T)
    outs = np.zeros_like(x_seq)
    for t in range(T):
        x = x_seq[t]
        n2_c, n3_c, n4_c, n5_c = cbits[t]
        n1 = x * i44_1
        n2 = 1.0 - n2_c * n1
        n3 = 1.0 - n2 * n3_c * d1
        n4 = 1.0 - n3 * n4_c * d2
        n5 = 1.0 - n4 * n5_c * d3
        outs[t] = n5 * i44_2
        d3, d2, d1 = d2, d1, n1
        i44_2, i43_2, i42_2, i41_2 = i43_2, i42_2, i41_2, i44_1
        i44_1, i43_1, i42_1, i41_1 = i43_1, i42_1, i41_1, x
    state = dict(input_4d1_1=i41_1, input_4d2_1=i42_1, input_4d3_1=i43_1,
                 input_4d4_1=i44_1, input_4d1_2=i41_2, input_4d2_2=i42_2,
                 input_4d3_2=i43_2, input_4d4_2=i44_2, d1=d1, d2=d2, d3=d3)
    return outs, state


if __name__ == "__main__":
    key = jax.random.PRNGKey(0)
    T = 16
    shape = (2, 4, 16, 16)                       # NCHW bitstream tensor per cycle
    x_seq = jax.random.bernoulli(key, 0.5, (T,) + shape).astype(jnp.float32)

    ref_out, ref_state = tanh_comb_ref(np.asarray(x_seq), bs_idx0=0)

    # (a) all 16 cycles batched into one pallas_call
    out_a, state_a = tanh_comb_forward(x_seq)
    # (b) two chained calls of 8 cycles each (streaming state across calls)
    out_b0, state_b = tanh_comb_forward(x_seq[:8])
    out_b1, state_b = tanh_comb_forward(x_seq[8:], state=state_b)
    out_b = jnp.concatenate([out_b0, out_b1], axis=0)
    jax.block_until_ready((out_a, out_b, state_a["xs"], state_a["ds"],
                           state_b["xs"], state_b["ds"]))

    assert out_a.shape == x_seq.shape and out_a.dtype == jnp.float32
    assert float(jnp.max(jnp.abs(out_a - ref_out))) < 1e-6
    assert float(jnp.max(jnp.abs(out_b - ref_out))) < 1e-6

    # Check the returned ring-buffer registers against the reference's named
    # registers.  After T_total cycles (phase 0), the register that is `age`
    # cycles old lives at ring slot (T_total - age) % depth.
    n_elems = int(np.prod(shape))

    def unplane(p):
        return np.asarray(p).reshape(-1)[:n_elems].reshape(shape)

    xs_names = ["input_4d1_1", "input_4d2_1", "input_4d3_1", "input_4d4_1",
                "input_4d1_2", "input_4d2_2", "input_4d3_2", "input_4d4_2"]
    for age, name in enumerate(xs_names, start=1):
        slot = (T - age) % 8
        assert np.max(np.abs(unplane(state_a["xs"][slot]) - ref_state[name])) < 1e-6, name
    for age, name in enumerate(["d1", "d2", "d3"], start=1):
        slot = (T - age) % 3
        assert np.max(np.abs(unplane(state_a["ds"][slot]) - ref_state[name])) < 1e-6, name

    # Streaming state after 8+8 cycles must equal the single-call state.
    assert np.max(np.abs(np.asarray(state_b["xs"]) - np.asarray(state_a["xs"]))) < 1e-6
    assert np.max(np.abs(np.asarray(state_b["ds"]) - np.asarray(state_a["ds"]))) < 1e-6
    assert state_a["bs_idx"] == 16 and state_b["bs_idx"] == 16

    print("KERNEL_OK")
</pallas_src>

<mosaic_0001>
module attributes {stable_mosaic.version = 11 : i64} {
  func.func @kernel(%arg0: i32, %arg1: i32, %arg2: memref<64xf32, #tpu.memory_space<smem>>, %arg3: memref<1xi32, #tpu.memory_space<smem>>, %arg4: memref<8x8x256xf32, #tpu.memory_space<vmem>>, %arg5: memref<8x8x256xf32, #tpu.memory_space<any>>, %arg6: memref<3x8x256xf32, #tpu.memory_space<any>>, %arg7: memref<8x8x256xf32, #tpu.memory_space<vmem>>, %arg8: memref<8x8x256xf32, #tpu.memory_space<any>>, %arg9: memref<3x8x256xf32, #tpu.memory_space<any>>, %arg10: memref<8x8x256xf32, #tpu.memory_space<vmem>>, %arg11: memref<3x8x256xf32, #tpu.memory_space<vmem>>, %arg12: memref<2x!tpu.dma_semaphore, #tpu.memory_space<semaphore_mem>>) attributes {dimension_semantics = [#tpu.dimension_semantics<parallel>, #tpu.dimension_semantics<arbitrary>], iteration_bounds = array<i64: 1, 2>, scalar_prefetch = 0 : i64, scratch_operands = 3 : i64, tpu.core_type = #tpu.core_type<tc>, window_params = [{transform_indices = @transform_0, window_bounds = array<i64: 64>}, {transform_indices = @transform_1, window_bounds = array<i64: 1>}, {transform_indices = @transform_2, window_bounds = array<i64: 8, 8, 256>}, {}, {}, {transform_indices = @transform_5, window_bounds = array<i64: 8, 8, 256>}, {}, {}]} {
    %c8_i32 = arith.constant 8 : i32
    %0 = arith.muli %arg0, %c8_i32 : i32
    %c0_i32 = arith.constant 0 : i32
    %1 = arith.cmpi eq, %arg1, %c0_i32 : i32
    %2 = arith.extui %1 : i1 to i32
    %c0_i32_0 = arith.constant 0 : i32
    %3 = arith.cmpi ne, %2, %c0_i32_0 : i32
    scf.if %3 {
      %c0_i32_525 = arith.constant 0 : i32
      %c0_i32_526 = arith.constant 0 : i32
      %c0_i32_527 = arith.constant 0 : i32
      %970 = tpu.memref_slice %arg5[%c0_i32_526, %0, %c0_i32_527] : memref<8x8x256xf32, #tpu.memory_space<any>> -> memref<8x8x256xf32, #tpu.memory_space<any>>
      %971 = tpu.memref_slice %arg12[%c0_i32_525] : memref<2x!tpu.dma_semaphore, #tpu.memory_space<semaphore_mem>> -> memref<1x!tpu.dma_semaphore, #tpu.memory_space<semaphore_mem>>
      %972 = tpu.memref_squeeze %971 : memref<1x!tpu.dma_semaphore, #tpu.memory_space<semaphore_mem>> -> memref<!tpu.dma_semaphore, #tpu.memory_space<semaphore_mem>>
      tpu.enqueue_dma source(%970 : memref<8x8x256xf32, #tpu.memory_space<any>>) target(%arg10 : memref<8x8x256xf32, #tpu.memory_space<vmem>>) target_semaphore(%972 : memref<!tpu.dma_semaphore, #tpu.memory_space<semaphore_mem>>)
      %c1_i32_528 = arith.constant 1 : i32
      %c0_i32_529 = arith.constant 0 : i32
      %c0_i32_530 = arith.constant 0 : i32
      %973 = tpu.memref_slice %arg6[%c0_i32_529, %0, %c0_i32_530] : memref<3x8x256xf32, #tpu.memory_space<any>> -> memref<3x8x256xf32, #tpu.memory_space<any>>
      %974 = tpu.memref_slice %arg12[%c1_i32_528] : memref<2x!tpu.dma_semaphore, #tpu.memory_space<semaphore_mem>> -> memref<1x!tpu.dma_semaphore, #tpu.memory_space<semaphore_mem>>
      %975 = tpu.memref_squeeze %974 : memref<1x!tpu.dma_semaphore, #tpu.memory_space<semaphore_mem>> -> memref<!tpu.dma_semaphore, #tpu.memory_space<semaphore_mem>>
      tpu.enqueue_dma source(%973 : memref<3x8x256xf32, #tpu.memory_space<any>>) target(%arg11 : memref<3x8x256xf32, #tpu.memory_space<vmem>>) target_semaphore(%975 : memref<!tpu.dma_semaphore, #tpu.memory_space<semaphore_mem>>)
      %c0_i32_531 = arith.constant 0 : i32
      %c0_i32_532 = arith.constant 0 : i32
      %c0_i32_533 = arith.constant 0 : i32
      %976 = tpu.memref_slice %arg5[%c0_i32_532, %0, %c0_i32_533] : memref<8x8x256xf32, #tpu.memory_space<any>> -> memref<8x8x256xf32, #tpu.memory_space<any>>
      %977 = tpu.memref_slice %arg12[%c0_i32_531] : memref<2x!tpu.dma_semaphore, #tpu.memory_space<semaphore_mem>> -> memref<1x!tpu.dma_semaphore, #tpu.memory_space<semaphore_mem>>
      %978 = tpu.memref_squeeze %977 : memref<1x!tpu.dma_semaphore, #tpu.memory_space<semaphore_mem>> -> memref<!tpu.dma_semaphore, #tpu.memory_space<semaphore_mem>>
      tpu.wait_dma2 semaphore(%978 : memref<!tpu.dma_semaphore, #tpu.memory_space<semaphore_mem>>) src(%976 : memref<8x8x256xf32, #tpu.memory_space<any>>) dst(%arg10 : memref<8x8x256xf32, #tpu.memory_space<vmem>>)
      %c1_i32_534 = arith.constant 1 : i32
      %c0_i32_535 = arith.constant 0 : i32
      %c0_i32_536 = arith.constant 0 : i32
      %979 = tpu.memref_slice %arg6[%c0_i32_535, %0, %c0_i32_536] : memref<3x8x256xf32, #tpu.memory_space<any>> -> memref<3x8x256xf32, #tpu.memory_space<any>>
      %980 = tpu.memref_slice %arg12[%c1_i32_534] : memref<2x!tpu.dma_semaphore, #tpu.memory_space<semaphore_mem>> -> memref<1x!tpu.dma_semaphore, #tpu.memory_space<semaphore_mem>>
      %981 = tpu.memref_squeeze %980 : memref<1x!tpu.dma_semaphore, #tpu.memory_space<semaphore_mem>> -> memref<!tpu.dma_semaphore, #tpu.memory_space<semaphore_mem>>
      tpu.wait_dma2 semaphore(%981 : memref<!tpu.dma_semaphore, #tpu.memory_space<semaphore_mem>>) src(%979 : memref<3x8x256xf32, #tpu.memory_space<any>>) dst(%arg11 : memref<3x8x256xf32, #tpu.memory_space<vmem>>)
    } else {
    }
    %c0 = arith.constant 0 : index
    %4 = memref.load %arg3[%c0] : memref<1xi32, #tpu.memory_space<smem>>
    %c8_i32_1 = arith.constant 8 : i32
    %5 = arith.muli %arg1, %c8_i32_1 : i32
    %6 = arith.addi %4, %5 : i32
    %c8_i32_2 = arith.constant 8 : i32
    %7 = arith.muli %arg1, %c8_i32_2 : i32
    %c0_i32_3 = arith.constant 0 : i32
    %8 = arith.addi %7, %c0_i32_3 : i32
    %c0_i32_4 = arith.constant 0 : i32
    %9 = arith.addi %6, %c0_i32_4 : i32
    %c8_i32_5 = arith.constant 8 : i32
    %c0_i32_6 = arith.constant 0 : i32
    %10 = arith.cmpi eq, %c8_i32_5, %c0_i32_6 : i32
    %c1_i32 = arith.constant 1 : i32
    %11 = arith.select %10, %c1_i32, %c8_i32_5 : i32
    %12 = arith.remsi %9, %11 : i32
    %c0_i32_7 = arith.constant 0 : i32
    %13 = arith.cmpi ne, %12, %c0_i32_7 : i32
    %c0_i32_8 = arith.constant 0 : i32
    %14 = arith.cmpi slt, %12, %c0_i32_8 : i32
    %c0_i32_9 = arith.constant 0 : i32
    %15 = arith.cmpi slt, %11, %c0_i32_9 : i32
    %16 = arith.xori %14, %15 : i1
    %17 = arith.andi %16, %13 : i1
    %18 = arith.addi %12, %11 : i32
    %19 = arith.select %17, %18, %12 : i32
    %c3_i32 = arith.constant 3 : i32
    %c0_i32_10 = arith.constant 0 : i32
    %20 = arith.cmpi eq, %c3_i32, %c0_i32_10 : i32
    %c1_i32_11 = arith.constant 1 : i32
    %21 = arith.select %20, %c1_i32_11, %c3_i32 : i32
    %22 = arith.remsi %9, %21 : i32
    %c0_i32_12 = arith.constant 0 : i32
    %23 = arith.cmpi ne, %22, %c0_i32_12 : i32
    %c0_i32_13 = arith.constant 0 : i32
    %24 = arith.cmpi slt, %22, %c0_i32_13 : i32
    %c0_i32_14 = arith.constant 0 : i32
    %25 = arith.cmpi slt, %21, %c0_i32_14 : i32
    %26 = arith.xori %24, %25 : i1
    %27 = arith.andi %26, %23 : i1
    %28 = arith.addi %22, %21 : i32
    %29 = arith.select %27, %28, %22 : i32
    %c4_i32 = arith.constant 4 : i32
    %30 = arith.muli %c4_i32, %8 : i32
    %31 = arith.index_cast %30 : i32 to index
    %32 = memref.load %arg2[%31] : memref<64xf32, #tpu.memory_space<smem>>
    %c4_i32_15 = arith.constant 4 : i32
    %33 = arith.muli %c4_i32_15, %8 : i32
    %c1_i32_16 = arith.constant 1 : i32
    %34 = arith.addi %33, %c1_i32_16 : i32
    %35 = arith.index_cast %34 : i32 to index
    %36 = memref.load %arg2[%35] : memref<64xf32, #tpu.memory_space<smem>>
    %c4_i32_17 = arith.constant 4 : i32
    %37 = arith.muli %c4_i32_17, %8 : i32
    %c2_i32 = arith.constant 2 : i32
    %38 = arith.addi %37, %c2_i32 : i32
    %39 = arith.index_cast %38 : i32 to index
    %40 = memref.load %arg2[%39] : memref<64xf32, #tpu.memory_space<smem>>
    %c4_i32_18 = arith.constant 4 : i32
    %41 = arith.muli %c4_i32_18, %8 : i32
    %c3_i32_19 = arith.constant 3 : i32
    %42 = arith.addi %41, %c3_i32_19 : i32
    %43 = arith.index_cast %42 : i32 to index
    %44 = memref.load %arg2[%43] : memref<64xf32, #tpu.memory_space<smem>>
    %c0_20 = arith.constant 0 : index
    %c0_21 = arith.constant 0 : index
    %c0_22 = arith.constant 0 : index
    %45 = vector.load %arg4[%c0_20, %c0_21, %c0_22] : memref<8x8x256xf32, #tpu.memory_space<vmem>>, vector<1x8x256xf32>
    %46 = vector.shape_cast %45 : vector<1x8x256xf32> to vector<8x256xf32>
    %47 = arith.index_cast %19 : i32 to index
    %c0_23 = arith.constant 0 : index
    %c0_24 = arith.constant 0 : index
    %48 = vector.load %arg10[%47, %c0_23, %c0_24] : memref<8x8x256xf32, #tpu.memory_space<vmem>>, vector<1x8x256xf32>
    %49 = vector.shape_cast %48 : vector<1x8x256xf32> to vector<8x256xf32>
    %c4_i32_25 = arith.constant 4 : i32
    %50 = arith.addi %19, %c4_i32_25 : i32
    %c8_i32_26 = arith.constant 8 : i32
    %c0_i32_27 = arith.constant 0 : i32
    %51 = arith.cmpi eq, %c8_i32_26, %c0_i32_27 : i32
    %c1_i32_28 = arith.constant 1 : i32
    %52 = arith.select %51, %c1_i32_28, %c8_i32_26 : i32
    %53 = arith.remsi %50, %52 : i32
    %c0_i32_29 = arith.constant 0 : i32
    %54 = arith.cmpi ne, %53, %c0_i32_29 : i32
    %c0_i32_30 = arith.constant 0 : i32
    %55 = arith.cmpi slt, %53, %c0_i32_30 : i32
    %c0_i32_31 = arith.constant 0 : i32
    %56 = arith.cmpi slt, %52, %c0_i32_31 : i32
    %57 = arith.xori %55, %56 : i1
    %58 = arith.andi %57, %54 : i1
    %59 = arith.addi %53, %52 : i32
    %60 = arith.select %58, %59, %53 : i32
    %61 = arith.index_cast %60 : i32 to index
    %c0_32 = arith.constant 0 : index
    %c0_33 = arith.constant 0 : index
    %62 = vector.load %arg10[%61, %c0_32, %c0_33] : memref<8x8x256xf32, #tpu.memory_space<vmem>>, vector<1x8x256xf32>
    %63 = vector.shape_cast %62 : vector<1x8x256xf32> to vector<8x256xf32>
    %64 = arith.index_cast %29 : i32 to index
    %c0_34 = arith.constant 0 : index
    %c0_35 = arith.constant 0 : index
    %65 = vector.load %arg11[%64, %c0_34, %c0_35] : memref<3x8x256xf32, #tpu.memory_space<vmem>>, vector<1x8x256xf32>
    %66 = vector.shape_cast %65 : vector<1x8x256xf32> to vector<8x256xf32>
    %c1_i32_36 = arith.constant 1 : i32
    %67 = arith.addi %29, %c1_i32_36 : i32
    %c3_i32_37 = arith.constant 3 : i32
    %c0_i32_38 = arith.constant 0 : i32
    %68 = arith.cmpi eq, %c3_i32_37, %c0_i32_38 : i32
    %c1_i32_39 = arith.constant 1 : i32
    %69 = arith.select %68, %c1_i32_39, %c3_i32_37 : i32
    %70 = arith.remsi %67, %69 : i32
    %c0_i32_40 = arith.constant 0 : i32
    %71 = arith.cmpi ne, %70, %c0_i32_40 : i32
    %c0_i32_41 = arith.constant 0 : i32
    %72 = arith.cmpi slt, %70, %c0_i32_41 : i32
    %c0_i32_42 = arith.constant 0 : i32
    %73 = arith.cmpi slt, %69, %c0_i32_42 : i32
    %74 = arith.xori %72, %73 : i1
    %75 = arith.andi %74, %71 : i1
    %76 = arith.addi %70, %69 : i32
    %77 = arith.select %75, %76, %70 : i32
    %78 = arith.index_cast %77 : i32 to index
    %c0_43 = arith.constant 0 : index
    %c0_44 = arith.constant 0 : index
    %79 = vector.load %arg11[%78, %c0_43, %c0_44] : memref<3x8x256xf32, #tpu.memory_space<vmem>>, vector<1x8x256xf32>
    %80 = vector.shape_cast %79 : vector<1x8x256xf32> to vector<8x256xf32>
    %c2_i32_45 = arith.constant 2 : i32
    %81 = arith.addi %29, %c2_i32_45 : i32
    %c3_i32_46 = arith.constant 3 : i32
    %c0_i32_47 = arith.constant 0 : i32
    %82 = arith.cmpi eq, %c3_i32_46, %c0_i32_47 : i32
    %c1_i32_48 = arith.constant 1 : i32
    %83 = arith.select %82, %c1_i32_48, %c3_i32_46 : i32
    %84 = arith.remsi %81, %83 : i32
    %c0_i32_49 = arith.constant 0 : i32
    %85 = arith.cmpi ne, %84, %c0_i32_49 : i32
    %c0_i32_50 = arith.constant 0 : i32
    %86 = arith.cmpi slt, %84, %c0_i32_50 : i32
    %c0_i32_51 = arith.constant 0 : i32
    %87 = arith.cmpi slt, %83, %c0_i32_51 : i32
    %88 = arith.xori %86, %87 : i1
    %89 = arith.andi %88, %85 : i1
    %90 = arith.addi %84, %83 : i32
    %91 = arith.select %89, %90, %84 : i32
    %92 = arith.index_cast %91 : i32 to index
    %c0_52 = arith.constant 0 : index
    %c0_53 = arith.constant 0 : index
    %93 = vector.load %arg11[%92, %c0_52, %c0_53] : memref<3x8x256xf32, #tpu.memory_space<vmem>>, vector<1x8x256xf32>
    %94 = vector.shape_cast %93 : vector<1x8x256xf32> to vector<8x256xf32>
    %95 = arith.mulf %46, %63 : vector<8x256xf32>
    %96 = vector.broadcast %32 : f32 to vector<8x256xf32>
    %97 = arith.mulf %96, %95 : vector<8x256xf32>
    %cst = arith.constant 1.000000e+00 : f32
    %98 = vector.broadcast %cst : f32 to vector<8x256xf32>
    %99 = arith.subf %98, %97 : vector<8x256xf32>
    %100 = vector.broadcast %36 : f32 to vector<8x256xf32>
    %101 = arith.mulf %100, %94 : vector<8x256xf32>
    %102 = arith.mulf %99, %101 : vector<8x256xf32>
    %cst_54 = arith.constant 1.000000e+00 : f32
    %103 = vector.broadcast %cst_54 : f32 to vector<8x256xf32>
    %104 = arith.subf %103, %102 : vector<8x256xf32>
    %105 = vector.broadcast %40 : f32 to vector<8x256xf32>
    %106 = arith.mulf %105, %80 : vector<8x256xf32>
    %107 = arith.mulf %104, %106 : vector<8x256xf32>
    %cst_55 = arith.constant 1.000000e+00 : f32
    %108 = vector.broadcast %cst_55 : f32 to vector<8x256xf32>
    %109 = arith.subf %108, %107 : vector<8x256xf32>
    %110 = vector.broadcast %44 : f32 to vector<8x256xf32>
    %111 = arith.mulf %110, %66 : vector<8x256xf32>
    %112 = arith.mulf %109, %111 : vector<8x256xf32>
    %cst_56 = arith.constant 1.000000e+00 : f32
    %113 = vector.broadcast %cst_56 : f32 to vector<8x256xf32>
    %114 = arith.subf %113, %112 : vector<8x256xf32>
    %115 = arith.mulf %114, %49 : vector<8x256xf32>
    %c0_57 = arith.constant 0 : index
    %c0_58 = arith.constant 0 : index
    %c0_59 = arith.constant 0 : index
    %116 = vector.load %arg7[%c0_57, %c0_58, %c0_59] : memref<8x8x256xf32, #tpu.memory_space<vmem>>, vector<1x8x256xf32>
    %117 = vector.shape_cast %116 : vector<1x8x256xf32> to vector<8x256xf32>
    %118 = vector.shape_cast %115 : vector<8x256xf32> to vector<1x8x256xf32>
    tpu.vector_store %arg7[%c0_57, %c0_58, %c0_59], %118 {strides = array<i32>} : memref<8x8x256xf32, #tpu.memory_space<vmem>>, vector<1x8x256xf32>,
    %119 = arith.index_cast %19 : i32 to index
    %c0_60 = arith.constant 0 : index
    %c0_61 = arith.constant 0 : index
    %120 = vector.load %arg10[%119, %c0_60, %c0_61] : memref<8x8x256xf32, #tpu.memory_space<vmem>>, vector<1x8x256xf32>
    %121 = vector.shape_cast %120 : vector<1x8x256xf32> to vector<8x256xf32>
    %122 = vector.shape_cast %46 : vector<8x256xf32> to vector<1x8x256xf32>
    tpu.vector_store %arg10[%119, %c0_60, %c0_61], %122 {strides = array<i32>} : memref<8x8x256xf32, #tpu.memory_space<vmem>>, vector<1x8x256xf32>,
    %123 = arith.index_cast %29 : i32 to index
    %c0_62 = arith.constant 0 : index
    %c0_63 = arith.constant 0 : index
    %124 = vector.load %arg11[%123, %c0_62, %c0_63] : memref<3x8x256xf32, #tpu.memory_space<vmem>>, vector<1x8x256xf32>
    %125 = vector.shape_cast %124 : vector<1x8x256xf32> to vector<8x256xf32>
    %126 = vector.shape_cast %95 : vector<8x256xf32> to vector<1x8x256xf32>
    tpu.vector_store %arg11[%123, %c0_62, %c0_63], %126 {strides = array<i32>} : memref<3x8x256xf32, #tpu.memory_space<vmem>>, vector<1x8x256xf32>,
    %c8_i32_64 = arith.constant 8 : i32
    %127 = arith.muli %arg1, %c8_i32_64 : i32
    %c1_i32_65 = arith.constant 1 : i32
    %128 = arith.addi %127, %c1_i32_65 : i32
    %c1_i32_66 = arith.constant 1 : i32
    %129 = arith.addi %6, %c1_i32_66 : i32
    %c8_i32_67 = arith.constant 8 : i32
    %c0_i32_68 = arith.constant 0 : i32
    %130 = arith.cmpi eq, %c8_i32_67, %c0_i32_68 : i32
    %c1_i32_69 = arith.constant 1 : i32
    %131 = arith.select %130, %c1_i32_69, %c8_i32_67 : i32
    %132 = arith.remsi %129, %131 : i32
    %c0_i32_70 = arith.constant 0 : i32
    %133 = arith.cmpi ne, %132, %c0_i32_70 : i32
    %c0_i32_71 = arith.constant 0 : i32
    %134 = arith.cmpi slt, %132, %c0_i32_71 : i32
    %c0_i32_72 = arith.constant 0 : i32
    %135 = arith.cmpi slt, %131, %c0_i32_72 : i32
    %136 = arith.xori %134, %135 : i1
    %137 = arith.andi %136, %133 : i1
    %138 = arith.addi %132, %131 : i32
    %139 = arith.select %137, %138, %132 : i32
    %c3_i32_73 = arith.constant 3 : i32
    %c0_i32_74 = arith.constant 0 : i32
    %140 = arith.cmpi eq, %c3_i32_73, %c0_i32_74 : i32
    %c1_i32_75 = arith.constant 1 : i32
    %141 = arith.select %140, %c1_i32_75, %c3_i32_73 : i32
    %142 = arith.remsi %129, %141 : i32
    %c0_i32_76 = arith.constant 0 : i32
    %143 = arith.cmpi ne, %142, %c0_i32_76 : i32
    %c0_i32_77 = arith.constant 0 : i32
    %144 = arith.cmpi slt, %142, %c0_i32_77 : i32
    %c0_i32_78 = arith.constant 0 : i32
    %145 = arith.cmpi slt, %141, %c0_i32_78 : i32
    %146 = arith.xori %144, %145 : i1
    %147 = arith.andi %146, %143 : i1
    %148 = arith.addi %142, %141 : i32
    %149 = arith.select %147, %148, %142 : i32
    %c4_i32_79 = arith.constant 4 : i32
    %150 = arith.muli %c4_i32_79, %128 : i32
    %151 = arith.index_cast %150 : i32 to index
    %152 = memref.load %arg2[%151] : memref<64xf32, #tpu.memory_space<smem>>
    %c4_i32_80 = arith.constant 4 : i32
    %153 = arith.muli %c4_i32_80, %128 : i32
    %c1_i32_81 = arith.constant 1 : i32
    %154 = arith.addi %153, %c1_i32_81 : i32
    %155 = arith.index_cast %154 : i32 to index
    %156 = memref.load %arg2[%155] : memref<64xf32, #tpu.memory_space<smem>>
    %c4_i32_82 = arith.constant 4 : i32
    %157 = arith.muli %c4_i32_82, %128 : i32
    %c2_i32_83 = arith.constant 2 : i32
    %158 = arith.addi %157, %c2_i32_83 : i32
    %159 = arith.index_cast %158 : i32 to index
    %160 = memref.load %arg2[%159] : memref<64xf32, #tpu.memory_space<smem>>
    %c4_i32_84 = arith.constant 4 : i32
    %161 = arith.muli %c4_i32_84, %128 : i32
    %c3_i32_85 = arith.constant 3 : i32
    %162 = arith.addi %161, %c3_i32_85 : i32
    %163 = arith.index_cast %162 : i32 to index
    %164 = memref.load %arg2[%163] : memref<64xf32, #tpu.memory_space<smem>>
    %c1 = arith.constant 1 : index
    %c0_86 = arith.constant 0 : index
    %c0_87 = arith.constant 0 : index
    %165 = vector.load %arg4[%c1, %c0_86, %c0_87] : memref<8x8x256xf32, #tpu.memory_space<vmem>>, vector<1x8x256xf32>
    %166 = vector.shape_cast %165 : vector<1x8x256xf32> to vector<8x256xf32>
    %167 = arith.index_cast %139 : i32 to index
    %c0_88 = arith.constant 0 : index
    %c0_89 = arith.constant 0 : index
    %168 = vector.load %arg10[%167, %c0_88, %c0_89] : memref<8x8x256xf32, #tpu.memory_space<vmem>>, vector<1x8x256xf32>
    %169 = vector.shape_cast %168 : vector<1x8x256xf32> to vector<8x256xf32>
    %c4_i32_90 = arith.constant 4 : i32
    %170 = arith.addi %139, %c4_i32_90 : i32
    %c8_i32_91 = arith.constant 8 : i32
    %c0_i32_92 = arith.constant 0 : i32
    %171 = arith.cmpi eq, %c8_i32_91, %c0_i32_92 : i32
    %c1_i32_93 = arith.constant 1 : i32
    %172 = arith.select %171, %c1_i32_93, %c8_i32_91 : i32
    %173 = arith.remsi %170, %172 : i32
    %c0_i32_94 = arith.constant 0 : i32
    %174 = arith.cmpi ne, %173, %c0_i32_94 : i32
    %c0_i32_95 = arith.constant 0 : i32
    %175 = arith.cmpi slt, %173, %c0_i32_95 : i32
    %c0_i32_96 = arith.constant 0 : i32
    %176 = arith.cmpi slt, %172, %c0_i32_96 : i32
    %177 = arith.xori %175, %176 : i1
    %178 = arith.andi %177, %174 : i1
    %179 = arith.addi %173, %172 : i32
    %180 = arith.select %178, %179, %173 : i32
    %181 = arith.index_cast %180 : i32 to index
    %c0_97 = arith.constant 0 : index
    %c0_98 = arith.constant 0 : index
    %182 = vector.load %arg10[%181, %c0_97, %c0_98] : memref<8x8x256xf32, #tpu.memory_space<vmem>>, vector<1x8x256xf32>
    %183 = vector.shape_cast %182 : vector<1x8x256xf32> to vector<8x256xf32>
    %184 = arith.index_cast %149 : i32 to index
    %c0_99 = arith.constant 0 : index
    %c0_100 = arith.constant 0 : index
    %185 = vector.load %arg11[%184, %c0_99, %c0_100] : memref<3x8x256xf32, #tpu.memory_space<vmem>>, vector<1x8x256xf32>
    %186 = vector.shape_cast %185 : vector<1x8x256xf32> to vector<8x256xf32>
    %c1_i32_101 = arith.constant 1 : i32
    %187 = arith.addi %149, %c1_i32_101 : i32
    %c3_i32_102 = arith.constant 3 : i32
    %c0_i32_103 = arith.constant 0 : i32
    %188 = arith.cmpi eq, %c3_i32_102, %c0_i32_103 : i32
    %c1_i32_104 = arith.constant 1 : i32
    %189 = arith.select %188, %c1_i32_104, %c3_i32_102 : i32
    %190 = arith.remsi %187, %189 : i32
    %c0_i32_105 = arith.constant 0 : i32
    %191 = arith.cmpi ne, %190, %c0_i32_105 : i32
    %c0_i32_106 = arith.constant 0 : i32
    %192 = arith.cmpi slt, %190, %c0_i32_106 : i32
    %c0_i32_107 = arith.constant 0 : i32
    %193 = arith.cmpi slt, %189, %c0_i32_107 : i32
    %194 = arith.xori %192, %193 : i1
    %195 = arith.andi %194, %191 : i1
    %196 = arith.addi %190, %189 : i32
    %197 = arith.select %195, %196, %190 : i32
    %198 = arith.index_cast %197 : i32 to index
    %c0_108 = arith.constant 0 : index
    %c0_109 = arith.constant 0 : index
    %199 = vector.load %arg11[%198, %c0_108, %c0_109] : memref<3x8x256xf32, #tpu.memory_space<vmem>>, vector<1x8x256xf32>
    %200 = vector.shape_cast %199 : vector<1x8x256xf32> to vector<8x256xf32>
    %c2_i32_110 = arith.constant 2 : i32
    %201 = arith.addi %149, %c2_i32_110 : i32
    %c3_i32_111 = arith.constant 3 : i32
    %c0_i32_112 = arith.constant 0 : i32
    %202 = arith.cmpi eq, %c3_i32_111, %c0_i32_112 : i32
    %c1_i32_113 = arith.constant 1 : i32
    %203 = arith.select %202, %c1_i32_113, %c3_i32_111 : i32
    %204 = arith.remsi %201, %203 : i32
    %c0_i32_114 = arith.constant 0 : i32
    %205 = arith.cmpi ne, %204, %c0_i32_114 : i32
    %c0_i32_115 = arith.constant 0 : i32
    %206 = arith.cmpi slt, %204, %c0_i32_115 : i32
    %c0_i32_116 = arith.constant 0 : i32
    %207 = arith.cmpi slt, %203, %c0_i32_116 : i32
    %208 = arith.xori %206, %207 : i1
    %209 = arith.andi %208, %205 : i1
    %210 = arith.addi %204, %203 : i32
    %211 = arith.select %209, %210, %204 : i32
    %212 = arith.index_cast %211 : i32 to index
    %c0_117 = arith.constant 0 : index
    %c0_118 = arith.constant 0 : index
    %213 = vector.load %arg11[%212, %c0_117, %c0_118] : memref<3x8x256xf32, #tpu.memory_space<vmem>>, vector<1x8x256xf32>
    %214 = vector.shape_cast %213 : vector<1x8x256xf32> to vector<8x256xf32>
    %215 = arith.mulf %166, %183 : vector<8x256xf32>
    %216 = vector.broadcast %152 : f32 to vector<8x256xf32>
    %217 = arith.mulf %216, %215 : vector<8x256xf32>
    %cst_119 = arith.constant 1.000000e+00 : f32
    %218 = vector.broadcast %cst_119 : f32 to vector<8x256xf32>
    %219 = arith.subf %218, %217 : vector<8x256xf32>
    %220 = vector.broadcast %156 : f32 to vector<8x256xf32>
    %221 = arith.mulf %220, %214 : vector<8x256xf32>
    %222 = arith.mulf %219, %221 : vector<8x256xf32>
    %cst_120 = arith.constant 1.000000e+00 : f32
    %223 = vector.broadcast %cst_120 : f32 to vector<8x256xf32>
    %224 = arith.subf %223, %222 : vector<8x256xf32>
    %225 = vector.broadcast %160 : f32 to vector<8x256xf32>
    %226 = arith.mulf %225, %200 : vector<8x256xf32>
    %227 = arith.mulf %224, %226 : vector<8x256xf32>
    %cst_121 = arith.constant 1.000000e+00 : f32
    %228 = vector.broadcast %cst_121 : f32 to vector<8x256xf32>
    %229 = arith.subf %228, %227 : vector<8x256xf32>
    %230 = vector.broadcast %164 : f32 to vector<8x256xf32>
    %231 = arith.mulf %230, %186 : vector<8x256xf32>
    %232 = arith.mulf %229, %231 : vector<8x256xf32>
    %cst_122 = arith.constant 1.000000e+00 : f32
    %233 = vector.broadcast %cst_122 : f32 to vector<8x256xf32>
    %234 = arith.subf %233, %232 : vector<8x256xf32>
    %235 = arith.mulf %234, %169 : vector<8x256xf32>
    %c1_123 = arith.constant 1 : index
    %c0_124 = arith.constant 0 : index
    %c0_125 = arith.constant 0 : index
    %236 = vector.load %arg7[%c1_123, %c0_124, %c0_125] : memref<8x8x256xf32, #tpu.memory_space<vmem>>, vector<1x8x256xf32>
    %237 = vector.shape_cast %236 : vector<1x8x256xf32> to vector<8x256xf32>
    %238 = vector.shape_cast %235 : vector<8x256xf32> to vector<1x8x256xf32>
    tpu.vector_store %arg7[%c1_123, %c0_124, %c0_125], %238 {strides = array<i32>} : memref<8x8x256xf32, #tpu.memory_space<vmem>>, vector<1x8x256xf32>,
    %239 = arith.index_cast %139 : i32 to index
    %c0_126 = arith.constant 0 : index
    %c0_127 = arith.constant 0 : index
    %240 = vector.load %arg10[%239, %c0_126, %c0_127] : memref<8x8x256xf32, #tpu.memory_space<vmem>>, vector<1x8x256xf32>
    %241 = vector.shape_cast %240 : vector<1x8x256xf32> to vector<8x256xf32>
    %242 = vector.shape_cast %166 : vector<8x256xf32> to vector<1x8x256xf32>
    tpu.vector_store %arg10[%239, %c0_126, %c0_127], %242 {strides = array<i32>} : memref<8x8x256xf32, #tpu.memory_space<vmem>>, vector<1x8x256xf32>,
    %243 = arith.index_cast %149 : i32 to index
    %c0_128 = arith.constant 0 : index
    %c0_129 = arith.constant 0 : index
    %244 = vector.load %arg11[%243, %c0_128, %c0_129] : memref<3x8x256xf32, #tpu.memory_space<vmem>>, vector<1x8x256xf32>
    %245 = vector.shape_cast %244 : vector<1x8x256xf32> to vector<8x256xf32>
    %246 = vector.shape_cast %215 : vector<8x256xf32> to vector<1x8x256xf32>
    tpu.vector_store %arg11[%243, %c0_128, %c0_129], %246 {strides = array<i32>} : memref<3x8x256xf32, #tpu.memory_space<vmem>>, vector<1x8x256xf32>,
    %c8_i32_130 = arith.constant 8 : i32
    %247 = arith.muli %arg1, %c8_i32_130 : i32
    %c2_i32_131 = arith.constant 2 : i32
    %248 = arith.addi %247, %c2_i32_131 : i32
    %c2_i32_132 = arith.constant 2 : i32
    %249 = arith.addi %6, %c2_i32_132 : i32
    %c8_i32_133 = arith.constant 8 : i32
    %c0_i32_134 = arith.constant 0 : i32
    %250 = arith.cmpi eq, %c8_i32_133, %c0_i32_134 : i32
    %c1_i32_135 = arith.constant 1 : i32
    %251 = arith.select %250, %c1_i32_135, %c8_i32_133 : i32
    %252 = arith.remsi %249, %251 : i32
    %c0_i32_136 = arith.constant 0 : i32
    %253 = arith.cmpi ne, %252, %c0_i32_136 : i32
    %c0_i32_137 = arith.constant 0 : i32
    %254 = arith.cmpi slt, %252, %c0_i32_137 : i32
    %c0_i32_138 = arith.constant 0 : i32
    %255 = arith.cmpi slt, %251, %c0_i32_138 : i32
    %256 = arith.xori %254, %255 : i1
    %257 = arith.andi %256, %253 : i1
    %258 = arith.addi %252, %251 : i32
    %259 = arith.select %257, %258, %252 : i32
    %c3_i32_139 = arith.constant 3 : i32
    %c0_i32_140 = arith.constant 0 : i32
    %260 = arith.cmpi eq, %c3_i32_139, %c0_i32_140 : i32
    %c1_i32_141 = arith.constant 1 : i32
    %261 = arith.select %260, %c1_i32_141, %c3_i32_139 : i32
    %262 = arith.remsi %249, %261 : i32
    %c0_i32_142 = arith.constant 0 : i32
    %263 = arith.cmpi ne, %262, %c0_i32_142 : i32
    %c0_i32_143 = arith.constant 0 : i32
    %264 = arith.cmpi slt, %262, %c0_i32_143 : i32
    %c0_i32_144 = arith.constant 0 : i32
    %265 = arith.cmpi slt, %261, %c0_i32_144 : i32
    %266 = arith.xori %264, %265 : i1
    %267 = arith.andi %266, %263 : i1
    %268 = arith.addi %262, %261 : i32
    %269 = arith.select %267, %268, %262 : i32
    %c4_i32_145 = arith.constant 4 : i32
    %270 = arith.muli %c4_i32_145, %248 : i32
    %271 = arith.index_cast %270 : i32 to index
    %272 = memref.load %arg2[%271] : memref<64xf32, #tpu.memory_space<smem>>
    %c4_i32_146 = arith.constant 4 : i32
    %273 = arith.muli %c4_i32_146, %248 : i32
    %c1_i32_147 = arith.constant 1 : i32
    %274 = arith.addi %273, %c1_i32_147 : i32
    %275 = arith.index_cast %274 : i32 to index
    %276 = memref.load %arg2[%275] : memref<64xf32, #tpu.memory_space<smem>>
    %c4_i32_148 = arith.constant 4 : i32
    %277 = arith.muli %c4_i32_148, %248 : i32
    %c2_i32_149 = arith.constant 2 : i32
    %278 = arith.addi %277, %c2_i32_149 : i32
    %279 = arith.index_cast %278 : i32 to index
    %280 = memref.load %arg2[%279] : memref<64xf32, #tpu.memory_space<smem>>
    %c4_i32_150 = arith.constant 4 : i32
    %281 = arith.muli %c4_i32_150, %248 : i32
    %c3_i32_151 = arith.constant 3 : i32
    %282 = arith.addi %281, %c3_i32_151 : i32
    %283 = arith.index_cast %282 : i32 to index
    %284 = memref.load %arg2[%283] : memref<64xf32, #tpu.memory_space<smem>>
    %c2 = arith.constant 2 : index
    %c0_152 = arith.constant 0 : index
    %c0_153 = arith.constant 0 : index
    %285 = vector.load %arg4[%c2, %c0_152, %c0_153] : memref<8x8x256xf32, #tpu.memory_space<vmem>>, vector<1x8x256xf32>
    %286 = vector.shape_cast %285 : vector<1x8x256xf32> to vector<8x256xf32>
    %287 = arith.index_cast %259 : i32 to index
    %c0_154 = arith.constant 0 : index
    %c0_155 = arith.constant 0 : index
    %288 = vector.load %arg10[%287, %c0_154, %c0_155] : memref<8x8x256xf32, #tpu.memory_space<vmem>>, vector<1x8x256xf32>
    %289 = vector.shape_cast %288 : vector<1x8x256xf32> to vector<8x256xf32>
    %c4_i32_156 = arith.constant 4 : i32
    %290 = arith.addi %259, %c4_i32_156 : i32
    %c8_i32_157 = arith.constant 8 : i32
    %c0_i32_158 = arith.constant 0 : i32
    %291 = arith.cmpi eq, %c8_i32_157, %c0_i32_158 : i32
    %c1_i32_159 = arith.constant 1 : i32
    %292 = arith.select %291, %c1_i32_159, %c8_i32_157 : i32
    %293 = arith.remsi %290, %292 : i32
    %c0_i32_160 = arith.constant 0 : i32
    %294 = arith.cmpi ne, %293, %c0_i32_160 : i32
    %c0_i32_161 = arith.constant 0 : i32
    %295 = arith.cmpi slt, %293, %c0_i32_161 : i32
    %c0_i32_162 = arith.constant 0 : i32
    %296 = arith.cmpi slt, %292, %c0_i32_162 : i32
    %297 = arith.xori %295, %296 : i1
    %298 = arith.andi %297, %294 : i1
    %299 = arith.addi %293, %292 : i32
    %300 = arith.select %298, %299, %293 : i32
    %301 = arith.index_cast %300 : i32 to index
    %c0_163 = arith.constant 0 : index
    %c0_164 = arith.constant 0 : index
    %302 = vector.load %arg10[%301, %c0_163, %c0_164] : memref<8x8x256xf32, #tpu.memory_space<vmem>>, vector<1x8x256xf32>
    %303 = vector.shape_cast %302 : vector<1x8x256xf32> to vector<8x256xf32>
    %304 = arith.index_cast %269 : i32 to index
    %c0_165 = arith.constant 0 : index
    %c0_166 = arith.constant 0 : index
    %305 = vector.load %arg11[%304, %c0_165, %c0_166] : memref<3x8x256xf32, #tpu.memory_space<vmem>>, vector<1x8x256xf32>
    %306 = vector.shape_cast %305 : vector<1x8x256xf32> to vector<8x256xf32>
    %c1_i32_167 = arith.constant 1 : i32
    %307 = arith.addi %269, %c1_i32_167 : i32
    %c3_i32_168 = arith.constant 3 : i32
    %c0_i32_169 = arith.constant 0 : i32
    %308 = arith.cmpi eq, %c3_i32_168, %c0_i32_169 : i32
    %c1_i32_170 = arith.constant 1 : i32
    %309 = arith.select %308, %c1_i32_170, %c3_i32_168 : i32
    %310 = arith.remsi %307, %309 : i32
    %c0_i32_171 = arith.constant 0 : i32
    %311 = arith.cmpi ne, %310, %c0_i32_171 : i32
    %c0_i32_172 = arith.constant 0 : i32
    %312 = arith.cmpi slt, %310, %c0_i32_172 : i32
    %c0_i32_173 = arith.constant 0 : i32
    %313 = arith.cmpi slt, %309, %c0_i32_173 : i32
    %314 = arith.xori %312, %313 : i1
    %315 = arith.andi %314, %311 : i1
    %316 = arith.addi %310, %309 : i32
    %317 = arith.select %315, %316, %310 : i32
    %318 = arith.index_cast %317 : i32 to index
    %c0_174 = arith.constant 0 : index
    %c0_175 = arith.constant 0 : index
    %319 = vector.load %arg11[%318, %c0_174, %c0_175] : memref<3x8x256xf32, #tpu.memory_space<vmem>>, vector<1x8x256xf32>
    %320 = vector.shape_cast %319 : vector<1x8x256xf32> to vector<8x256xf32>
    %c2_i32_176 = arith.constant 2 : i32
    %321 = arith.addi %269, %c2_i32_176 : i32
    %c3_i32_177 = arith.constant 3 : i32
    %c0_i32_178 = arith.constant 0 : i32
    %322 = arith.cmpi eq, %c3_i32_177, %c0_i32_178 : i32
    %c1_i32_179 = arith.constant 1 : i32
    %323 = arith.select %322, %c1_i32_179, %c3_i32_177 : i32
    %324 = arith.remsi %321, %323 : i32
    %c0_i32_180 = arith.constant 0 : i32
    %325 = arith.cmpi ne, %324, %c0_i32_180 : i32
    %c0_i32_181 = arith.constant 0 : i32
    %326 = arith.cmpi slt, %324, %c0_i32_181 : i32
    %c0_i32_182 = arith.constant 0 : i32
    %327 = arith.cmpi slt, %323, %c0_i32_182 : i32
    %328 = arith.xori %326, %327 : i1
    %329 = arith.andi %328, %325 : i1
    %330 = arith.addi %324, %323 : i32
    %331 = arith.select %329, %330, %324 : i32
    %332 = arith.index_cast %331 : i32 to index
    %c0_183 = arith.constant 0 : index
    %c0_184 = arith.constant 0 : index
    %333 = vector.load %arg11[%332, %c0_183, %c0_184] : memref<3x8x256xf32, #tpu.memory_space<vmem>>, vector<1x8x256xf32>
    %334 = vector.shape_cast %333 : vector<1x8x256xf32> to vector<8x256xf32>
    %335 = arith.mulf %286, %303 : vector<8x256xf32>
    %336 = vector.broadcast %272 : f32 to vector<8x256xf32>
    %337 = arith.mulf %336, %335 : vector<8x256xf32>
    %cst_185 = arith.constant 1.000000e+00 : f32
    %338 = vector.broadcast %cst_185 : f32 to vector<8x256xf32>
    %339 = arith.subf %338, %337 : vector<8x256xf32>
    %340 = vector.broadcast %276 : f32 to vector<8x256xf32>
    %341 = arith.mulf %340, %334 : vector<8x256xf32>
    %342 = arith.mulf %339, %341 : vector<8x256xf32>
    %cst_186 = arith.constant 1.000000e+00 : f32
    %343 = vector.broadcast %cst_186 : f32 to vector<8x256xf32>
    %344 = arith.subf %343, %342 : vector<8x256xf32>
    %345 = vector.broadcast %280 : f32 to vector<8x256xf32>
    %346 = arith.mulf %345, %320 : vector<8x256xf32>
    %347 = arith.mulf %344, %346 : vector<8x256xf32>
    %cst_187 = arith.constant 1.000000e+00 : f32
    %348 = vector.broadcast %cst_187 : f32 to vector<8x256xf32>
    %349 = arith.subf %348, %347 : vector<8x256xf32>
    %350 = vector.broadcast %284 : f32 to vector<8x256xf32>
    %351 = arith.mulf %350, %306 : vector<8x256xf32>
    %352 = arith.mulf %349, %351 : vector<8x256xf32>
    %cst_188 = arith.constant 1.000000e+00 : f32
    %353 = vector.broadcast %cst_188 : f32 to vector<8x256xf32>
    %354 = arith.subf %353, %352 : vector<8x256xf32>
    %355 = arith.mulf %354, %289 : vector<8x256xf32>
    %c2_189 = arith.constant 2 : index
    %c0_190 = arith.constant 0 : index
    %c0_191 = arith.constant 0 : index
    %356 = vector.load %arg7[%c2_189, %c0_190, %c0_191] : memref<8x8x256xf32, #tpu.memory_space<vmem>>, vector<1x8x256xf32>
    %357 = vector.shape_cast %356 : vector<1x8x256xf32> to vector<8x256xf32>
    %358 = vector.shape_cast %355 : vector<8x256xf32> to vector<1x8x256xf32>
    tpu.vector_store %arg7[%c2_189, %c0_190, %c0_191], %358 {strides = array<i32>} : memref<8x8x256xf32, #tpu.memory_space<vmem>>, vector<1x8x256xf32>,
    %359 = arith.index_cast %259 : i32 to index
    %c0_192 = arith.constant 0 : index
    %c0_193 = arith.constant 0 : index
    %360 = vector.load %arg10[%359, %c0_192, %c0_193] : memref<8x8x256xf32, #tpu.memory_space<vmem>>, vector<1x8x256xf32>
    %361 = vector.shape_cast %360 : vector<1x8x256xf32> to vector<8x256xf32>
    %362 = vector.shape_cast %286 : vector<8x256xf32> to vector<1x8x256xf32>
    tpu.vector_store %arg10[%359, %c0_192, %c0_193], %362 {strides = array<i32>} : memref<8x8x256xf32, #tpu.memory_space<vmem>>, vector<1x8x256xf32>,
    %363 = arith.index_cast %269 : i32 to index
    %c0_194 = arith.constant 0 : index
    %c0_195 = arith.constant 0 : index
    %364 = vector.load %arg11[%363, %c0_194, %c0_195] : memref<3x8x256xf32, #tpu.memory_space<vmem>>, vector<1x8x256xf32>
    %365 = vector.shape_cast %364 : vector<1x8x256xf32> to vector<8x256xf32>
    %366 = vector.shape_cast %335 : vector<8x256xf32> to vector<1x8x256xf32>
    tpu.vector_store %arg11[%363, %c0_194, %c0_195], %366 {strides = array<i32>} : memref<3x8x256xf32, #tpu.memory_space<vmem>>, vector<1x8x256xf32>,
    %c8_i32_196 = arith.constant 8 : i32
    %367 = arith.muli %arg1, %c8_i32_196 : i32
    %c3_i32_197 = arith.constant 3 : i32
    %368 = arith.addi %367, %c3_i32_197 : i32
    %c3_i32_198 = arith.constant 3 : i32
    %369 = arith.addi %6, %c3_i32_198 : i32
    %c8_i32_199 = arith.constant 8 : i32
    %c0_i32_200 = arith.constant 0 : i32
    %370 = arith.cmpi eq, %c8_i32_199, %c0_i32_200 : i32
    %c1_i32_201 = arith.constant 1 : i32
    %371 = arith.select %370, %c1_i32_201, %c8_i32_199 : i32
    %372 = arith.remsi %369, %371 : i32
    %c0_i32_202 = arith.constant 0 : i32
    %373 = arith.cmpi ne, %372, %c0_i32_202 : i32
    %c0_i32_203 = arith.constant 0 : i32
    %374 = arith.cmpi slt, %372, %c0_i32_203 : i32
    %c0_i32_204 = arith.constant 0 : i32
    %375 = arith.cmpi slt, %371, %c0_i32_204 : i32
    %376 = arith.xori %374, %375 : i1
    %377 = arith.andi %376, %373 : i1
    %378 = arith.addi %372, %371 : i32
    %379 = arith.select %377, %378, %372 : i32
    %c3_i32_205 = arith.constant 3 : i32
    %c0_i32_206 = arith.constant 0 : i32
    %380 = arith.cmpi eq, %c3_i32_205, %c0_i32_206 : i32
    %c1_i32_207 = arith.constant 1 : i32
    %381 = arith.select %380, %c1_i32_207, %c3_i32_205 : i32
    %382 = arith.remsi %369, %381 : i32
    %c0_i32_208 = arith.constant 0 : i32
    %383 = arith.cmpi ne, %382, %c0_i32_208 : i32
    %c0_i32_209 = arith.constant 0 : i32
    %384 = arith.cmpi slt, %382, %c0_i32_209 : i32
    %c0_i32_210 = arith.constant 0 : i32
    %385 = arith.cmpi slt, %381, %c0_i32_210 : i32
    %386 = arith.xori %384, %385 : i1
    %387 = arith.andi %386, %383 : i1
    %388 = arith.addi %382, %381 : i32
    %389 = arith.select %387, %388, %382 : i32
    %c4_i32_211 = arith.constant 4 : i32
    %390 = arith.muli %c4_i32_211, %368 : i32
    %391 = arith.index_cast %390 : i32 to index
    %392 = memref.load %arg2[%391] : memref<64xf32, #tpu.memory_space<smem>>
    %c4_i32_212 = arith.constant 4 : i32
    %393 = arith.muli %c4_i32_212, %368 : i32
    %c1_i32_213 = arith.constant 1 : i32
    %394 = arith.addi %393, %c1_i32_213 : i32
    %395 = arith.index_cast %394 : i32 to index
    %396 = memref.load %arg2[%395] : memref<64xf32, #tpu.memory_space<smem>>
    %c4_i32_214 = arith.constant 4 : i32
    %397 = arith.muli %c4_i32_214, %368 : i32
    %c2_i32_215 = arith.constant 2 : i32
    %398 = arith.addi %397, %c2_i32_215 : i32
    %399 = arith.index_cast %398 : i32 to index
    %400 = memref.load %arg2[%399] : memref<64xf32, #tpu.memory_space<smem>>
    %c4_i32_216 = arith.constant 4 : i32
    %401 = arith.muli %c4_i32_216, %368 : i32
    %c3_i32_217 = arith.constant 3 : i32
    %402 = arith.addi %401, %c3_i32_217 : i32
    %403 = arith.index_cast %402 : i32 to index
    %404 = memref.load %arg2[%403] : memref<64xf32, #tpu.memory_space<smem>>
    %c3 = arith.constant 3 : index
    %c0_218 = arith.constant 0 : index
    %c0_219 = arith.constant 0 : index
    %405 = vector.load %arg4[%c3, %c0_218, %c0_219] : memref<8x8x256xf32, #tpu.memory_space<vmem>>, vector<1x8x256xf32>
    %406 = vector.shape_cast %405 : vector<1x8x256xf32> to vector<8x256xf32>
    %407 = arith.index_cast %379 : i32 to index
    %c0_220 = arith.constant 0 : index
    %c0_221 = arith.constant 0 : index
    %408 = vector.load %arg10[%407, %c0_220, %c0_221] : memref<8x8x256xf32, #tpu.memory_space<vmem>>, vector<1x8x256xf32>
    %409 = vector.shape_cast %408 : vector<1x8x256xf32> to vector<8x256xf32>
    %c4_i32_222 = arith.constant 4 : i32
    %410 = arith.addi %379, %c4_i32_222 : i32
    %c8_i32_223 = arith.constant 8 : i32
    %c0_i32_224 = arith.constant 0 : i32
    %411 = arith.cmpi eq, %c8_i32_223, %c0_i32_224 : i32
    %c1_i32_225 = arith.constant 1 : i32
    %412 = arith.select %411, %c1_i32_225, %c8_i32_223 : i32
    %413 = arith.remsi %410, %412 : i32
    %c0_i32_226 = arith.constant 0 : i32
    %414 = arith.cmpi ne, %413, %c0_i32_226 : i32
    %c0_i32_227 = arith.constant 0 : i32
    %415 = arith.cmpi slt, %413, %c0_i32_227 : i32
    %c0_i32_228 = arith.constant 0 : i32
    %416 = arith.cmpi slt, %412, %c0_i32_228 : i32
    %417 = arith.xori %415, %416 : i1
    %418 = arith.andi %417, %414 : i1
    %419 = arith.addi %413, %412 : i32
    %420 = arith.select %418, %419, %413 : i32
    %421 = arith.index_cast %420 : i32 to index
    %c0_229 = arith.constant 0 : index
    %c0_230 = arith.constant 0 : index
    %422 = vector.load %arg10[%421, %c0_229, %c0_230] : memref<8x8x256xf32, #tpu.memory_space<vmem>>, vector<1x8x256xf32>
    %423 = vector.shape_cast %422 : vector<1x8x256xf32> to vector<8x256xf32>
    %424 = arith.index_cast %389 : i32 to index
    %c0_231 = arith.constant 0 : index
    %c0_232 = arith.constant 0 : index
    %425 = vector.load %arg11[%424, %c0_231, %c0_232] : memref<3x8x256xf32, #tpu.memory_space<vmem>>, vector<1x8x256xf32>
    %426 = vector.shape_cast %425 : vector<1x8x256xf32> to vector<8x256xf32>
    %c1_i32_233 = arith.constant 1 : i32
    %427 = arith.addi %389, %c1_i32_233 : i32
    %c3_i32_234 = arith.constant 3 : i32
    %c0_i32_235 = arith.constant 0 : i32
    %428 = arith.cmpi eq, %c3_i32_234, %c0_i32_235 : i32
    %c1_i32_236 = arith.constant 1 : i32
    %429 = arith.select %428, %c1_i32_236, %c3_i32_234 : i32
    %430 = arith.remsi %427, %429 : i32
    %c0_i32_237 = arith.constant 0 : i32
    %431 = arith.cmpi ne, %430, %c0_i32_237 : i32
    %c0_i32_238 = arith.constant 0 : i32
    %432 = arith.cmpi slt, %430, %c0_i32_238 : i32
    %c0_i32_239 = arith.constant 0 : i32
    %433 = arith.cmpi slt, %429, %c0_i32_239 : i32
    %434 = arith.xori %432, %433 : i1
    %435 = arith.andi %434, %431 : i1
    %436 = arith.addi %430, %429 : i32
    %437 = arith.select %435, %436, %430 : i32
    %438 = arith.index_cast %437 : i32 to index
    %c0_240 = arith.constant 0 : index
    %c0_241 = arith.constant 0 : index
    %439 = vector.load %arg11[%438, %c0_240, %c0_241] : memref<3x8x256xf32, #tpu.memory_space<vmem>>, vector<1x8x256xf32>
    %440 = vector.shape_cast %439 : vector<1x8x256xf32> to vector<8x256xf32>
    %c2_i32_242 = arith.constant 2 : i32
    %441 = arith.addi %389, %c2_i32_242 : i32
    %c3_i32_243 = arith.constant 3 : i32
    %c0_i32_244 = arith.constant 0 : i32
    %442 = arith.cmpi eq, %c3_i32_243, %c0_i32_244 : i32
    %c1_i32_245 = arith.constant 1 : i32
    %443 = arith.select %442, %c1_i32_245, %c3_i32_243 : i32
    %444 = arith.remsi %441, %443 : i32
    %c0_i32_246 = arith.constant 0 : i32
    %445 = arith.cmpi ne, %444, %c0_i32_246 : i32
    %c0_i32_247 = arith.constant 0 : i32
    %446 = arith.cmpi slt, %444, %c0_i32_247 : i32
    %c0_i32_248 = arith.constant 0 : i32
    %447 = arith.cmpi slt, %443, %c0_i32_248 : i32
    %448 = arith.xori %446, %447 : i1
    %449 = arith.andi %448, %445 : i1
    %450 = arith.addi %444, %443 : i32
    %451 = arith.select %449, %450, %444 : i32
    %452 = arith.index_cast %451 : i32 to index
    %c0_249 = arith.constant 0 : index
    %c0_250 = arith.constant 0 : index
    %453 = vector.load %arg11[%452, %c0_249, %c0_250] : memref<3x8x256xf32, #tpu.memory_space<vmem>>, vector<1x8x256xf32>
    %454 = vector.shape_cast %453 : vector<1x8x256xf32> to vector<8x256xf32>
    %455 = arith.mulf %406, %423 : vector<8x256xf32>
    %456 = vector.broadcast %392 : f32 to vector<8x256xf32>
    %457 = arith.mulf %456, %455 : vector<8x256xf32>
    %cst_251 = arith.constant 1.000000e+00 : f32
    %458 = vector.broadcast %cst_251 : f32 to vector<8x256xf32>
    %459 = arith.subf %458, %457 : vector<8x256xf32>
    %460 = vector.broadcast %396 : f32 to vector<8x256xf32>
    %461 = arith.mulf %460, %454 : vector<8x256xf32>
    %462 = arith.mulf %459, %461 : vector<8x256xf32>
    %cst_252 = arith.constant 1.000000e+00 : f32
    %463 = vector.broadcast %cst_252 : f32 to vector<8x256xf32>
    %464 = arith.subf %463, %462 : vector<8x256xf32>
    %465 = vector.broadcast %400 : f32 to vector<8x256xf32>
    %466 = arith.mulf %465, %440 : vector<8x256xf32>
    %467 = arith.mulf %464, %466 : vector<8x256xf32>
    %cst_253 = arith.constant 1.000000e+00 : f32
    %468 = vector.broadcast %cst_253 : f32 to vector<8x256xf32>
    %469 = arith.subf %468, %467 : vector<8x256xf32>
    %470 = vector.broadcast %404 : f32 to vector<8x256xf32>
    %471 = arith.mulf %470, %426 : vector<8x256xf32>
    %472 = arith.mulf %469, %471 : vector<8x256xf32>
    %cst_254 = arith.constant 1.000000e+00 : f32
    %473 = vector.broadcast %cst_254 : f32 to vector<8x256xf32>
    %474 = arith.subf %473, %472 : vector<8x256xf32>
    %475 = arith.mulf %474, %409 : vector<8x256xf32>
    %c3_255 = arith.constant 3 : index
    %c0_256 = arith.constant 0 : index
    %c0_257 = arith.constant 0 : index
    %476 = vector.load %arg7[%c3_255, %c0_256, %c0_257] : memref<8x8x256xf32, #tpu.memory_space<vmem>>, vector<1x8x256xf32>
    %477 = vector.shape_cast %476 : vector<1x8x256xf32> to vector<8x256xf32>
    %478 = vector.shape_cast %475 : vector<8x256xf32> to vector<1x8x256xf32>
    tpu.vector_store %arg7[%c3_255, %c0_256, %c0_257], %478 {strides = array<i32>} : memref<8x8x256xf32, #tpu.memory_space<vmem>>, vector<1x8x256xf32>,
    %479 = arith.index_cast %379 : i32 to index
    %c0_258 = arith.constant 0 : index
    %c0_259 = arith.constant 0 : index
    %480 = vector.load %arg10[%479, %c0_258, %c0_259] : memref<8x8x256xf32, #tpu.memory_space<vmem>>, vector<1x8x256xf32>
    %481 = vector.shape_cast %480 : vector<1x8x256xf32> to vector<8x256xf32>
    %482 = vector.shape_cast %406 : vector<8x256xf32> to vector<1x8x256xf32>
    tpu.vector_store %arg10[%479, %c0_258, %c0_259], %482 {strides = array<i32>} : memref<8x8x256xf32, #tpu.memory_space<vmem>>, vector<1x8x256xf32>,
    %483 = arith.index_cast %389 : i32 to index
    %c0_260 = arith.constant 0 : index
    %c0_261 = arith.constant 0 : index
    %484 = vector.load %arg11[%483, %c0_260, %c0_261] : memref<3x8x256xf32, #tpu.memory_space<vmem>>, vector<1x8x256xf32>
    %485 = vector.shape_cast %484 : vector<1x8x256xf32> to vector<8x256xf32>
    %486 = vector.shape_cast %455 : vector<8x256xf32> to vector<1x8x256xf32>
    tpu.vector_store %arg11[%483, %c0_260, %c0_261], %486 {strides = array<i32>} : memref<3x8x256xf32, #tpu.memory_space<vmem>>, vector<1x8x256xf32>,
    %c8_i32_262 = arith.constant 8 : i32
    %487 = arith.muli %arg1, %c8_i32_262 : i32
    %c4_i32_263 = arith.constant 4 : i32
    %488 = arith.addi %487, %c4_i32_263 : i32
    %c4_i32_264 = arith.constant 4 : i32
    %489 = arith.addi %6, %c4_i32_264 : i32
    %c8_i32_265 = arith.constant 8 : i32
    %c0_i32_266 = arith.constant 0 : i32
    %490 = arith.cmpi eq, %c8_i32_265, %c0_i32_266 : i32
    %c1_i32_267 = arith.constant 1 : i32
    %491 = arith.select %490, %c1_i32_267, %c8_i32_265 : i32
    %492 = arith.remsi %489, %491 : i32
    %c0_i32_268 = arith.constant 0 : i32
    %493 = arith.cmpi ne, %492, %c0_i32_268 : i32
    %c0_i32_269 = arith.constant 0 : i32
    %494 = arith.cmpi slt, %492, %c0_i32_269 : i32
    %c0_i32_270 = arith.constant 0 : i32
    %495 = arith.cmpi slt, %491, %c0_i32_270 : i32
    %496 = arith.xori %494, %495 : i1
    %497 = arith.andi %496, %493 : i1
    %498 = arith.addi %492, %491 : i32
    %499 = arith.select %497, %498, %492 : i32
    %c3_i32_271 = arith.constant 3 : i32
    %c0_i32_272 = arith.constant 0 : i32
    %500 = arith.cmpi eq, %c3_i32_271, %c0_i32_272 : i32
    %c1_i32_273 = arith.constant 1 : i32
    %501 = arith.select %500, %c1_i32_273, %c3_i32_271 : i32
    %502 = arith.remsi %489, %501 : i32
    %c0_i32_274 = arith.constant 0 : i32
    %503 = arith.cmpi ne, %502, %c0_i32_274 : i32
    %c0_i32_275 = arith.constant 0 : i32
    %504 = arith.cmpi slt, %502, %c0_i32_275 : i32
    %c0_i32_276 = arith.constant 0 : i32
    %505 = arith.cmpi slt, %501, %c0_i32_276 : i32
    %506 = arith.xori %504, %505 : i1
    %507 = arith.andi %506, %503 : i1
    %508 = arith.addi %502, %501 : i32
    %509 = arith.select %507, %508, %502 : i32
    %c4_i32_277 = arith.constant 4 : i32
    %510 = arith.muli %c4_i32_277, %488 : i32
    %511 = arith.index_cast %510 : i32 to index
    %512 = memref.load %arg2[%511] : memref<64xf32, #tpu.memory_space<smem>>
    %c4_i32_278 = arith.constant 4 : i32
    %513 = arith.muli %c4_i32_278, %488 : i32
    %c1_i32_279 = arith.constant 1 : i32
    %514 = arith.addi %513, %c1_i32_279 : i32
    %515 = arith.index_cast %514 : i32 to index
    %516 = memref.load %arg2[%515] : memref<64xf32, #tpu.memory_space<smem>>
    %c4_i32_280 = arith.constant 4 : i32
    %517 = arith.muli %c4_i32_280, %488 : i32
    %c2_i32_281 = arith.constant 2 : i32
    %518 = arith.addi %517, %c2_i32_281 : i32
    %519 = arith.index_cast %518 : i32 to index
    %520 = memref.load %arg2[%519] : memref<64xf32, #tpu.memory_space<smem>>
    %c4_i32_282 = arith.constant 4 : i32
    %521 = arith.muli %c4_i32_282, %488 : i32
    %c3_i32_283 = arith.constant 3 : i32
    %522 = arith.addi %521, %c3_i32_283 : i32
    %523 = arith.index_cast %522 : i32 to index
    %524 = memref.load %arg2[%523] : memref<64xf32, #tpu.memory_space<smem>>
    %c4 = arith.constant 4 : index
    %c0_284 = arith.constant 0 : index
    %c0_285 = arith.constant 0 : index
    %525 = vector.load %arg4[%c4, %c0_284, %c0_285] : memref<8x8x256xf32, #tpu.memory_space<vmem>>, vector<1x8x256xf32>
    %526 = vector.shape_cast %525 : vector<1x8x256xf32> to vector<8x256xf32>
    %527 = arith.index_cast %499 : i32 to index
    %c0_286 = arith.constant 0 : index
    %c0_287 = arith.constant 0 : index
    %528 = vector.load %arg10[%527, %c0_286, %c0_287] : memref<8x8x256xf32, #tpu.memory_space<vmem>>, vector<1x8x256xf32>
    %529 = vector.shape_cast %528 : vector<1x8x256xf32> to vector<8x256xf32>
    %c4_i32_288 = arith.constant 4 : i32
    %530 = arith.addi %499, %c4_i32_288 : i32
    %c8_i32_289 = arith.constant 8 : i32
    %c0_i32_290 = arith.constant 0 : i32
    %531 = arith.cmpi eq, %c8_i32_289, %c0_i32_290 : i32
    %c1_i32_291 = arith.constant 1 : i32
    %532 = arith.select %531, %c1_i32_291, %c8_i32_289 : i32
    %533 = arith.remsi %530, %532 : i32
    %c0_i32_292 = arith.constant 0 : i32
    %534 = arith.cmpi ne, %533, %c0_i32_292 : i32
    %c0_i32_293 = arith.constant 0 : i32
    %535 = arith.cmpi slt, %533, %c0_i32_293 : i32
    %c0_i32_294 = arith.constant 0 : i32
    %536 = arith.cmpi slt, %532, %c0_i32_294 : i32
    %537 = arith.xori %535, %536 : i1
    %538 = arith.andi %537, %534 : i1
    %539 = arith.addi %533, %532 : i32
    %540 = arith.select %538, %539, %533 : i32
    %541 = arith.index_cast %540 : i32 to index
    %c0_295 = arith.constant 0 : index
    %c0_296 = arith.constant 0 : index
    %542 = vector.load %arg10[%541, %c0_295, %c0_296] : memref<8x8x256xf32, #tpu.memory_space<vmem>>, vector<1x8x256xf32>
    %543 = vector.shape_cast %542 : vector<1x8x256xf32> to vector<8x256xf32>
    %544 = arith.index_cast %509 : i32 to index
    %c0_297 = arith.constant 0 : index
    %c0_298 = arith.constant 0 : index
    %545 = vector.load %arg11[%544, %c0_297, %c0_298] : memref<3x8x256xf32, #tpu.memory_space<vmem>>, vector<1x8x256xf32>
    %546 = vector.shape_cast %545 : vector<1x8x256xf32> to vector<8x256xf32>
    %c1_i32_299 = arith.constant 1 : i32
    %547 = arith.addi %509, %c1_i32_299 : i32
    %c3_i32_300 = arith.constant 3 : i32
    %c0_i32_301 = arith.constant 0 : i32
    %548 = arith.cmpi eq, %c3_i32_300, %c0_i32_301 : i32
    %c1_i32_302 = arith.constant 1 : i32
    %549 = arith.select %548, %c1_i32_302, %c3_i32_300 : i32
    %550 = arith.remsi %547, %549 : i32
    %c0_i32_303 = arith.constant 0 : i32
    %551 = arith.cmpi ne, %550, %c0_i32_303 : i32
    %c0_i32_304 = arith.constant 0 : i32
    %552 = arith.cmpi slt, %550, %c0_i32_304 : i32
    %c0_i32_305 = arith.constant 0 : i32
    %553 = arith.cmpi slt, %549, %c0_i32_305 : i32
    %554 = arith.xori %552, %553 : i1
    %555 = arith.andi %554, %551 : i1
    %556 = arith.addi %550, %549 : i32
    %557 = arith.select %555, %556, %550 : i32
    %558 = arith.index_cast %557 : i32 to index
    %c0_306 = arith.constant 0 : index
    %c0_307 = arith.constant 0 : index
    %559 = vector.load %arg11[%558, %c0_306, %c0_307] : memref<3x8x256xf32, #tpu.memory_space<vmem>>, vector<1x8x256xf32>
    %560 = vector.shape_cast %559 : vector<1x8x256xf32> to vector<8x256xf32>
    %c2_i32_308 = arith.constant 2 : i32
    %561 = arith.addi %509, %c2_i32_308 : i32
    %c3_i32_309 = arith.constant 3 : i32
    %c0_i32_310 = arith.constant 0 : i32
    %562 = arith.cmpi eq, %c3_i32_309, %c0_i32_310 : i32
    %c1_i32_311 = arith.constant 1 : i32
    %563 = arith.select %562, %c1_i32_311, %c3_i32_309 : i32
    %564 = arith.remsi %561, %563 : i32
    %c0_i32_312 = arith.constant 0 : i32
    %565 = arith.cmpi ne, %564, %c0_i32_312 : i32
    %c0_i32_313 = arith.constant 0 : i32
    %566 = arith.cmpi slt, %564, %c0_i32_313 : i32
    %c0_i32_314 = arith.constant 0 : i32
    %567 = arith.cmpi slt, %563, %c0_i32_314 : i32
    %568 = arith.xori %566, %567 : i1
    %569 = arith.andi %568, %565 : i1
    %570 = arith.addi %564, %563 : i32
    %571 = arith.select %569, %570, %564 : i32
    %572 = arith.index_cast %571 : i32 to index
    %c0_315 = arith.constant 0 : index
    %c0_316 = arith.constant 0 : index
    %573 = vector.load %arg11[%572, %c0_315, %c0_316] : memref<3x8x256xf32, #tpu.memory_space<vmem>>, vector<1x8x256xf32>
    %574 = vector.shape_cast %573 : vector<1x8x256xf32> to vector<8x256xf32>
    %575 = arith.mulf %526, %543 : vector<8x256xf32>
    %576 = vector.broadcast %512 : f32 to vector<8x256xf32>
    %577 = arith.mulf %576, %575 : vector<8x256xf32>
    %cst_317 = arith.constant 1.000000e+00 : f32
    %578 = vector.broadcast %cst_317 : f32 to vector<8x256xf32>
    %579 = arith.subf %578, %577 : vector<8x256xf32>
    %580 = vector.broadcast %516 : f32 to vector<8x256xf32>
    %581 = arith.mulf %580, %574 : vector<8x256xf32>
    %582 = arith.mulf %579, %581 : vector<8x256xf32>
    %cst_318 = arith.constant 1.000000e+00 : f32
    %583 = vector.broadcast %cst_318 : f32 to vector<8x256xf32>
    %584 = arith.subf %583, %582 : vector<8x256xf32>
    %585 = vector.broadcast %520 : f32 to vector<8x256xf32>
    %586 = arith.mulf %585, %560 : vector<8x256xf32>
    %587 = arith.mulf %584, %586 : vector<8x256xf32>
    %cst_319 = arith.constant 1.000000e+00 : f32
    %588 = vector.broadcast %cst_319 : f32 to vector<8x256xf32>
    %589 = arith.subf %588, %587 : vector<8x256xf32>
    %590 = vector.broadcast %524 : f32 to vector<8x256xf32>
    %591 = arith.mulf %590, %546 : vector<8x256xf32>
    %592 = arith.mulf %589, %591 : vector<8x256xf32>
    %cst_320 = arith.constant 1.000000e+00 : f32
    %593 = vector.broadcast %cst_320 : f32 to vector<8x256xf32>
    %594 = arith.subf %593, %592 : vector<8x256xf32>
    %595 = arith.mulf %594, %529 : vector<8x256xf32>
    %c4_321 = arith.constant 4 : index
    %c0_322 = arith.constant 0 : index
    %c0_323 = arith.constant 0 : index
    %596 = vector.load %arg7[%c4_321, %c0_322, %c0_323] : memref<8x8x256xf32, #tpu.memory_space<vmem>>, vector<1x8x256xf32>
    %597 = vector.shape_cast %596 : vector<1x8x256xf32> to vector<8x256xf32>
    %598 = vector.shape_cast %595 : vector<8x256xf32> to vector<1x8x256xf32>
    tpu.vector_store %arg7[%c4_321, %c0_322, %c0_323], %598 {strides = array<i32>} : memref<8x8x256xf32, #tpu.memory_space<vmem>>, vector<1x8x256xf32>,
    %599 = arith.index_cast %499 : i32 to index
    %c0_324 = arith.constant 0 : index
    %c0_325 = arith.constant 0 : index
    %600 = vector.load %arg10[%599, %c0_324, %c0_325] : memref<8x8x256xf32, #tpu.memory_space<vmem>>, vector<1x8x256xf32>
    %601 = vector.shape_cast %600 : vector<1x8x256xf32> to vector<8x256xf32>
    %602 = vector.shape_cast %526 : vector<8x256xf32> to vector<1x8x256xf32>
    tpu.vector_store %arg10[%599, %c0_324, %c0_325], %602 {strides = array<i32>} : memref<8x8x256xf32, #tpu.memory_space<vmem>>, vector<1x8x256xf32>,
    %603 = arith.index_cast %509 : i32 to index
    %c0_326 = arith.constant 0 : index
    %c0_327 = arith.constant 0 : index
    %604 = vector.load %arg11[%603, %c0_326, %c0_327] : memref<3x8x256xf32, #tpu.memory_space<vmem>>, vector<1x8x256xf32>
    %605 = vector.shape_cast %604 : vector<1x8x256xf32> to vector<8x256xf32>
    %606 = vector.shape_cast %575 : vector<8x256xf32> to vector<1x8x256xf32>
    tpu.vector_store %arg11[%603, %c0_326, %c0_327], %606 {strides = array<i32>} : memref<3x8x256xf32, #tpu.memory_space<vmem>>, vector<1x8x256xf32>,
    %c8_i32_328 = arith.constant 8 : i32
    %607 = arith.muli %arg1, %c8_i32_328 : i32
    %c5_i32 = arith.constant 5 : i32
    %608 = arith.addi %607, %c5_i32 : i32
    %c5_i32_329 = arith.constant 5 : i32
    %609 = arith.addi %6, %c5_i32_329 : i32
    %c8_i32_330 = arith.constant 8 : i32
    %c0_i32_331 = arith.constant 0 : i32
    %610 = arith.cmpi eq, %c8_i32_330, %c0_i32_331 : i32
    %c1_i32_332 = arith.constant 1 : i32
    %611 = arith.select %610, %c1_i32_332, %c8_i32_330 : i32
    %612 = arith.remsi %609, %611 : i32
    %c0_i32_333 = arith.constant 0 : i32
    %613 = arith.cmpi ne, %612, %c0_i32_333 : i32
    %c0_i32_334 = arith.constant 0 : i32
    %614 = arith.cmpi slt, %612, %c0_i32_334 : i32
    %c0_i32_335 = arith.constant 0 : i32
    %615 = arith.cmpi slt, %611, %c0_i32_335 : i32
    %616 = arith.xori %614, %615 : i1
    %617 = arith.andi %616, %613 : i1
    %618 = arith.addi %612, %611 : i32
    %619 = arith.select %617, %618, %612 : i32
    %c3_i32_336 = arith.constant 3 : i32
    %c0_i32_337 = arith.constant 0 : i32
    %620 = arith.cmpi eq, %c3_i32_336, %c0_i32_337 : i32
    %c1_i32_338 = arith.constant 1 : i32
    %621 = arith.select %620, %c1_i32_338, %c3_i32_336 : i32
    %622 = arith.remsi %609, %621 : i32
    %c0_i32_339 = arith.constant 0 : i32
    %623 = arith.cmpi ne, %622, %c0_i32_339 : i32
    %c0_i32_340 = arith.constant 0 : i32
    %624 = arith.cmpi slt, %622, %c0_i32_340 : i32
    %c0_i32_341 = arith.constant 0 : i32
    %625 = arith.cmpi slt, %621, %c0_i32_341 : i32
    %626 = arith.xori %624, %625 : i1
    %627 = arith.andi %626, %623 : i1
    %628 = arith.addi %622, %621 : i32
    %629 = arith.select %627, %628, %622 : i32
    %c4_i32_342 = arith.constant 4 : i32
    %630 = arith.muli %c4_i32_342, %608 : i32
    %631 = arith.index_cast %630 : i32 to index
    %632 = memref.load %arg2[%631] : memref<64xf32, #tpu.memory_space<smem>>
    %c4_i32_343 = arith.constant 4 : i32
    %633 = arith.muli %c4_i32_343, %608 : i32
    %c1_i32_344 = arith.constant 1 : i32
    %634 = arith.addi %633, %c1_i32_344 : i32
    %635 = arith.index_cast %634 : i32 to index
    %636 = memref.load %arg2[%635] : memref<64xf32, #tpu.memory_space<smem>>
    %c4_i32_345 = arith.constant 4 : i32
    %637 = arith.muli %c4_i32_345, %608 : i32
    %c2_i32_346 = arith.constant 2 : i32
    %638 = arith.addi %637, %c2_i32_346 : i32
    %639 = arith.index_cast %638 : i32 to index
    %640 = memref.load %arg2[%639] : memref<64xf32, #tpu.memory_space<smem>>
    %c4_i32_347 = arith.constant 4 : i32
    %641 = arith.muli %c4_i32_347, %608 : i32
    %c3_i32_348 = arith.constant 3 : i32
    %642 = arith.addi %641, %c3_i32_348 : i32
    %643 = arith.index_cast %642 : i32 to index
    %644 = memref.load %arg2[%643] : memref<64xf32, #tpu.memory_space<smem>>
    %c5 = arith.constant 5 : index
    %c0_349 = arith.constant 0 : index
    %c0_350 = arith.constant 0 : index
    %645 = vector.load %arg4[%c5, %c0_349, %c0_350] : memref<8x8x256xf32, #tpu.memory_space<vmem>>, vector<1x8x256xf32>
    %646 = vector.shape_cast %645 : vector<1x8x256xf32> to vector<8x256xf32>
    %647 = arith.index_cast %619 : i32 to index
    %c0_351 = arith.constant 0 : index
    %c0_352 = arith.constant 0 : index
    %648 = vector.load %arg10[%647, %c0_351, %c0_352] : memref<8x8x256xf32, #tpu.memory_space<vmem>>, vector<1x8x256xf32>
    %649 = vector.shape_cast %648 : vector<1x8x256xf32> to vector<8x256xf32>
    %c4_i32_353 = arith.constant 4 : i32
    %650 = arith.addi %619, %c4_i32_353 : i32
    %c8_i32_354 = arith.constant 8 : i32
    %c0_i32_355 = arith.constant 0 : i32
    %651 = arith.cmpi eq, %c8_i32_354, %c0_i32_355 : i32
    %c1_i32_356 = arith.constant 1 : i32
    %652 = arith.select %651, %c1_i32_356, %c8_i32_354 : i32
    %653 = arith.remsi %650, %652 : i32
    %c0_i32_357 = arith.constant 0 : i32
    %654 = arith.cmpi ne, %653, %c0_i32_357 : i32
    %c0_i32_358 = arith.constant 0 : i32
    %655 = arith.cmpi slt, %653, %c0_i32_358 : i32
    %c0_i32_359 = arith.constant 0 : i32
    %656 = arith.cmpi slt, %652, %c0_i32_359 : i32
    %657 = arith.xori %655, %656 : i1
    %658 = arith.andi %657, %654 : i1
    %659 = arith.addi %653, %652 : i32
    %660 = arith.select %658, %659, %653 : i32
    %661 = arith.index_cast %660 : i32 to index
    %c0_360 = arith.constant 0 : index
    %c0_361 = arith.constant 0 : index
    %662 = vector.load %arg10[%661, %c0_360, %c0_361] : memref<8x8x256xf32, #tpu.memory_space<vmem>>, vector<1x8x256xf32>
    %663 = vector.shape_cast %662 : vector<1x8x256xf32> to vector<8x256xf32>
    %664 = arith.index_cast %629 : i32 to index
    %c0_362 = arith.constant 0 : index
    %c0_363 = arith.constant 0 : index
    %665 = vector.load %arg11[%664, %c0_362, %c0_363] : memref<3x8x256xf32, #tpu.memory_space<vmem>>, vector<1x8x256xf32>
    %666 = vector.shape_cast %665 : vector<1x8x256xf32> to vector<8x256xf32>
    %c1_i32_364 = arith.constant 1 : i32
    %667 = arith.addi %629, %c1_i32_364 : i32
    %c3_i32_365 = arith.constant 3 : i32
    %c0_i32_366 = arith.constant 0 : i32
    %668 = arith.cmpi eq, %c3_i32_365, %c0_i32_366 : i32
    %c1_i32_367 = arith.constant 1 : i32
    %669 = arith.select %668, %c1_i32_367, %c3_i32_365 : i32
    %670 = arith.remsi %667, %669 : i32
    %c0_i32_368 = arith.constant 0 : i32
    %671 = arith.cmpi ne, %670, %c0_i32_368 : i32
    %c0_i32_369 = arith.constant 0 : i32
    %672 = arith.cmpi slt, %670, %c0_i32_369 : i32
    %c0_i32_370 = arith.constant 0 : i32
    %673 = arith.cmpi slt, %669, %c0_i32_370 : i32
    %674 = arith.xori %672, %673 : i1
    %675 = arith.andi %674, %671 : i1
    %676 = arith.addi %670, %669 : i32
    %677 = arith.select %675, %676, %670 : i32
    %678 = arith.index_cast %677 : i32 to index
    %c0_371 = arith.constant 0 : index
    %c0_372 = arith.constant 0 : index
    %679 = vector.load %arg11[%678, %c0_371, %c0_372] : memref<3x8x256xf32, #tpu.memory_space<vmem>>, vector<1x8x256xf32>
    %680 = vector.shape_cast %679 : vector<1x8x256xf32> to vector<8x256xf32>
    %c2_i32_373 = arith.constant 2 : i32
    %681 = arith.addi %629, %c2_i32_373 : i32
    %c3_i32_374 = arith.constant 3 : i32
    %c0_i32_375 = arith.constant 0 : i32
    %682 = arith.cmpi eq, %c3_i32_374, %c0_i32_375 : i32
    %c1_i32_376 = arith.constant 1 : i32
    %683 = arith.select %682, %c1_i32_376, %c3_i32_374 : i32
    %684 = arith.remsi %681, %683 : i32
    %c0_i32_377 = arith.constant 0 : i32
    %685 = arith.cmpi ne, %684, %c0_i32_377 : i32
    %c0_i32_378 = arith.constant 0 : i32
    %686 = arith.cmpi slt, %684, %c0_i32_378 : i32
    %c0_i32_379 = arith.constant 0 : i32
    %687 = arith.cmpi slt, %683, %c0_i32_379 : i32
    %688 = arith.xori %686, %687 : i1
    %689 = arith.andi %688, %685 : i1
    %690 = arith.addi %684, %683 : i32
    %691 = arith.select %689, %690, %684 : i32
    %692 = arith.index_cast %691 : i32 to index
    %c0_380 = arith.constant 0 : index
    %c0_381 = arith.constant 0 : index
    %693 = vector.load %arg11[%692, %c0_380, %c0_381] : memref<3x8x256xf32, #tpu.memory_space<vmem>>, vector<1x8x256xf32>
    %694 = vector.shape_cast %693 : vector<1x8x256xf32> to vector<8x256xf32>
    %695 = arith.mulf %646, %663 : vector<8x256xf32>
    %696 = vector.broadcast %632 : f32 to vector<8x256xf32>
    %697 = arith.mulf %696, %695 : vector<8x256xf32>
    %cst_382 = arith.constant 1.000000e+00 : f32
    %698 = vector.broadcast %cst_382 : f32 to vector<8x256xf32>
    %699 = arith.subf %698, %697 : vector<8x256xf32>
    %700 = vector.broadcast %636 : f32 to vector<8x256xf32>
    %701 = arith.mulf %700, %694 : vector<8x256xf32>
    %702 = arith.mulf %699, %701 : vector<8x256xf32>
    %cst_383 = arith.constant 1.000000e+00 : f32
    %703 = vector.broadcast %cst_383 : f32 to vector<8x256xf32>
    %704 = arith.subf %703, %702 : vector<8x256xf32>
    %705 = vector.broadcast %640 : f32 to vector<8x256xf32>
    %706 = arith.mulf %705, %680 : vector<8x256xf32>
    %707 = arith.mulf %704, %706 : vector<8x256xf32>
    %cst_384 = arith.constant 1.000000e+00 : f32
    %708 = vector.broadcast %cst_384 : f32 to vector<8x256xf32>
    %709 = arith.subf %708, %707 : vector<8x256xf32>
    %710 = vector.broadcast %644 : f32 to vector<8x256xf32>
    %711 = arith.mulf %710, %666 : vector<8x256xf32>
    %712 = arith.mulf %709, %711 : vector<8x256xf32>
    %cst_385 = arith.constant 1.000000e+00 : f32
    %713 = vector.broadcast %cst_385 : f32 to vector<8x256xf32>
    %714 = arith.subf %713, %712 : vector<8x256xf32>
    %715 = arith.mulf %714, %649 : vector<8x256xf32>
    %c5_386 = arith.constant 5 : index
    %c0_387 = arith.constant 0 : index
    %c0_388 = arith.constant 0 : index
    %716 = vector.load %arg7[%c5_386, %c0_387, %c0_388] : memref<8x8x256xf32, #tpu.memory_space<vmem>>, vector<1x8x256xf32>
    %717 = vector.shape_cast %716 : vector<1x8x256xf32> to vector<8x256xf32>
    %718 = vector.shape_cast %715 : vector<8x256xf32> to vector<1x8x256xf32>
    tpu.vector_store %arg7[%c5_386, %c0_387, %c0_388], %718 {strides = array<i32>} : memref<8x8x256xf32, #tpu.memory_space<vmem>>, vector<1x8x256xf32>,
    %719 = arith.index_cast %619 : i32 to index
    %c0_389 = arith.constant 0 : index
    %c0_390 = arith.constant 0 : index
    %720 = vector.load %arg10[%719, %c0_389, %c0_390] : memref<8x8x256xf32, #tpu.memory_space<vmem>>, vector<1x8x256xf32>
    %721 = vector.shape_cast %720 : vector<1x8x256xf32> to vector<8x256xf32>
    %722 = vector.shape_cast %646 : vector<8x256xf32> to vector<1x8x256xf32>
    tpu.vector_store %arg10[%719, %c0_389, %c0_390], %722 {strides = array<i32>} : memref<8x8x256xf32, #tpu.memory_space<vmem>>, vector<1x8x256xf32>,
    %723 = arith.index_cast %629 : i32 to index
    %c0_391 = arith.constant 0 : index
    %c0_392 = arith.constant 0 : index
    %724 = vector.load %arg11[%723, %c0_391, %c0_392] : memref<3x8x256xf32, #tpu.memory_space<vmem>>, vector<1x8x256xf32>
    %725 = vector.shape_cast %724 : vector<1x8x256xf32> to vector<8x256xf32>
    %726 = vector.shape_cast %695 : vector<8x256xf32> to vector<1x8x256xf32>
    tpu.vector_store %arg11[%723, %c0_391, %c0_392], %726 {strides = array<i32>} : memref<3x8x256xf32, #tpu.memory_space<vmem>>, vector<1x8x256xf32>,
    %c8_i32_393 = arith.constant 8 : i32
    %727 = arith.muli %arg1, %c8_i32_393 : i32
    %c6_i32 = arith.constant 6 : i32
    %728 = arith.addi %727, %c6_i32 : i32
    %c6_i32_394 = arith.constant 6 : i32
    %729 = arith.addi %6, %c6_i32_394 : i32
    %c8_i32_395 = arith.constant 8 : i32
    %c0_i32_396 = arith.constant 0 : i32
    %730 = arith.cmpi eq, %c8_i32_395, %c0_i32_396 : i32
    %c1_i32_397 = arith.constant 1 : i32
    %731 = arith.select %730, %c1_i32_397, %c8_i32_395 : i32
    %732 = arith.remsi %729, %731 : i32
    %c0_i32_398 = arith.constant 0 : i32
    %733 = arith.cmpi ne, %732, %c0_i32_398 : i32
    %c0_i32_399 = arith.constant 0 : i32
    %734 = arith.cmpi slt, %732, %c0_i32_399 : i32
    %c0_i32_400 = arith.constant 0 : i32
    %735 = arith.cmpi slt, %731, %c0_i32_400 : i32
    %736 = arith.xori %734, %735 : i1
    %737 = arith.andi %736, %733 : i1
    %738 = arith.addi %732, %731 : i32
    %739 = arith.select %737, %738, %732 : i32
    %c3_i32_401 = arith.constant 3 : i32
    %c0_i32_402 = arith.constant 0 : i32
    %740 = arith.cmpi eq, %c3_i32_401, %c0_i32_402 : i32
    %c1_i32_403 = arith.constant 1 : i32
    %741 = arith.select %740, %c1_i32_403, %c3_i32_401 : i32
    %742 = arith.remsi %729, %741 : i32
    %c0_i32_404 = arith.constant 0 : i32
    %743 = arith.cmpi ne, %742, %c0_i32_404 : i32
    %c0_i32_405 = arith.constant 0 : i32
    %744 = arith.cmpi slt, %742, %c0_i32_405 : i32
    %c0_i32_406 = arith.constant 0 : i32
    %745 = arith.cmpi slt, %741, %c0_i32_406 : i32
    %746 = arith.xori %744, %745 : i1
    %747 = arith.andi %746, %743 : i1
    %748 = arith.addi %742, %741 : i32
    %749 = arith.select %747, %748, %742 : i32
    %c4_i32_407 = arith.constant 4 : i32
    %750 = arith.muli %c4_i32_407, %728 : i32
    %751 = arith.index_cast %750 : i32 to index
    %752 = memref.load %arg2[%751] : memref<64xf32, #tpu.memory_space<smem>>
    %c4_i32_408 = arith.constant 4 : i32
    %753 = arith.muli %c4_i32_408, %728 : i32
    %c1_i32_409 = arith.constant 1 : i32
    %754 = arith.addi %753, %c1_i32_409 : i32
    %755 = arith.index_cast %754 : i32 to index
    %756 = memref.load %arg2[%755] : memref<64xf32, #tpu.memory_space<smem>>
    %c4_i32_410 = arith.constant 4 : i32
    %757 = arith.muli %c4_i32_410, %728 : i32
    %c2_i32_411 = arith.constant 2 : i32
    %758 = arith.addi %757, %c2_i32_411 : i32
    %759 = arith.index_cast %758 : i32 to index
    %760 = memref.load %arg2[%759] : memref<64xf32, #tpu.memory_space<smem>>
    %c4_i32_412 = arith.constant 4 : i32
    %761 = arith.muli %c4_i32_412, %728 : i32
    %c3_i32_413 = arith.constant 3 : i32
    %762 = arith.addi %761, %c3_i32_413 : i32
    %763 = arith.index_cast %762 : i32 to index
    %764 = memref.load %arg2[%763] : memref<64xf32, #tpu.memory_space<smem>>
    %c6 = arith.constant 6 : index
    %c0_414 = arith.constant 0 : index
    %c0_415 = arith.constant 0 : index
    %765 = vector.load %arg4[%c6, %c0_414, %c0_415] : memref<8x8x256xf32, #tpu.memory_space<vmem>>, vector<1x8x256xf32>
    %766 = vector.shape_cast %765 : vector<1x8x256xf32> to vector<8x256xf32>
    %767 = arith.index_cast %739 : i32 to index
    %c0_416 = arith.constant 0 : index
    %c0_417 = arith.constant 0 : index
    %768 = vector.load %arg10[%767, %c0_416, %c0_417] : memref<8x8x256xf32, #tpu.memory_space<vmem>>, vector<1x8x256xf32>
    %769 = vector.shape_cast %768 : vector<1x8x256xf32> to vector<8x256xf32>
    %c4_i32_418 = arith.constant 4 : i32
    %770 = arith.addi %739, %c4_i32_418 : i32
    %c8_i32_419 = arith.constant 8 : i32
    %c0_i32_420 = arith.constant 0 : i32
    %771 = arith.cmpi eq, %c8_i32_419, %c0_i32_420 : i32
    %c1_i32_421 = arith.constant 1 : i32
    %772 = arith.select %771, %c1_i32_421, %c8_i32_419 : i32
    %773 = arith.remsi %770, %772 : i32
    %c0_i32_422 = arith.constant 0 : i32
    %774 = arith.cmpi ne, %773, %c0_i32_422 : i32
    %c0_i32_423 = arith.constant 0 : i32
    %775 = arith.cmpi slt, %773, %c0_i32_423 : i32
    %c0_i32_424 = arith.constant 0 : i32
    %776 = arith.cmpi slt, %772, %c0_i32_424 : i32
    %777 = arith.xori %775, %776 : i1
    %778 = arith.andi %777, %774 : i1
    %779 = arith.addi %773, %772 : i32
    %780 = arith.select %778, %779, %773 : i32
    %781 = arith.index_cast %780 : i32 to index
    %c0_425 = arith.constant 0 : index
    %c0_426 = arith.constant 0 : index
    %782 = vector.load %arg10[%781, %c0_425, %c0_426] : memref<8x8x256xf32, #tpu.memory_space<vmem>>, vector<1x8x256xf32>
    %783 = vector.shape_cast %782 : vector<1x8x256xf32> to vector<8x256xf32>
    %784 = arith.index_cast %749 : i32 to index
    %c0_427 = arith.constant 0 : index
    %c0_428 = arith.constant 0 : index
    %785 = vector.load %arg11[%784, %c0_427, %c0_428] : memref<3x8x256xf32, #tpu.memory_space<vmem>>, vector<1x8x256xf32>
    %786 = vector.shape_cast %785 : vector<1x8x256xf32> to vector<8x256xf32>
    %c1_i32_429 = arith.constant 1 : i32
    %787 = arith.addi %749, %c1_i32_429 : i32
    %c3_i32_430 = arith.constant 3 : i32
    %c0_i32_431 = arith.constant 0 : i32
    %788 = arith.cmpi eq, %c3_i32_430, %c0_i32_431 : i32
    %c1_i32_432 = arith.constant 1 : i32
    %789 = arith.select %788, %c1_i32_432, %c3_i32_430 : i32
    %790 = arith.remsi %787, %789 : i32
    %c0_i32_433 = arith.constant 0 : i32
    %791 = arith.cmpi ne, %790, %c0_i32_433 : i32
    %c0_i32_434 = arith.constant 0 : i32
    %792 = arith.cmpi slt, %790, %c0_i32_434 : i32
    %c0_i32_435 = arith.constant 0 : i32
    %793 = arith.cmpi slt, %789, %c0_i32_435 : i32
    %794 = arith.xori %792, %793 : i1
    %795 = arith.andi %794, %791 : i1
    %796 = arith.addi %790, %789 : i32
    %797 = arith.select %795, %796, %790 : i32
    %798 = arith.index_cast %797 : i32 to index
    %c0_436 = arith.constant 0 : index
    %c0_437 = arith.constant 0 : index
    %799 = vector.load %arg11[%798, %c0_436, %c0_437] : memref<3x8x256xf32, #tpu.memory_space<vmem>>, vector<1x8x256xf32>
    %800 = vector.shape_cast %799 : vector<1x8x256xf32> to vector<8x256xf32>
    %c2_i32_438 = arith.constant 2 : i32
    %801 = arith.addi %749, %c2_i32_438 : i32
    %c3_i32_439 = arith.constant 3 : i32
    %c0_i32_440 = arith.constant 0 : i32
    %802 = arith.cmpi eq, %c3_i32_439, %c0_i32_440 : i32
    %c1_i32_441 = arith.constant 1 : i32
    %803 = arith.select %802, %c1_i32_441, %c3_i32_439 : i32
    %804 = arith.remsi %801, %803 : i32
    %c0_i32_442 = arith.constant 0 : i32
    %805 = arith.cmpi ne, %804, %c0_i32_442 : i32
    %c0_i32_443 = arith.constant 0 : i32
    %806 = arith.cmpi slt, %804, %c0_i32_443 : i32
    %c0_i32_444 = arith.constant 0 : i32
    %807 = arith.cmpi slt, %803, %c0_i32_444 : i32
    %808 = arith.xori %806, %807 : i1
    %809 = arith.andi %808, %805 : i1
    %810 = arith.addi %804, %803 : i32
    %811 = arith.select %809, %810, %804 : i32
    %812 = arith.index_cast %811 : i32 to index
    %c0_445 = arith.constant 0 : index
    %c0_446 = arith.constant 0 : index
    %813 = vector.load %arg11[%812, %c0_445, %c0_446] : memref<3x8x256xf32, #tpu.memory_space<vmem>>, vector<1x8x256xf32>
    %814 = vector.shape_cast %813 : vector<1x8x256xf32> to vector<8x256xf32>
    %815 = arith.mulf %766, %783 : vector<8x256xf32>
    %816 = vector.broadcast %752 : f32 to vector<8x256xf32>
    %817 = arith.mulf %816, %815 : vector<8x256xf32>
    %cst_447 = arith.constant 1.000000e+00 : f32
    %818 = vector.broadcast %cst_447 : f32 to vector<8x256xf32>
    %819 = arith.subf %818, %817 : vector<8x256xf32>
    %820 = vector.broadcast %756 : f32 to vector<8x256xf32>
    %821 = arith.mulf %820, %814 : vector<8x256xf32>
    %822 = arith.mulf %819, %821 : vector<8x256xf32>
    %cst_448 = arith.constant 1.000000e+00 : f32
    %823 = vector.broadcast %cst_448 : f32 to vector<8x256xf32>
    %824 = arith.subf %823, %822 : vector<8x256xf32>
    %825 = vector.broadcast %760 : f32 to vector<8x256xf32>
    %826 = arith.mulf %825, %800 : vector<8x256xf32>
    %827 = arith.mulf %824, %826 : vector<8x256xf32>
    %cst_449 = arith.constant 1.000000e+00 : f32
    %828 = vector.broadcast %cst_449 : f32 to vector<8x256xf32>
    %829 = arith.subf %828, %827 : vector<8x256xf32>
    %830 = vector.broadcast %764 : f32 to vector<8x256xf32>
    %831 = arith.mulf %830, %786 : vector<8x256xf32>
    %832 = arith.mulf %829, %831 : vector<8x256xf32>
    %cst_450 = arith.constant 1.000000e+00 : f32
    %833 = vector.broadcast %cst_450 : f32 to vector<8x256xf32>
    %834 = arith.subf %833, %832 : vector<8x256xf32>
    %835 = arith.mulf %834, %769 : vector<8x256xf32>
    %c6_451 = arith.constant 6 : index
    %c0_452 = arith.constant 0 : index
    %c0_453 = arith.constant 0 : index
    %836 = vector.load %arg7[%c6_451, %c0_452, %c0_453] : memref<8x8x256xf32, #tpu.memory_space<vmem>>, vector<1x8x256xf32>
    %837 = vector.shape_cast %836 : vector<1x8x256xf32> to vector<8x256xf32>
    %838 = vector.shape_cast %835 : vector<8x256xf32> to vector<1x8x256xf32>
    tpu.vector_store %arg7[%c6_451, %c0_452, %c0_453], %838 {strides = array<i32>} : memref<8x8x256xf32, #tpu.memory_space<vmem>>, vector<1x8x256xf32>,
    %839 = arith.index_cast %739 : i32 to index
    %c0_454 = arith.constant 0 : index
    %c0_455 = arith.constant 0 : index
    %840 = vector.load %arg10[%839, %c0_454, %c0_455] : memref<8x8x256xf32, #tpu.memory_space<vmem>>, vector<1x8x256xf32>
    %841 = vector.shape_cast %840 : vector<1x8x256xf32> to vector<8x256xf32>
    %842 = vector.shape_cast %766 : vector<8x256xf32> to vector<1x8x256xf32>
    tpu.vector_store %arg10[%839, %c0_454, %c0_455], %842 {strides = array<i32>} : memref<8x8x256xf32, #tpu.memory_space<vmem>>, vector<1x8x256xf32>,
    %843 = arith.index_cast %749 : i32 to index
    %c0_456 = arith.constant 0 : index
    %c0_457 = arith.constant 0 : index
    %844 = vector.load %arg11[%843, %c0_456, %c0_457] : memref<3x8x256xf32, #tpu.memory_space<vmem>>, vector<1x8x256xf32>
    %845 = vector.shape_cast %844 : vector<1x8x256xf32> to vector<8x256xf32>
    %846 = vector.shape_cast %815 : vector<8x256xf32> to vector<1x8x256xf32>
    tpu.vector_store %arg11[%843, %c0_456, %c0_457], %846 {strides = array<i32>} : memref<3x8x256xf32, #tpu.memory_space<vmem>>, vector<1x8x256xf32>,
    %c8_i32_458 = arith.constant 8 : i32
    %847 = arith.muli %arg1, %c8_i32_458 : i32
    %c7_i32 = arith.constant 7 : i32
    %848 = arith.addi %847, %c7_i32 : i32
    %c7_i32_459 = arith.constant 7 : i32
    %849 = arith.addi %6, %c7_i32_459 : i32
    %c8_i32_460 = arith.constant 8 : i32
    %c0_i32_461 = arith.constant 0 : i32
    %850 = arith.cmpi eq, %c8_i32_460, %c0_i32_461 : i32
    %c1_i32_462 = arith.constant 1 : i32
    %851 = arith.select %850, %c1_i32_462, %c8_i32_460 : i32
    %852 = arith.remsi %849, %851 : i32
    %c0_i32_463 = arith.constant 0 : i32
    %853 = arith.cmpi ne, %852, %c0_i32_463 : i32
    %c0_i32_464 = arith.constant 0 : i32
    %854 = arith.cmpi slt, %852, %c0_i32_464 : i32
    %c0_i32_465 = arith.constant 0 : i32
    %855 = arith.cmpi slt, %851, %c0_i32_465 : i32
    %856 = arith.xori %854, %855 : i1
    %857 = arith.andi %856, %853 : i1
    %858 = arith.addi %852, %851 : i32
    %859 = arith.select %857, %858, %852 : i32
    %c3_i32_466 = arith.constant 3 : i32
    %c0_i32_467 = arith.constant 0 : i32
    %860 = arith.cmpi eq, %c3_i32_466, %c0_i32_467 : i32
    %c1_i32_468 = arith.constant 1 : i32
    %861 = arith.select %860, %c1_i32_468, %c3_i32_466 : i32
    %862 = arith.remsi %849, %861 : i32
    %c0_i32_469 = arith.constant 0 : i32
    %863 = arith.cmpi ne, %862, %c0_i32_469 : i32
    %c0_i32_470 = arith.constant 0 : i32
    %864 = arith.cmpi slt, %862, %c0_i32_470 : i32
    %c0_i32_471 = arith.constant 0 : i32
    %865 = arith.cmpi slt, %861, %c0_i32_471 : i32
    %866 = arith.xori %864, %865 : i1
    %867 = arith.andi %866, %863 : i1
    %868 = arith.addi %862, %861 : i32
    %869 = arith.select %867, %868, %862 : i32
    %c4_i32_472 = arith.constant 4 : i32
    %870 = arith.muli %c4_i32_472, %848 : i32
    %871 = arith.index_cast %870 : i32 to index
    %872 = memref.load %arg2[%871] : memref<64xf32, #tpu.memory_space<smem>>
    %c4_i32_473 = arith.constant 4 : i32
    %873 = arith.muli %c4_i32_473, %848 : i32
    %c1_i32_474 = arith.constant 1 : i32
    %874 = arith.addi %873, %c1_i32_474 : i32
    %875 = arith.index_cast %874 : i32 to index
    %876 = memref.load %arg2[%875] : memref<64xf32, #tpu.memory_space<smem>>
    %c4_i32_475 = arith.constant 4 : i32
    %877 = arith.muli %c4_i32_475, %848 : i32
    %c2_i32_476 = arith.constant 2 : i32
    %878 = arith.addi %877, %c2_i32_476 : i32
    %879 = arith.index_cast %878 : i32 to index
    %880 = memref.load %arg2[%879] : memref<64xf32, #tpu.memory_space<smem>>
    %c4_i32_477 = arith.constant 4 : i32
    %881 = arith.muli %c4_i32_477, %848 : i32
    %c3_i32_478 = arith.constant 3 : i32
    %882 = arith.addi %881, %c3_i32_478 : i32
    %883 = arith.index_cast %882 : i32 to index
    %884 = memref.load %arg2[%883] : memref<64xf32, #tpu.memory_space<smem>>
    %c7 = arith.constant 7 : index
    %c0_479 = arith.constant 0 : index
    %c0_480 = arith.constant 0 : index
    %885 = vector.load %arg4[%c7, %c0_479, %c0_480] : memref<8x8x256xf32, #tpu.memory_space<vmem>>, vector<1x8x256xf32>
    %886 = vector.shape_cast %885 : vector<1x8x256xf32> to vector<8x256xf32>
    %887 = arith.index_cast %859 : i32 to index
    %c0_481 = arith.constant 0 : index
    %c0_482 = arith.constant 0 : index
    %888 = vector.load %arg10[%887, %c0_481, %c0_482] : memref<8x8x256xf32, #tpu.memory_space<vmem>>, vector<1x8x256xf32>
    %889 = vector.shape_cast %888 : vector<1x8x256xf32> to vector<8x256xf32>
    %c4_i32_483 = arith.constant 4 : i32
    %890 = arith.addi %859, %c4_i32_483 : i32
    %c8_i32_484 = arith.constant 8 : i32
    %c0_i32_485 = arith.constant 0 : i32
    %891 = arith.cmpi eq, %c8_i32_484, %c0_i32_485 : i32
    %c1_i32_486 = arith.constant 1 : i32
    %892 = arith.select %891, %c1_i32_486, %c8_i32_484 : i32
    %893 = arith.remsi %890, %892 : i32
    %c0_i32_487 = arith.constant 0 : i32
    %894 = arith.cmpi ne, %893, %c0_i32_487 : i32
    %c0_i32_488 = arith.constant 0 : i32
    %895 = arith.cmpi slt, %893, %c0_i32_488 : i32
    %c0_i32_489 = arith.constant 0 : i32
    %896 = arith.cmpi slt, %892, %c0_i32_489 : i32
    %897 = arith.xori %895, %896 : i1
    %898 = arith.andi %897, %894 : i1
    %899 = arith.addi %893, %892 : i32
    %900 = arith.select %898, %899, %893 : i32
    %901 = arith.index_cast %900 : i32 to index
    %c0_490 = arith.constant 0 : index
    %c0_491 = arith.constant 0 : index
    %902 = vector.load %arg10[%901, %c0_490, %c0_491] : memref<8x8x256xf32, #tpu.memory_space<vmem>>, vector<1x8x256xf32>
    %903 = vector.shape_cast %902 : vector<1x8x256xf32> to vector<8x256xf32>
    %904 = arith.index_cast %869 : i32 to index
    %c0_492 = arith.constant 0 : index
    %c0_493 = arith.constant 0 : index
    %905 = vector.load %arg11[%904, %c0_492, %c0_493] : memref<3x8x256xf32, #tpu.memory_space<vmem>>, vector<1x8x256xf32>
    %906 = vector.shape_cast %905 : vector<1x8x256xf32> to vector<8x256xf32>
    %c1_i32_494 = arith.constant 1 : i32
    %907 = arith.addi %869, %c1_i32_494 : i32
    %c3_i32_495 = arith.constant 3 : i32
    %c0_i32_496 = arith.constant 0 : i32
    %908 = arith.cmpi eq, %c3_i32_495, %c0_i32_496 : i32
    %c1_i32_497 = arith.constant 1 : i32
    %909 = arith.select %908, %c1_i32_497, %c3_i32_495 : i32
    %910 = arith.remsi %907, %909 : i32
    %c0_i32_498 = arith.constant 0 : i32
    %911 = arith.cmpi ne, %910, %c0_i32_498 : i32
    %c0_i32_499 = arith.constant 0 : i32
    %912 = arith.cmpi slt, %910, %c0_i32_499 : i32
    %c0_i32_500 = arith.constant 0 : i32
    %913 = arith.cmpi slt, %909, %c0_i32_500 : i32
    %914 = arith.xori %912, %913 : i1
    %915 = arith.andi %914, %911 : i1
    %916 = arith.addi %910, %909 : i32
    %917 = arith.select %915, %916, %910 : i32
    %918 = arith.index_cast %917 : i32 to index
    %c0_501 = arith.constant 0 : index
    %c0_502 = arith.constant 0 : index
    %919 = vector.load %arg11[%918, %c0_501, %c0_502] : memref<3x8x256xf32, #tpu.memory_space<vmem>>, vector<1x8x256xf32>
    %920 = vector.shape_cast %919 : vector<1x8x256xf32> to vector<8x256xf32>
    %c2_i32_503 = arith.constant 2 : i32
    %921 = arith.addi %869, %c2_i32_503 : i32
    %c3_i32_504 = arith.constant 3 : i32
    %c0_i32_505 = arith.constant 0 : i32
    %922 = arith.cmpi eq, %c3_i32_504, %c0_i32_505 : i32
    %c1_i32_506 = arith.constant 1 : i32
    %923 = arith.select %922, %c1_i32_506, %c3_i32_504 : i32
    %924 = arith.remsi %921, %923 : i32
    %c0_i32_507 = arith.constant 0 : i32
    %925 = arith.cmpi ne, %924, %c0_i32_507 : i32
    %c0_i32_508 = arith.constant 0 : i32
    %926 = arith.cmpi slt, %924, %c0_i32_508 : i32
    %c0_i32_509 = arith.constant 0 : i32
    %927 = arith.cmpi slt, %923, %c0_i32_509 : i32
    %928 = arith.xori %926, %927 : i1
    %929 = arith.andi %928, %925 : i1
    %930 = arith.addi %924, %923 : i32
    %931 = arith.select %929, %930, %924 : i32
    %932 = arith.index_cast %931 : i32 to index
    %c0_510 = arith.constant 0 : index
    %c0_511 = arith.constant 0 : index
    %933 = vector.load %arg11[%932, %c0_510, %c0_511] : memref<3x8x256xf32, #tpu.memory_space<vmem>>, vector<1x8x256xf32>
    %934 = vector.shape_cast %933 : vector<1x8x256xf32> to vector<8x256xf32>
    %935 = arith.mulf %886, %903 : vector<8x256xf32>
    %936 = vector.broadcast %872 : f32 to vector<8x256xf32>
    %937 = arith.mulf %936, %935 : vector<8x256xf32>
    %cst_512 = arith.constant 1.000000e+00 : f32
    %938 = vector.broadcast %cst_512 : f32 to vector<8x256xf32>
    %939 = arith.subf %938, %937 : vector<8x256xf32>
    %940 = vector.broadcast %876 : f32 to vector<8x256xf32>
    %941 = arith.mulf %940, %934 : vector<8x256xf32>
    %942 = arith.mulf %939, %941 : vector<8x256xf32>
    %cst_513 = arith.constant 1.000000e+00 : f32
    %943 = vector.broadcast %cst_513 : f32 to vector<8x256xf32>
    %944 = arith.subf %943, %942 : vector<8x256xf32>
    %945 = vector.broadcast %880 : f32 to vector<8x256xf32>
    %946 = arith.mulf %945, %920 : vector<8x256xf32>
    %947 = arith.mulf %944, %946 : vector<8x256xf32>
    %cst_514 = arith.constant 1.000000e+00 : f32
    %948 = vector.broadcast %cst_514 : f32 to vector<8x256xf32>
    %949 = arith.subf %948, %947 : vector<8x256xf32>
    %950 = vector.broadcast %884 : f32 to vector<8x256xf32>
    %951 = arith.mulf %950, %906 : vector<8x256xf32>
    %952 = arith.mulf %949, %951 : vector<8x256xf32>
    %cst_515 = arith.constant 1.000000e+00 : f32
    %953 = vector.broadcast %cst_515 : f32 to vector<8x256xf32>
    %954 = arith.subf %953, %952 : vector<8x256xf32>
    %955 = arith.mulf %954, %889 : vector<8x256xf32>
    %c7_516 = arith.constant 7 : index
    %c0_517 = arith.constant 0 : index
    %c0_518 = arith.constant 0 : index
    %956 = vector.load %arg7[%c7_516, %c0_517, %c0_518] : memref<8x8x256xf32, #tpu.memory_space<vmem>>, vector<1x8x256xf32>
    %957 = vector.shape_cast %956 : vector<1x8x256xf32> to vector<8x256xf32>
    %958 = vector.shape_cast %955 : vector<8x256xf32> to vector<1x8x256xf32>
    tpu.vector_store %arg7[%c7_516, %c0_517, %c0_518], %958 {strides = array<i32>} : memref<8x8x256xf32, #tpu.memory_space<vmem>>, vector<1x8x256xf32>,
    %959 = arith.index_cast %859 : i32 to index
    %c0_519 = arith.constant 0 : index
    %c0_520 = arith.constant 0 : index
    %960 = vector.load %arg10[%959, %c0_519, %c0_520] : memref<8x8x256xf32, #tpu.memory_space<vmem>>, vector<1x8x256xf32>
    %961 = vector.shape_cast %960 : vector<1x8x256xf32> to vector<8x256xf32>
    %962 = vector.shape_cast %886 : vector<8x256xf32> to vector<1x8x256xf32>
    tpu.vector_store %arg10[%959, %c0_519, %c0_520], %962 {strides = array<i32>} : memref<8x8x256xf32, #tpu.memory_space<vmem>>, vector<1x8x256xf32>,
    %963 = arith.index_cast %869 : i32 to index
    %c0_521 = arith.constant 0 : index
    %c0_522 = arith.constant 0 : index
    %964 = vector.load %arg11[%963, %c0_521, %c0_522] : memref<3x8x256xf32, #tpu.memory_space<vmem>>, vector<1x8x256xf32>
    %965 = vector.shape_cast %964 : vector<1x8x256xf32> to vector<8x256xf32>
    %966 = vector.shape_cast %935 : vector<8x256xf32> to vector<1x8x256xf32>
    tpu.vector_store %arg11[%963, %c0_521, %c0_522], %966 {strides = array<i32>} : memref<3x8x256xf32, #tpu.memory_space<vmem>>, vector<1x8x256xf32>,
    %c1_i32_523 = arith.constant 1 : i32
    %967 = arith.cmpi eq, %arg1, %c1_i32_523 : i32
    %968 = arith.extui %967 : i1 to i32
    %c0_i32_524 = arith.constant 0 : i32
    %969 = arith.cmpi ne, %968, %c0_i32_524 : i32
    scf.if %969 {
      %c0_i32_525 = arith.constant 0 : i32
      %c0_i32_526 = arith.constant 0 : i32
      %c0_i32_527 = arith.constant 0 : i32
      %970 = tpu.memref_slice %arg8[%c0_i32_526, %0, %c0_i32_527] : memref<8x8x256xf32, #tpu.memory_space<any>> -> memref<8x8x256xf32, #tpu.memory_space<any>>
      %971 = tpu.memref_slice %arg12[%c0_i32_525] : memref<2x!tpu.dma_semaphore, #tpu.memory_space<semaphore_mem>> -> memref<1x!tpu.dma_semaphore, #tpu.memory_space<semaphore_mem>>
      %972 = tpu.memref_squeeze %971 : memref<1x!tpu.dma_semaphore, #tpu.memory_space<semaphore_mem>> -> memref<!tpu.dma_semaphore, #tpu.memory_space<semaphore_mem>>
      tpu.enqueue_dma source(%arg10 : memref<8x8x256xf32, #tpu.memory_space<vmem>>) target(%970 : memref<8x8x256xf32, #tpu.memory_space<any>>) target_semaphore(%972 : memref<!tpu.dma_semaphore, #tpu.memory_space<semaphore_mem>>)
      %c1_i32_528 = arith.constant 1 : i32
      %c0_i32_529 = arith.constant 0 : i32
      %c0_i32_530 = arith.constant 0 : i32
      %973 = tpu.memref_slice %arg9[%c0_i32_529, %0, %c0_i32_530] : memref<3x8x256xf32, #tpu.memory_space<any>> -> memref<3x8x256xf32, #tpu.memory_space<any>>
      %974 = tpu.memref_slice %arg12[%c1_i32_528] : memref<2x!tpu.dma_semaphore, #tpu.memory_space<semaphore_mem>> -> memref<1x!tpu.dma_semaphore, #tpu.memory_space<semaphore_mem>>
      %975 = tpu.memref_squeeze %974 : memref<1x!tpu.dma_semaphore, #tpu.memory_space<semaphore_mem>> -> memref<!tpu.dma_semaphore, #tpu.memory_space<semaphore_mem>>
      tpu.enqueue_dma source(%arg11 : memref<3x8x256xf32, #tpu.memory_space<vmem>>) target(%973 : memref<3x8x256xf32, #tpu.memory_space<any>>) target_semaphore(%975 : memref<!tpu.dma_semaphore, #tpu.memory_space<semaphore_mem>>)
      %c0_i32_531 = arith.constant 0 : i32
      %c0_i32_532 = arith.constant 0 : i32
      %c0_i32_533 = arith.constant 0 : i32
      %976 = tpu.memref_slice %arg8[%c0_i32_532, %0, %c0_i32_533] : memref<8x8x256xf32, #tpu.memory_space<any>> -> memref<8x8x256xf32, #tpu.memory_space<any>>
      %977 = tpu.memref_slice %arg12[%c0_i32_531] : memref<2x!tpu.dma_semaphore, #tpu.memory_space<semaphore_mem>> -> memref<1x!tpu.dma_semaphore, #tpu.memory_space<semaphore_mem>>
      %978 = tpu.memref_squeeze %977 : memref<1x!tpu.dma_semaphore, #tpu.memory_space<semaphore_mem>> -> memref<!tpu.dma_semaphore, #tpu.memory_space<semaphore_mem>>
      tpu.wait_dma2 semaphore(%978 : memref<!tpu.dma_semaphore, #tpu.memory_space<semaphore_mem>>) src(%arg10 : memref<8x8x256xf32, #tpu.memory_space<vmem>>) dst(%976 : memref<8x8x256xf32, #tpu.memory_space<any>>)
      %c1_i32_534 = arith.constant 1 : i32
      %c0_i32_535 = arith.constant 0 : i32
      %c0_i32_536 = arith.constant 0 : i32
      %979 = tpu.memref_slice %arg9[%c0_i32_535, %0, %c0_i32_536] : memref<3x8x256xf32, #tpu.memory_space<any>> -> memref<3x8x256xf32, #tpu.memory_space<any>>
      %980 = tpu.memref_slice %arg12[%c1_i32_534] : memref<2x!tpu.dma_semaphore, #tpu.memory_space<semaphore_mem>> -> memref<1x!tpu.dma_semaphore, #tpu.memory_space<semaphore_mem>>
      %981 = tpu.memref_squeeze %980 : memref<1x!tpu.dma_semaphore, #tpu.memory_space<semaphore_mem>> -> memref<!tpu.dma_semaphore, #tpu.memory_space<semaphore_mem>>
      tpu.wait_dma2 semaphore(%981 : memref<!tpu.dma_semaphore, #tpu.memory_space<semaphore_mem>>) src(%arg11 : memref<3x8x256xf32, #tpu.memory_space<vmem>>) dst(%979 : memref<3x8x256xf32, #tpu.memory_space<any>>)
    } else {
    }
    return
  }
  func.func @transform_0(%arg0: i32, %arg1: i32) -> i32 {
    %c0_i32 = arith.constant 0 : i32
    %c0_i32_0 = arith.constant 0 : i32
    return %c0_i32 : i32
  }
  func.func @transform_1(%arg0: i32, %arg1: i32) -> i32 {
    %c0_i32 = arith.constant 0 : i32
    %c0_i32_0 = arith.constant 0 : i32
    return %c0_i32 : i32
  }
  func.func @transform_2(%arg0: i32, %arg1: i32) -> (i32, i32, i32) {
    %c0_i32 = arith.constant 0 : i32
    %c0_i32_0 = arith.constant 0 : i32
    return %arg1, %arg0, %c0_i32 : i32, i32, i32
  }
  func.func @transform_5(%arg0: i32, %arg1: i32) -> (i32, i32, i32) {
    %c0_i32 = arith.constant 0 : i32
    %c0_i32_0 = arith.constant 0 : i32
    return %arg1, %arg0, %c0_i32 : i32, i32, i32
  }
}

</mosaic_0001>

<llo_original>
// kernel: tpu_custom_call.1
$region0: #{tpu_custom_call.1}
  #allocation0 [shape = 'u32[]', space=smem, size = 0x4, offset = 0x4, fixed_abs, tag = 'smem constant byte address 0x4 - core index']
  #allocation1 [shape = 'u32[144,128]{1,0:T(1,128)}', space=vmem, size = 0x12000, scoped, tag = 'internal scratch']
  #allocation2 [shape = 'f32[8,8,256]{2,1,0:T(8,128)}', space=vmem, size = 0x10000, scoped, tag = 'scratch operand']
  #allocation3 [shape = 'f32[3,8,256]{2,1,0:T(8,128)}', space=vmem, size = 0x6000, scoped, tag = 'scratch operand']
  #allocation4 [shape = 's32[2]{0}', space=sflag, size = 0x8, scoped, tag = 'scratch operand']
  #allocation5 [shape = 's32[1]{0:T(128)S(6)}', space=smem, size = 0x200, scoped, tag = 'scoped memory for tpu_custom_call.1']
  #allocation10 [shape = 's32[]', space=sflag, size = 0x4, offset = 0, fixed_abs, tag = 'sflag constant byte address 0x0 - dummy sync flag']
  #allocation11 [shape = 's32[]', space=sflag, size = 0x4, offset = 0, fixed_abs, tag = 'sflag constant byte address 0x0 - dummy sync flag']
  #allocation12 [shape = 'u32[]', space=smem, size = 0x4, offset = 0x44, fixed_abs, tag = 'smem constant byte address 0x44 - assertion arg 0']
  #allocation13 [shape = 'u32[]', space=smem, size = 0x4, offset = 0x48, fixed_abs, tag = 'smem constant byte address 0x48 - assertion arg 1']
  #allocation14 [shape = 's32[]', space=sflag, size = 0x4, offset = 0, fixed_abs, tag = 'sflag constant byte address 0x0 - dummy sync flag']
  #allocation15 [shape = 's32[]', space=sflag, size = 0x4, offset = 0, fixed_abs, tag = 'sflag constant byte address 0x0 - dummy sync flag']
  #allocation16 [shape = 's32[]', space=sflag, size = 0x4, offset = 0, fixed_abs, tag = 'sflag constant byte address 0x0 - dummy sync flag']
  #allocation17 [shape = 's32[]', space=sflag, size = 0x4, offset = 0, fixed_abs, tag = 'sflag constant byte address 0x0 - dummy sync flag']
  #allocation18 [shape = 's32[]', space=sflag, size = 0x4, offset = 0, fixed_abs, tag = 'sflag constant byte address 0x0 - dummy sync flag']
  #allocation19 [shape = 's32[]', space=sflag, size = 0x4, offset = 0, fixed_abs, tag = 'sflag constant byte address 0x0 - dummy sync flag']
  %s0 = inlined_call_operand.vmem [shape: f32[64], index: 0, kind: input, shape index: {}]
  %s1 = inlined_call_operand.<no memory space> [shape: s32[1], index: 1, kind: input, shape index: {}]
  %s2 = inlined_call_operand.vmem [shape: f32[16,8,256], index: 2, kind: input, shape index: {}]
  %s3 = inlined_call_operand.hbm [shape: f32[8,8,256], index: 3, kind: input, shape index: {}, may-alias: {3,6}]
  %s4 = inlined_call_operand.hbm [shape: f32[3,8,256], index: 4, kind: input, shape index: {}, may-alias: {4,7}]
  %s5 = inlined_call_operand.hbm [shape: f32[16,8,256], index: 5, kind: output, shape index: {0}]
  %s6 = inlined_call_operand.hbm [shape: f32[8,8,256], index: 6, kind: output, shape index: {1}, may-alias: {3,6}]
  %s7 = inlined_call_operand.hbm [shape: f32[3,8,256], index: 7, kind: output, shape index: {2}, may-alias: {4,7}]
  %8 = xla_tuple %s5, %s6, %s7
  %s9 = sld [smem:[#allocation0]]
  $region73: #{tpu_custom_call.1} parent=0
    _
  %s11 = ssub.s32 1, %s9
  %s12 = scalar_select 0, %s11, %s9
  %13 = sst [smem:[#allocation5]] %s1
  $region1: #{tpu_custom_call.1} parent=0
    #allocation6 [shape = 'u8[512]{0}', space=smem, size = 0x200, scoped, tag = 'input window, operand 0, single buffered']
    #allocation7 [shape = 's32[2]{0}', space=sflag, size = 0x8, scoped, tag = 'scoped memory for tpu_custom_call.1']
    #allocation8 [shape = 's32[2]{0}', space=sflag, size = 0x8, scoped, tag = 'scoped memory for tpu_custom_call.1']
    #allocation9 [shape = 'u8[131072]{0}', space=vmem, size = 0x20000, scoped, tag = 'output window, operand 0']
    %14 = vsyncpa [#allocation8], 0
    %15 = vsyncpa [#allocation7], 0
    %s16 = scalar_lea.sflag [#allocation7], 1
    %17 = vsyncpa %s16, 0
    loop: start=0, step=1, limit=4
    $region2: #{tpu_custom_call.1} parent=1 // loop_pre_header
      _
    $region3: #{tpu_custom_call.1} parent=1 // loop_header
      %s19 = sphi 0, %s23
      %p20 = scmp.ge.s32.totalorder %s19, 4
      %s26 = sphi 0, %s38
      %s27 = sphi 0, %s34
      %s28 = sphi 0, %s26
      %s29 = sphi 0, %s27
      %s30 = sphi 0, %s28
      %s31 = sphi 0, %s29
      %s39 = sphi 0, %s39
      %s41 = sphi 0, %s39
      %s42 = sphi 0, %s41
      %s56 = sphi 0, %s42
      %s60 = sphi 0, %s60
      %s62 = sphi 0, %s60
      %s63 = sphi 0, %s62
      %s77 = sphi 0, %s63
      %s85 = sphi 0, %s87
      %s88 = sphi 0, %s85
      %s89 = sphi 0, %s88
      %s105 = sphi 0, %s89
      %s113 = sphi 0, %s115
      %s116 = sphi 0, %s113
      %s117 = sphi 0, %s116
      %s133 = sphi 0, %s117
    $region4: #{tpu_custom_call.1} parent=1 // loop_header_branch
      %22 = sbr.rel (%p20) target = $region8
    $region5: #{tpu_custom_call.1} parent=1 // loop_body
      %s24 = ssub.s32 %s19, 1
      %s25 = ssub.s32 %s19, 2
      %s32 = sadd.s32 1, %s27
      %p33 = scmp.ge.s32.totalorder %s32, 2
      %s34 = scalar_select %p33, 0, %s32
      %s35 = sadd.s32 1, %s26
      %s36 = scalar_select %p33, %s35, %s26
      %p37 = scmp.ge.s32.totalorder %s36, 1
      %s38 = scalar_select %p37, 0, %s36
      %s40 = sadd.s32 %s39, 1
      %p43 = scmp.eq.s32.totalorder %s19, 1
      %p44 = scmp.ne.s32.totalorder %s39, %s41
      %p45 = scmp.eq.s32.totalorder %s19, 0
      %p46 = por %p44, %p45
      %p47 = scmp.ne.s32.totalorder %s39, %s41
      %p48 = scmp.eq.s32.totalorder %s24, 1
      %p49 = por %p47, %p48
      %p50 = scmp.ne.s32.totalorder %s41, %s42
      %p51 = scmp.eq.s32.totalorder %s24, 0
      %p52 = por %p50, %p51
      %p53 = scmp.ne.s32.totalorder %s41, %s42
      %p54 = scmp.eq.s32.totalorder %s25, 1
      %p55 = por %p53, %p54
      %p57 = scmp.ne.s32.totalorder %s42, %s56
      %p58 = scmp.eq.s32.totalorder %s25, 0
      %p59 = por %p57, %p58
      %s61 = sadd.s32 %s60, 1
      %p64 = scmp.eq.s32.totalorder %s19, 1
      %p65 = scmp.ne.s32.totalorder %s60, %s62
      %p66 = scmp.eq.s32.totalorder %s19, 0
      %p67 = por %p65, %p66
      %p68 = scmp.ne.s32.totalorder %s60, %s62
      %p69 = scmp.eq.s32.totalorder %s24, 1
      %p70 = por %p68, %p69
      %p71 = scmp.ne.s32.totalorder %s62, %s63
      %p72 = scmp.eq.s32.totalorder %s24, 0
      %p73 = por %p71, %p72
      %p74 = scmp.ne.s32.totalorder %s62, %s63
      %p75 = scmp.eq.s32.totalorder %s25, 1
      %p76 = por %p74, %p75
      %p78 = scmp.ne.s32.totalorder %s63, %s77
      %p79 = scmp.eq.s32.totalorder %s25, 0
      %p80 = por %p78, %p79
      %s81 = ssub.s32 %s27, %s34
      %s82 = ssub.s32 %s26, %s38
      %s83 = sor.u32 %s81, %s82
      %p84 = scmp.eq.s32.totalorder %s83, 0
      %s86 = sadd.s32 %s85, 1
      %s87 = scalar_select %p84, %s85, %s86
      %p90 = pneg %p84
      %p91 = scmp.eq.s32.totalorder %s19, 1
      %p92 = por %p90, %p91
      %p93 = scmp.ne.s32.totalorder %s85, %s88
      %p94 = scmp.eq.s32.totalorder %s19, 0
      %p95 = por %p93, %p94
      %p96 = scmp.ne.s32.totalorder %s85, %s88
      %p97 = scmp.eq.s32.totalorder %s24, 1
      %p98 = por %p96, %p97
      %p99 = scmp.ne.s32.totalorder %s88, %s89
      %p100 = scmp.eq.s32.totalorder %s24, 0
      %p101 = por %p99, %p100
      %p102 = scmp.ne.s32.totalorder %s88, %s89
      %p103 = scmp.eq.s32.totalorder %s25, 1
      %p104 = por %p102, %p103
      %p106 = scmp.ne.s32.totalorder %s89, %s105
      %p107 = scmp.eq.s32.totalorder %s25, 0
      %p108 = por %p106, %p107
      %s109 = ssub.s32 %s27, %s34
      %s110 = ssub.s32 %s26, %s38
      %s111 = sor.u32 %s109, %s110
      %p112 = scmp.eq.s32.totalorder %s111, 0
      %s114 = sadd.s32 %s113, 1
      %s115 = scalar_select %p112, %s113, %s114
      %p118 = pneg %p112
      %p119 = scmp.eq.s32.totalorder %s19, 1
      %p120 = por %p118, %p119
      %p121 = scmp.ne.s32.totalorder %s113, %s116
      %p122 = scmp.eq.s32.totalorder %s19, 0
      %p123 = por %p121, %p122
      %p124 = scmp.ne.s32.totalorder %s113, %s116
      %p125 = scmp.eq.s32.totalorder %s24, 1
      %p126 = por %p124, %p125
      %p127 = scmp.ne.s32.totalorder %s116, %s117
      %p128 = scmp.eq.s32.totalorder %s24, 0
      %p129 = por %p127, %p128
      %p130 = scmp.ne.s32.totalorder %s116, %s117
      %p131 = scmp.eq.s32.totalorder %s25, 1
      %p132 = por %p130, %p131
      %p134 = scmp.ne.s32.totalorder %s117, %s133
      %p135 = scmp.eq.s32.totalorder %s25, 0
      %p136 = por %p134, %p135
      %p137 = scmp.le.s32.totalorder 1, %s19
      %p138 = scmp.lt.s32.totalorder %s19, 3
      %p139 = pnand %p137, %p138
      %p140 = pneg %p139
      // Predicated region
      $region9: #{tpu_custom_call.1} parent=5 // pred_check
        _
      $region10: #{tpu_custom_call.1} parent=5 // pred_check_branch
        %142 = sbr.rel (%p139) target = $region12
      $region11: #{tpu_custom_call.1} parent=5 // pred_region
        %s143 = ssub.s32 %s19, 1
        // Predicated region
        $region13: #{tpu_custom_call.1} parent=11 // pred_check
          %p144 = pneg %p52
        $region14: #{tpu_custom_call.1} parent=11 // pred_check_branch
          %146 = sbr.rel (%p144) target = $region16
        $region15: #{tpu_custom_call.1} parent=11 // pred_region
          %s148 = ssub.s32 16, 16
          %149 = vsyncadd [#allocation8], %s148
          %s151 = sshll.u32 %s0, 4
          %s152 = int_to_ptr.vmem [resolvable:$true] %s151
          %154 = dma.vmem_to_smem %s152, 16, [#allocation6], [#allocation8]
        $region16: #{tpu_custom_call.1} parent=11 // pred_fallthru
          _
        // Predicated region
        $region17: #{tpu_custom_call.1} parent=11 // pred_check
          %p155 = pneg %p73
        $region18: #{tpu_custom_call.1} parent=11 // pred_check_branch
          %157 = sbr.rel (%p155) target = $region20
        $region19: #{tpu_custom_call.1} parent=11 // pred_region
          _
        $region20: #{tpu_custom_call.1} parent=11 // pred_fallthru
          _
      $region12: #{tpu_custom_call.1} parent=5 // pred_fallthru
        _
      %p158 = scmp.lt.s32.totalorder %s19, 2
      // Predicated region
      $region21: #{tpu_custom_call.1} parent=5 // pred_check
        %p159 = pneg %p158
      $region22: #{tpu_custom_call.1} parent=5 // pred_check_branch
        %161 = sbr.rel (%p159) target = $region24
      $region23: #{tpu_custom_call.1} parent=5 // pred_region
        // Predicated region
        $region25: #{tpu_custom_call.1} parent=23 // pred_check
          %p162 = pneg %p95
        $region26: #{tpu_custom_call.1} parent=23 // pred_check_branch
          %164 = sbr.rel (%p162) target = $region28
        $region27: #{tpu_custom_call.1} parent=23 // pred_region
          %s165 = smul.u32 8, %s27
          %p166 = scmp.lt.s32.totalorder %s165, 15
          %s167 = scalar_select %p166, %s165, 15
          %p168 = scmp.lt.s32.totalorder %s26, 0
          %s169 = scalar_select %p168, %s26, 0
          %s170 = smul.addr %s169, 2
          %s171 = smul.addr %s167, 2
          %s172 = sadd.s32 %s170, %s171
          %s173 = smul.addr %s172, 8
          %s174 = scalar_lea.vmem %s2, %s173
          %s175 = smul.u32 8, %s27
        $region28: #{tpu_custom_call.1} parent=23 // pred_fallthru
          _
      $region24: #{tpu_custom_call.1} parent=5 // pred_fallthru
        _
      %p176 = scmp.le.s32.totalorder 1, %s19
      %p177 = scmp.lt.s32.totalorder %s19, 3
      %p178 = pnand %p176, %p177
      %p179 = pneg %p178
      // Predicated region
      $region29: #{tpu_custom_call.1} parent=5 // pred_check
        _
      $region30: #{tpu_custom_call.1} parent=5 // pred_check_branch
        %181 = sbr.rel (%p178) target = $region32
      $region31: #{tpu_custom_call.1} parent=5 // pred_region
        %s182 = ssub.s32 %s19, 1
        // Predicated region
        $region33: #{tpu_custom_call.1} parent=31 // pred_check
          %p183 = pneg %p52
        $region34: #{tpu_custom_call.1} parent=31 // pred_check_branch
          %185 = sbr.rel (%p183) target = $region36
        $region35: #{tpu_custom_call.1} parent=31 // pred_region
          %186 = dma.done [#allocation8], 16
        $region36: #{tpu_custom_call.1} parent=31 // pred_fallthru
          _
        %187 = sfence
        %p188 = pneg %p52
        %p189 = pneg %p49
        %p190 = pneg %p73
        %p191 = pneg %p70
        %s192 = smul.u32 8, %s29
        %p193 = scmp.lt.s32.totalorder %s192, 15
        %s194 = scalar_select %p193, %s192, 15
        %p195 = scmp.lt.s32.totalorder %s28, 0
        %s196 = scalar_select %p195, %s28, 0
        %s197 = smul.addr %s196, 2
        %s198 = smul.addr %s194, 2
        %s199 = sadd.s32 %s197, %s198
        %s200 = smul.addr %s199, 8
        %s201 = scalar_lea.vmem %s2, %s200
        %p202 = pneg %p101
        %p203 = pneg %p98
        %p204 = pneg %p129
        %p205 = pneg %p126
        %s206 = sand.u32 %s116, 1
        %s207 = scalar_lea.sflag [#allocation7], %s206
        %s208 = sand.u32 %s116, 1
        %s209 = smul.addr %s208, 128
        %s210 = scalar_lea.vmem [#allocation9], %s209
        %s211 = smul.u32 8, %s29
        %p212 = scmp.lt.s32.totalorder %s211, 15
        %s213 = scalar_select %p212, %s211, 15
        %p214 = scmp.lt.s32.totalorder %s28, 0
        %s215 = scalar_select %p214, %s28, 0
        %s216 = smul.addr %s215, 2
        %s217 = smul.addr %s213, 2
        %s218 = sadd.s32 %s216, %s217
        %s219 = smul.addr %s218, 8
        %s220 = scalar_lea.vmem %s2, %s219
        %s221 = smul.u32 8, %s29
        %s222 = smul.u32 8, %s29
        %s223 = smul.u32 %s28, 8
        %p224 = scmp.eq.s32.totalorder %s29, 0
        // Predicated region
        $region37: #{tpu_custom_call.1} parent=31 // pred_check
          %p225 = pneg %p224
        $region38: #{tpu_custom_call.1} parent=31 // pred_check_branch
          %227 = sbr.rel (%p225) target = $region40
        $region39: #{tpu_custom_call.1} parent=31 // pred_region
          %s228 = sshra.s32 %s223, 3
          %s229 = sand.u32 %s223, 7
          %s230 = smul.u32 %s228, 2
          %s231 = smul.addr %s230, 128
          %s232 = scalar_lea.hbm %s3, %s231
          // Predicated region
          $region41: #{tpu_custom_call.1} parent=39 // pred_check
            _
          $region42: #{tpu_custom_call.1} parent=39 // pred_check_branch
            %234 = sbr.rel target = $region44
          $region43: #{tpu_custom_call.1} parent=39 // pred_region
            %235 = sst [smem:[#allocation12]] [#allocation11]
            %236 = sst [smem:[#allocation13]] [#allocation10]
          $region44: #{tpu_custom_call.1} parent=39 // pred_fallthru
            _
          %238 = shalt.err (0)
          %s240 = sshll.u32 [#allocation2], 4
          %s241 = int_to_ptr.vmem [resolvable:$true] %s240
          %243 = dma.hbm_to_vmem [thread:$0]  %s232, 2048, %s241, [#allocation4]
          %s244 = smul.addr %s230, 128
          %s245 = scalar_lea.hbm %s4, %s244
          %s246 = scalar_lea.sflag [#allocation4], 1
          // Predicated region
          $region45: #{tpu_custom_call.1} parent=39 // pred_check
            _
          $region46: #{tpu_custom_call.1} parent=39 // pred_check_branch
            %248 = sbr.rel target = $region48
          $region47: #{tpu_custom_call.1} parent=39 // pred_region
            %249 = sst [smem:[#allocation12]] [#allocation15]
            %250 = sst [smem:[#allocation13]] [#allocation14]
          $region48: #{tpu_custom_call.1} parent=39 // pred_fallthru
            _
          %252 = shalt.err (0)
          %s254 = sshll.u32 [#allocation3], 4
          %s255 = int_to_ptr.vmem [resolvable:$true] %s254
          %257 = dma.hbm_to_vmem [thread:$0]  %s245, 768, %s255, %s246
          %s258 = smul.u32 8, 8
          %s259 = smul.u32 %s258, 1
          %s260 = smul.u32 %s259, 2
          %s261 = sshll.u32 %s260, 4
          %262 = dma.done [#allocation4], %s261
          %s263 = smul.u32 8, 3
          %s264 = smul.u32 %s263, 1
          %s265 = smul.u32 %s264, 2
          %s266 = sshll.u32 %s265, 4
          %267 = dma.done %s246, %s266
        $region40: #{tpu_custom_call.1} parent=31 // pred_fallthru
          _
        %s268 = sld [smem:[#allocation5]]
        %s269 = smul.u32 %s29, 8
        %s270 = sadd.s32 %s268, %s269
        %p271 = scmp.lt.s32.totalorder %s270, 0
        %s272 = ssub.s32 0, %s270
        %s273 = scalar_select %p271, %s272, %s270
        %s274 = sand.u32 %s273, 7
        %s275 = ssub.s32 0, %s274
        %s276 = scalar_select %p271, %s275, %s274
        %p277 = scmp.ne.s32.totalorder %s276, 0
        %p278 = scmp.lt.s32.totalorder %s276, 0
        %p279 = pnand %p278, %p277
        %p280 = pneg %p279
        %s281 = sadd.s32 %s276, 8
        %s282 = scalar_select %p280, %s281, %s276
        %p283 = scmp.lt.s32.totalorder %s270, 0
        %s284 = ssub.s32 0, %s270
        %s285 = scalar_select %p283, %s284, %s270
        %s286 = sdiv.u32.pop %s285, 3
        %s287 = srem.u32.pop %s285, 3
        %s288 = ssub.s32 0, %s287
        %s289 = scalar_select %p283, %s288, %s287
        %p290 = scmp.ne.s32.totalorder %s289, 0
        %p291 = scmp.lt.s32.totalorder %s289, 0
        %p292 = pnand %p291, %p290
        %p293 = pneg %p292
        %s294 = sadd.s32 %s289, 3
        %s295 = scalar_select %p293, %s294, %s289
        %s296 = smul.u32 %s29, 32
        %s297 = sld [smem:[#allocation6 + %s296]]
        %s298 = sadd.s32 %s296, 1
        %s299 = sld [smem:[#allocation6 + %s298]]
        %s300 = sadd.s32 %s296, 2
        %s301 = sld [smem:[#allocation6 + %s300]]
        %s302 = sadd.s32 %s296, 3
        %s303 = sld [smem:[#allocation6 + %s302]]
        %v304 = vld [vmem:[%s220] sm:$0xff]
        %v305 = vld [vmem:[%s220 + $0x8] sm:$0xff]
        %s306 = smul.u32 %s282, 2
        %s307 = smul.addr %s306, 8
        %s308 = scalar_lea.vmem [#allocation2], %s307
        %v309 = vld [vmem:[%s308] sm:$0xff]
        %v310 = vld [vmem:[%s308 + $0x8] sm:$0xff]
        %s311 = sadd.s32 %s282, 4
        %p312 = scmp.lt.s32.totalorder %s311, 0
        %s313 = ssub.s32 0, %s311
        %s314 = scalar_select %p312, %s313, %s311
        %s315 = sand.u32 %s314, 7
        %s316 = ssub.s32 0, %s315
        %s317 = scalar_select %p312, %s316, %s315
        %p318 = scmp.ne.s32.totalorder %s317, 0
        %p319 = scmp.lt.s32.totalorder %s317, 0
        %p320 = pnand %p319, %p318
        %p321 = pneg %p320
        %s322 = sadd.s32 %s317, 8
        %s323 = scalar_select %p321, %s322, %s317
        %s324 = smul.u32 %s323, 2
        %s325 = smul.addr %s324, 8
        %s326 = scalar_lea.vmem [#allocation2], %s325
        %v327 = vld [vmem:[%s326] sm:$0xff]
        %v328 = vld [vmem:[%s326 + $0x8] sm:$0xff]
        %s329 = smul.u32 %s295, 2
        %s330 = smul.addr %s329, 8
        %s331 = scalar_lea.vmem [#allocation3], %s330
        %v332 = vld [vmem:[%s331] sm:$0xff]
        %v333 = vld [vmem:[%s331 + $0x8] sm:$0xff]
        %s334 = sadd.s32 %s295, 1
        %p335 = scmp.lt.s32.totalorder %s334, 0
        %s336 = ssub.s32 0, %s334
        %s337 = scalar_select %p335, %s336, %s334
        %s338 = sdiv.u32.pop %s337, 3
        %s339 = srem.u32.pop %s337, 3
        %s340 = ssub.s32 0, %s339
        %s341 = scalar_select %p335, %s340, %s339
        %p342 = scmp.ne.s32.totalorder %s341, 0
        %p343 = scmp.lt.s32.totalorder %s341, 0
        %p344 = pnand %p343, %p342
        %p345 = pneg %p344
        %s346 = sadd.s32 %s341, 3
        %s347 = scalar_select %p345, %s346, %s341
        %s348 = smul.u32 %s347, 2
        %s349 = smul.addr %s348, 8
        %s350 = scalar_lea.vmem [#allocation3], %s349
        %v351 = vld [vmem:[%s350] sm:$0xff]
        %v352 = vld [vmem:[%s350 + $0x8] sm:$0xff]
        %s353 = sadd.s32 %s295, 2
        %p354 = scmp.lt.s32.totalorder %s353, 0
        %s355 = ssub.s32 0, %s353
        %s356 = scalar_select %p354, %s355, %s353
        %s357 = sdiv.u32.pop %s356, 3
        %s358 = srem.u32.pop %s356, 3
        %s359 = ssub.s32 0, %s358
        %s360 = scalar_select %p354, %s359, %s358
        %p361 = scmp.ne.s32.totalorder %s360, 0
        %p362 = scmp.lt.s32.totalorder %s360, 0
        %p363 = pnand %p362, %p361
        %p364 = pneg %p363
        %s365 = sadd.s32 %s360, 3
        %s366 = scalar_select %p364, %s365, %s360
        %s367 = smul.u32 %s366, 2
        %s368 = smul.addr %s367, 8
        %s369 = scalar_lea.vmem [#allocation3], %s368
        %v370 = vld [vmem:[%s369] sm:$0xff]
        %v371 = vld [vmem:[%s369 + $0x8] sm:$0xff]
        %v372 = vmul.f32 %v304, %v327
        %v373 = vmul.f32 %v305, %v328
        %v374 = vstv %s297
        %v375 = vmul.f32 %v374, %v372
        %v376 = vmul.f32 %v374, %v373
        %v377 = vsub.f32 1.0, %v375
        %v378 = vsub.f32 1.0, %v376
        %v379 = vstv %s299
        %v380 = vmul.f32 %v379, %v370
        %v381 = vmul.f32 %v379, %v371
        %v382 = vmul.f32 %v377, %v380
        %v383 = vmul.f32 %v378, %v381
        %v384 = vsub.f32 1.0, %v382
        %v385 = vsub.f32 1.0, %v383
        %v386 = vstv %s301
        %v387 = vmul.f32 %v386, %v351
        %v388 = vmul.f32 %v386, %v352
        %v389 = vmul.f32 %v384, %v387
        %v390 = vmul.f32 %v385, %v388
        %v391 = vsub.f32 1.0, %v389
        %v392 = vsub.f32 1.0, %v390
        %v393 = vstv %s303
        %v394 = vmul.f32 %v393, %v332
        %v395 = vmul.f32 %v393, %v333
        %v396 = vmul.f32 %v391, %v394
        %v397 = vmul.f32 %v392, %v395
        %v398 = vsub.f32 1.0, %v396
        %v399 = vsub.f32 1.0, %v397
        %v400 = vmul.f32 %v398, %v309
        %v401 = vmul.f32 %v399, %v310
        %402 = vst [vmem:[%s210] sm:$0xff] %v400
        %403 = vst [vmem:[%s210 + $0x8] sm:$0xff] %v401
        %404 = vst [vmem:[%s308] sm:$0xff] %v304
        %405 = vst [vmem:[%s308 + $0x8] sm:$0xff] %v305
        %406 = vst [vmem:[%s331] sm:$0xff] %v372
        %407 = vst [vmem:[%s331 + $0x8] sm:$0xff] %v373
        %s408 = sadd.s32 %s269, 1
        %s409 = sadd.s32 %s270, 1
        %p410 = scmp.lt.s32.totalorder %s409, 0
        %s411 = ssub.s32 0, %s409
        %s412 = scalar_select %p410, %s411, %s409
        %s413 = sand.u32 %s412, 7
        %s414 = ssub.s32 0, %s413
        %s415 = scalar_select %p410, %s414, %s413
        %p416 = scmp.ne.s32.totalorder %s415, 0
        %p417 = scmp.lt.s32.totalorder %s415, 0
        %p418 = pnand %p417, %p416
        %p419 = pneg %p418
        %s420 = sadd.s32 %s415, 8
        %s421 = scalar_select %p419, %s420, %s415
        %p422 = scmp.lt.s32.totalorder %s409, 0
        %s423 = ssub.s32 0, %s409
        %s424 = scalar_select %p422, %s423, %s409
        %s425 = sdiv.u32.pop %s424, 3
        %s426 = srem.u32.pop %s424, 3
        %s427 = ssub.s32 0, %s426
        %s428 = scalar_select %p422, %s427, %s426
        %p429 = scmp.ne.s32.totalorder %s428, 0
        %p430 = scmp.lt.s32.totalorder %s428, 0
        %p431 = pnand %p430, %p429
        %p432 = pneg %p431
        %s433 = sadd.s32 %s428, 3
        %s434 = scalar_select %p432, %s433, %s428
        %s435 = smul.u32 %s408, 4
        %s436 = sld [smem:[#allocation6 + %s435]]
        %s437 = sadd.s32 %s435, 1
        %s438 = sld [smem:[#allocation6 + %s437]]
        %s439 = sadd.s32 %s435, 2
        %s440 = sld [smem:[#allocation6 + %s439]]
        %s441 = sadd.s32 %s435, 3
        %s442 = sld [smem:[#allocation6 + %s441]]
        %s443 = scalar_lea.vmem %s220, 16
        %v444 = vld [vmem:[%s443] sm:$0xff]
        %v445 = vld [vmem:[%s443 + $0x8] sm:$0xff]
        %s446 = smul.u32 %s421, 2
        %s447 = smul.addr %s446, 8
        %s448 = scalar_lea.vmem [#allocation2], %s447
        %v449 = vld [vmem:[%s448] sm:$0xff]
        %v450 = vld [vmem:[%s448 + $0x8] sm:$0xff]
        %s451 = sadd.s32 %s421, 4
        %p452 = scmp.lt.s32.totalorder %s451, 0
        %s453 = ssub.s32 0, %s451
        %s454 = scalar_select %p452, %s453, %s451
        %s455 = sand.u32 %s454, 7
        %s456 = ssub.s32 0, %s455
        %s457 = scalar_select %p452, %s456, %s455
        %p458 = scmp.ne.s32.totalorder %s457, 0
        %p459 = scmp.lt.s32.totalorder %s457, 0
        %p460 = pnand %p459, %p458
        %p461 = pneg %p460
        %s462 = sadd.s32 %s457, 8
        %s463 = scalar_select %p461, %s462, %s457
        %s464 = smul.u32 %s463, 2
        %s465 = smul.addr %s464, 8
        %s466 = scalar_lea.vmem [#allocation2], %s465
        %v467 = vld [vmem:[%s466] sm:$0xff]
        %v468 = vld [vmem:[%s466 + $0x8] sm:$0xff]
        %s469 = smul.u32 %s434, 2
        %s470 = smul.addr %s469, 8
        %s471 = scalar_lea.vmem [#allocation3], %s470
        %v472 = vld [vmem:[%s471] sm:$0xff]
        %v473 = vld [vmem:[%s471 + $0x8] sm:$0xff]
        %s474 = sadd.s32 %s434, 1
        %p475 = scmp.lt.s32.totalorder %s474, 0
        %s476 = ssub.s32 0, %s474
        %s477 = scalar_select %p475, %s476, %s474
        %s478 = sdiv.u32.pop %s477, 3
        %s479 = srem.u32.pop %s477, 3
        %s480 = ssub.s32 0, %s479
        %s481 = scalar_select %p475, %s480, %s479
        %p482 = scmp.ne.s32.totalorder %s481, 0
        %p483 = scmp.lt.s32.totalorder %s481, 0
        %p484 = pnand %p483, %p482
        %p485 = pneg %p484
        %s486 = sadd.s32 %s481, 3
        %s487 = scalar_select %p485, %s486, %s481
        %s488 = smul.u32 %s487, 2
        %s489 = smul.addr %s488, 8
        %s490 = scalar_lea.vmem [#allocation3], %s489
        %v491 = vld [vmem:[%s490] sm:$0xff]
        %v492 = vld [vmem:[%s490 + $0x8] sm:$0xff]
        %s493 = sadd.s32 %s434, 2
        %p494 = scmp.lt.s32.totalorder %s493, 0
        %s495 = ssub.s32 0, %s493
        %s496 = scalar_select %p494, %s495, %s493
        %s497 = sdiv.u32.pop %s496, 3
        %s498 = srem.u32.pop %s496, 3
        %s499 = ssub.s32 0, %s498
        %s500 = scalar_select %p494, %s499, %s498
        %p501 = scmp.ne.s32.totalorder %s500, 0
        %p502 = scmp.lt.s32.totalorder %s500, 0
        %p503 = pnand %p502, %p501
        %p504 = pneg %p503
        %s505 = sadd.s32 %s500, 3
        %s506 = scalar_select %p504, %s505, %s500
        %s507 = smul.u32 %s506, 2
        %s508 = smul.addr %s507, 8
        %s509 = scalar_lea.vmem [#allocation3], %s508
        %v510 = vld [vmem:[%s509] sm:$0xff]
        %v511 = vld [vmem:[%s509 + $0x8] sm:$0xff]
        %v512 = vmul.f32 %v444, %v467
        %v513 = vmul.f32 %v445, %v468
        %v514 = vstv %s436
        %v515 = vmul.f32 %v514, %v512
        %v516 = vmul.f32 %v514, %v513
        %v517 = vsub.f32 1.0, %v515
        %v518 = vsub.f32 1.0, %v516
        %v519 = vstv %s438
        %v520 = vmul.f32 %v519, %v510
        %v521 = vmul.f32 %v519, %v511
        %v522 = vmul.f32 %v517, %v520
        %v523 = vmul.f32 %v518, %v521
        %v524 = vsub.f32 1.0, %v522
        %v525 = vsub.f32 1.0, %v523
        %v526 = vstv %s440
        %v527 = vmul.f32 %v526, %v491
        %v528 = vmul.f32 %v526, %v492
        %v529 = vmul.f32 %v524, %v527
        %v530 = vmul.f32 %v525, %v528
        %v531 = vsub.f32 1.0, %v529
        %v532 = vsub.f32 1.0, %v530
        %v533 = vstv %s442
        %v534 = vmul.f32 %v533, %v472
        %v535 = vmul.f32 %v533, %v473
        %v536 = vmul.f32 %v531, %v534
        %v537 = vmul.f32 %v532, %v535
        %v538 = vsub.f32 1.0, %v536
        %v539 = vsub.f32 1.0, %v537
        %v540 = vmul.f32 %v538, %v449
        %v541 = vmul.f32 %v539, %v450
        %s542 = scalar_lea.vmem %s210, 16 [#allocation9]
        %543 = vst [vmem:[%s542] sm:$0xff] %v540
        %544 = vst [vmem:[%s542 + $0x8] sm:$0xff] %v541
        %545 = vst [vmem:[%s448] sm:$0xff] %v444
        %546 = vst [vmem:[%s448 + $0x8] sm:$0xff] %v445
        %547 = vst [vmem:[%s471] sm:$0xff] %v512
        %548 = vst [vmem:[%s471 + $0x8] sm:$0xff] %v513
        %s549 = sadd.s32 %s269, 2
        %s550 = sadd.s32 %s270, 2
        %p551 = scmp.lt.s32.totalorder %s550, 0
        %s552 = ssub.s32 0, %s550
        %s553 = scalar_select %p551, %s552, %s550
        %s554 = sand.u32 %s553, 7
        %s555 = ssub.s32 0, %s554
        %s556 = scalar_select %p551, %s555, %s554
        %p557 = scmp.ne.s32.totalorder %s556, 0
        %p558 = scmp.lt.s32.totalorder %s556, 0
        %p559 = pnand %p558, %p557
        %p560 = pneg %p559
        %s561 = sadd.s32 %s556, 8
        %s562 = scalar_select %p560, %s561, %s556
        %p563 = scmp.lt.s32.totalorder %s550, 0
        %s564 = ssub.s32 0, %s550
        %s565 = scalar_select %p563, %s564, %s550
        %s566 = sdiv.u32.pop %s565, 3
        %s567 = srem.u32.pop %s565, 3
        %s568 = ssub.s32 0, %s567
        %s569 = scalar_select %p563, %s568, %s567
        %p570 = scmp.ne.s32.totalorder %s569, 0
        %p571 = scmp.lt.s32.totalorder %s569, 0
        %p572 = pnand %p571, %p570
        %p573 = pneg %p572
        %s574 = sadd.s32 %s569, 3
        %s575 = scalar_select %p573, %s574, %s569
        %s576 = smul.u32 %s549, 4
        %s577 = sld [smem:[#allocation6 + %s576]]
        %s578 = sadd.s32 %s576, 1
        %s579 = sld [smem:[#allocation6 + %s578]]
        %s580 = sadd.s32 %s576, 2
        %s581 = sld [smem:[#allocation6 + %s580]]
        %s582 = sadd.s32 %s576, 3
        %s583 = sld [smem:[#allocation6 + %s582]]
        %s584 = scalar_lea.vmem %s220, 32
        %v585 = vld [vmem:[%s584] sm:$0xff]
        %v586 = vld [vmem:[%s584 + $0x8] sm:$0xff]
        %s587 = smul.u32 %s562, 2
        %s588 = smul.addr %s587, 8
        %s589 = scalar_lea.vmem [#allocation2], %s588
        %v590 = vld [vmem:[%s589] sm:$0xff]
        %v591 = vld [vmem:[%s589 + $0x8] sm:$0xff]
        %s592 = sadd.s32 %s562, 4
        %p593 = scmp.lt.s32.totalorder %s592, 0
        %s594 = ssub.s32 0, %s592
        %s595 = scalar_select %p593, %s594, %s592
        %s596 = sand.u32 %s595, 7
        %s597 = ssub.s32 0, %s596
        %s598 = scalar_select %p593, %s597, %s596
        %p599 = scmp.ne.s32.totalorder %s598, 0
        %p600 = scmp.lt.s32.totalorder %s598, 0
        %p601 = pnand %p600, %p599
        %p602 = pneg %p601
        %s603 = sadd.s32 %s598, 8
        %s604 = scalar_select %p602, %s603, %s598
        %s605 = smul.u32 %s604, 2
        %s606 = smul.addr %s605, 8
        %s607 = scalar_lea.vmem [#allocation2], %s606
        %v608 = vld [vmem:[%s607] sm:$0xff]
        %v609 = vld [vmem:[%s607 + $0x8] sm:$0xff]
        %s610 = smul.u32 %s575, 2
        %s611 = smul.addr %s610, 8
        %s612 = scalar_lea.vmem [#allocation3], %s611
        %v613 = vld [vmem:[%s612] sm:$0xff]
        %v614 = vld [vmem:[%s612 + $0x8] sm:$0xff]
        %s615 = sadd.s32 %s575, 1
        %p616 = scmp.lt.s32.totalorder %s615, 0
        %s617 = ssub.s32 0, %s615
        %s618 = scalar_select %p616, %s617, %s615
        %s619 = sdiv.u32.pop %s618, 3
        %s620 = srem.u32.pop %s618, 3
        %s621 = ssub.s32 0, %s620
        %s622 = scalar_select %p616, %s621, %s620
        %p623 = scmp.ne.s32.totalorder %s622, 0
        %p624 = scmp.lt.s32.totalorder %s622, 0
        %p625 = pnand %p624, %p623
        %p626 = pneg %p625
        %s627 = sadd.s32 %s622, 3
        %s628 = scalar_select %p626, %s627, %s622
        %s629 = smul.u32 %s628, 2
        %s630 = smul.addr %s629, 8
        %s631 = scalar_lea.vmem [#allocation3], %s630
        %v632 = vld [vmem:[%s631] sm:$0xff]
        %v633 = vld [vmem:[%s631 + $0x8] sm:$0xff]
        %s634 = sadd.s32 %s575, 2
        %p635 = scmp.lt.s32.totalorder %s634, 0
        %s636 = ssub.s32 0, %s634
        %s637 = scalar_select %p635, %s636, %s634
        %s638 = sdiv.u32.pop %s637, 3
        %s639 = srem.u32.pop %s637, 3
        %s640 = ssub.s32 0, %s639
        %s641 = scalar_select %p635, %s640, %s639
        %p642 = scmp.ne.s32.totalorder %s641, 0
        %p643 = scmp.lt.s32.totalorder %s641, 0
        %p644 = pnand %p643, %p642
        %p645 = pneg %p644
        %s646 = sadd.s32 %s641, 3
        %s647 = scalar_select %p645, %s646, %s641
        %s648 = smul.u32 %s647, 2
        %s649 = smul.addr %s648, 8
        %s650 = scalar_lea.vmem [#allocation3], %s649
        %v651 = vld [vmem:[%s650] sm:$0xff]
        %v652 = vld [vmem:[%s650 + $0x8] sm:$0xff]
        %v653 = vmul.f32 %v585, %v608
        %v654 = vmul.f32 %v586, %v609
        %v655 = vstv %s577
        %v656 = vmul.f32 %v655, %v653
        %v657 = vmul.f32 %v655, %v654
        %v658 = vsub.f32 1.0, %v656
        %v659 = vsub.f32 1.0, %v657
        %v660 = vstv %s579
        %v661 = vmul.f32 %v660, %v651
        %v662 = vmul.f32 %v660, %v652
        %v663 = vmul.f32 %v658, %v661
        %v664 = vmul.f32 %v659, %v662
        %v665 = vsub.f32 1.0, %v663
        %v666 = vsub.f32 1.0, %v664
        %v667 = vstv %s581
        %v668 = vmul.f32 %v667, %v632
        %v669 = vmul.f32 %v667, %v633
        %v670 = vmul.f32 %v665, %v668
        %v671 = vmul.f32 %v666, %v669
        %v672 = vsub.f32 1.0, %v670
        %v673 = vsub.f32 1.0, %v671
        %v674 = vstv %s583
        %v675 = vmul.f32 %v674, %v613
        %v676 = vmul.f32 %v674, %v614
        %v677 = vmul.f32 %v672, %v675
        %v678 = vmul.f32 %v673, %v676
        %v679 = vsub.f32 1.0, %v677
        %v680 = vsub.f32 1.0, %v678
        %v681 = vmul.f32 %v679, %v590
        %v682 = vmul.f32 %v680, %v591
        %s683 = scalar_lea.vmem %s210, 32 [#allocation9]
        %684 = vst [vmem:[%s683] sm:$0xff] %v681
        %685 = vst [vmem:[%s683 + $0x8] sm:$0xff] %v682
        %686 = vst [vmem:[%s589] sm:$0xff] %v585
        %687 = vst [vmem:[%s589 + $0x8] sm:$0xff] %v586
        %688 = vst [vmem:[%s612] sm:$0xff] %v653
        %689 = vst [vmem:[%s612 + $0x8] sm:$0xff] %v654
        %s690 = sadd.s32 %s269, 3
        %s691 = sadd.s32 %s270, 3
        %p692 = scmp.lt.s32.totalorder %s691, 0
        %s693 = ssub.s32 0, %s691
        %s694 = scalar_select %p692, %s693, %s691
        %s695 = sand.u32 %s694, 7
        %s696 = ssub.s32 0, %s695
        %s697 = scalar_select %p692, %s696, %s695
        %p698 = scmp.ne.s32.totalorder %s697, 0
        %p699 = scmp.lt.s32.totalorder %s697, 0
        %p700 = pnand %p699, %p698
        %p701 = pneg %p700
        %s702 = sadd.s32 %s697, 8
        %s703 = scalar_select %p701, %s702, %s697
        %p704 = scmp.lt.s32.totalorder %s691, 0
        %s705 = ssub.s32 0, %s691
        %s706 = scalar_select %p704, %s705, %s691
        %s707 = sdiv.u32.pop %s706, 3
        %s708 = srem.u32.pop %s706, 3
        %s709 = ssub.s32 0, %s708
        %s710 = scalar_select %p704, %s709, %s708
        %p711 = scmp.ne.s32.totalorder %s710, 0
        %p712 = scmp.lt.s32.totalorder %s710, 0
        %p713 = pnand %p712, %p711
        %p714 = pneg %p713
        %s715 = sadd.s32 %s710, 3
        %s716 = scalar_select %p714, %s715, %s710
        %s717 = smul.u32 %s690, 4
        %s718 = sld [smem:[#allocation6 + %s717]]
        %s719 = sadd.s32 %s717, 1
        %s720 = sld [smem:[#allocation6 + %s719]]
        %s721 = sadd.s32 %s717, 2
        %s722 = sld [smem:[#allocation6 + %s721]]
        %s723 = sadd.s32 %s717, 3
        %s724 = sld [smem:[#allocation6 + %s723]]
        %s725 = scalar_lea.vmem %s220, 48
        %v726 = vld [vmem:[%s725] sm:$0xff]
        %v727 = vld [vmem:[%s725 + $0x8] sm:$0xff]
        %s728 = smul.u32 %s703, 2
        %s729 = smul.addr %s728, 8
        %s730 = scalar_lea.vmem [#allocation2], %s729
        %v731 = vld [vmem:[%s730] sm:$0xff]
        %v732 = vld [vmem:[%s730 + $0x8] sm:$0xff]
        %s733 = sadd.s32 %s703, 4
        %p734 = scmp.lt.s32.totalorder %s733, 0
        %s735 = ssub.s32 0, %s733
        %s736 = scalar_select %p734, %s735, %s733
        %s737 = sand.u32 %s736, 7
        %s738 = ssub.s32 0, %s737
        %s739 = scalar_select %p734, %s738, %s737
        %p740 = scmp.ne.s32.totalorder %s739, 0
        %p741 = scmp.lt.s32.totalorder %s739, 0
        %p742 = pnand %p741, %p740
        %p743 = pneg %p742
        %s744 = sadd.s32 %s739, 8
        %s745 = scalar_select %p743, %s744, %s739
        %s746 = smul.u32 %s745, 2
        %s747 = smul.addr %s746, 8
        %s748 = scalar_lea.vmem [#allocation2], %s747
        %v749 = vld [vmem:[%s748] sm:$0xff]
        %v750 = vld [vmem:[%s748 + $0x8] sm:$0xff]
        %s751 = smul.u32 %s716, 2
        %s752 = smul.addr %s751, 8
        %s753 = scalar_lea.vmem [#allocation3], %s752
        %v754 = vld [vmem:[%s753] sm:$0xff]
        %v755 = vld [vmem:[%s753 + $0x8] sm:$0xff]
        %s756 = sadd.s32 %s716, 1
        %p757 = scmp.lt.s32.totalorder %s756, 0
        %s758 = ssub.s32 0, %s756
        %s759 = scalar_select %p757, %s758, %s756
        %s760 = sdiv.u32.pop %s759, 3
        %s761 = srem.u32.pop %s759, 3
        %s762 = ssub.s32 0, %s761
        %s763 = scalar_select %p757, %s762, %s761
        %p764 = scmp.ne.s32.totalorder %s763, 0
        %p765 = scmp.lt.s32.totalorder %s763, 0
        %p766 = pnand %p765, %p764
        %p767 = pneg %p766
        %s768 = sadd.s32 %s763, 3
        %s769 = scalar_select %p767, %s768, %s763
        %s770 = smul.u32 %s769, 2
        %s771 = smul.addr %s770, 8
        %s772 = scalar_lea.vmem [#allocation3], %s771
        %v773 = vld [vmem:[%s772] sm:$0xff]
        %v774 = vld [vmem:[%s772 + $0x8] sm:$0xff]
        %s775 = sadd.s32 %s716, 2
        %p776 = scmp.lt.s32.totalorder %s775, 0
        %s777 = ssub.s32 0, %s775
        %s778 = scalar_select %p776, %s777, %s775
        %s779 = sdiv.u32.pop %s778, 3
        %s780 = srem.u32.pop %s778, 3
        %s781 = ssub.s32 0, %s780
        %s782 = scalar_select %p776, %s781, %s780
        %p783 = scmp.ne.s32.totalorder %s782, 0
        %p784 = scmp.lt.s32.totalorder %s782, 0
        %p785 = pnand %p784, %p783
        %p786 = pneg %p785
        %s787 = sadd.s32 %s782, 3
        %s788 = scalar_select %p786, %s787, %s782
        %s789 = smul.u32 %s788, 2
        %s790 = smul.addr %s789, 8
        %s791 = scalar_lea.vmem [#allocation3], %s790
        %v792 = vld [vmem:[%s791] sm:$0xff]
        %v793 = vld [vmem:[%s791 + $0x8] sm:$0xff]
        %v794 = vmul.f32 %v726, %v749
        %v795 = vmul.f32 %v727, %v750
        %v796 = vstv %s718
        %v797 = vmul.f32 %v796, %v794
        %v798 = vmul.f32 %v796, %v795
        %v799 = vsub.f32 1.0, %v797
        %v800 = vsub.f32 1.0, %v798
        %v801 = vstv %s720
        %v802 = vmul.f32 %v801, %v792
        %v803 = vmul.f32 %v801, %v793
        %v804 = vmul.f32 %v799, %v802
        %v805 = vmul.f32 %v800, %v803
        %v806 = vsub.f32 1.0, %v804
        %v807 = vsub.f32 1.0, %v805
        %v808 = vstv %s722
        %v809 = vmul.f32 %v808, %v773
        %v810 = vmul.f32 %v808, %v774
        %v811 = vmul.f32 %v806, %v809
        %v812 = vmul.f32 %v807, %v810
        %v813 = vsub.f32 1.0, %v811
        %v814 = vsub.f32 1.0, %v812
        %v815 = vstv %s724
        %v816 = vmul.f32 %v815, %v754
        %v817 = vmul.f32 %v815, %v755
        %v818 = vmul.f32 %v813, %v816
        %v819 = vmul.f32 %v814, %v817
        %v820 = vsub.f32 1.0, %v818
        %v821 = vsub.f32 1.0, %v819
        %v822 = vmul.f32 %v820, %v731
        %v823 = vmul.f32 %v821, %v732
        %s824 = scalar_lea.vmem %s210, 48 [#allocation9]
        %825 = vst [vmem:[%s824] sm:$0xff] %v822
        %826 = vst [vmem:[%s824 + $0x8] sm:$0xff] %v823
        %827 = vst [vmem:[%s730] sm:$0xff] %v726
        %828 = vst [vmem:[%s730 + $0x8] sm:$0xff] %v727
        %829 = vst [vmem:[%s753] sm:$0xff] %v794
        %830 = vst [vmem:[%s753 + $0x8] sm:$0xff] %v795
        %s831 = sadd.s32 %s269, 4
        %s832 = sadd.s32 %s270, 4
        %p833 = scmp.lt.s32.totalorder %s832, 0
        %s834 = ssub.s32 0, %s832
        %s835 = scalar_select %p833, %s834, %s832
        %s836 = sand.u32 %s835, 7
        %s837 = ssub.s32 0, %s836
        %s838 = scalar_select %p833, %s837, %s836
        %p839 = scmp.ne.s32.totalorder %s838, 0
        %p840 = scmp.lt.s32.totalorder %s838, 0
        %p841 = pnand %p840, %p839
        %p842 = pneg %p841
        %s843 = sadd.s32 %s838, 8
        %s844 = scalar_select %p842, %s843, %s838
        %p845 = scmp.lt.s32.totalorder %s832, 0
        %s846 = ssub.s32 0, %s832
        %s847 = scalar_select %p845, %s846, %s832
        %s848 = sdiv.u32.pop %s847, 3
        %s849 = srem.u32.pop %s847, 3
        %s850 = ssub.s32 0, %s849
        %s851 = scalar_select %p845, %s850, %s849
        %p852 = scmp.ne.s32.totalorder %s851, 0
        %p853 = scmp.lt.s32.totalorder %s851, 0
        %p854 = pnand %p853, %p852
        %p855 = pneg %p854
        %s856 = sadd.s32 %s851, 3
        %s857 = scalar_select %p855, %s856, %s851
        %s858 = smul.u32 %s831, 4
        %s859 = sld [smem:[#allocation6 + %s858]]
        %s860 = sadd.s32 %s858, 1
        %s861 = sld [smem:[#allocation6 + %s860]]
        %s862 = sadd.s32 %s858, 2
        %s863 = sld [smem:[#allocation6 + %s862]]
        %s864 = sadd.s32 %s858, 3
        %s865 = sld [smem:[#allocation6 + %s864]]
        %s866 = scalar_lea.vmem %s220, 64
        %v867 = vld [vmem:[%s866] sm:$0xff]
        %v868 = vld [vmem:[%s866 + $0x8] sm:$0xff]
        %s869 = smul.u32 %s844, 2
        %s870 = smul.addr %s869, 8
        %s871 = scalar_lea.vmem [#allocation2], %s870
        %v872 = vld [vmem:[%s871] sm:$0xff]
        %v873 = vld [vmem:[%s871 + $0x8] sm:$0xff]
        %s874 = sadd.s32 %s844, 4
        %p875 = scmp.lt.s32.totalorder %s874, 0
        %s876 = ssub.s32 0, %s874
        %s877 = scalar_select %p875, %s876, %s874
        %s878 = sand.u32 %s877, 7
        %s879 = ssub.s32 0, %s878
        %s880 = scalar_select %p875, %s879, %s878
        %p881 = scmp.ne.s32.totalorder %s880, 0
        %p882 = scmp.lt.s32.totalorder %s880, 0
        %p883 = pnand %p882, %p881
        %p884 = pneg %p883
        %s885 = sadd.s32 %s880, 8
        %s886 = scalar_select %p884, %s885, %s880
        %s887 = smul.u32 %s886, 2
        %s888 = smul.addr %s887, 8
        %s889 = scalar_lea.vmem [#allocation2], %s888
        %v890 = vld [vmem:[%s889] sm:$0xff]
        %v891 = vld [vmem:[%s889 + $0x8] sm:$0xff]
        %s892 = smul.u32 %s857, 2
        %s893 = smul.addr %s892, 8
        %s894 = scalar_lea.vmem [#allocation3], %s893
        %v895 = vld [vmem:[%s894] sm:$0xff]
        %v896 = vld [vmem:[%s894 + $0x8] sm:$0xff]
        %s897 = sadd.s32 %s857, 1
        %p898 = scmp.lt.s32.totalorder %s897, 0
        %s899 = ssub.s32 0, %s897
        %s900 = scalar_select %p898, %s899, %s897
        %s901 = sdiv.u32.pop %s900, 3
        %s902 = srem.u32.pop %s900, 3
        %s903 = ssub.s32 0, %s902
        %s904 = scalar_select %p898, %s903, %s902
        %p905 = scmp.ne.s32.totalorder %s904, 0
        %p906 = scmp.lt.s32.totalorder %s904, 0
        %p907 = pnand %p906, %p905
        %p908 = pneg %p907
        %s909 = sadd.s32 %s904, 3
        %s910 = scalar_select %p908, %s909, %s904
        %s911 = smul.u32 %s910, 2
        %s912 = smul.addr %s911, 8
        %s913 = scalar_lea.vmem [#allocation3], %s912
        %v914 = vld [vmem:[%s913] sm:$0xff]
        %v915 = vld [vmem:[%s913 + $0x8] sm:$0xff]
        %s916 = sadd.s32 %s857, 2
        %p917 = scmp.lt.s32.totalorder %s916, 0
        %s918 = ssub.s32 0, %s916
        %s919 = scalar_select %p917, %s918, %s916
        %s920 = sdiv.u32.pop %s919, 3
        %s921 = srem.u32.pop %s919, 3
        %s922 = ssub.s32 0, %s921
        %s923 = scalar_select %p917, %s922, %s921
        %p924 = scmp.ne.s32.totalorder %s923, 0
        %p925 = scmp.lt.s32.totalorder %s923, 0
        %p926 = pnand %p925, %p924
        %p927 = pneg %p926
        %s928 = sadd.s32 %s923, 3
        %s929 = scalar_select %p927, %s928, %s923
        %s930 = smul.u32 %s929, 2
        %s931 = smul.addr %s930, 8
        %s932 = scalar_lea.vmem [#allocation3], %s931
        %v933 = vld [vmem:[%s932] sm:$0xff]
        %v934 = vld [vmem:[%s932 + $0x8] sm:$0xff]
        %v935 = vmul.f32 %v867, %v890
        %v936 = vmul.f32 %v868, %v891
        %v937 = vstv %s859
        %v938 = vmul.f32 %v937, %v935
        %v939 = vmul.f32 %v937, %v936
        %v940 = vsub.f32 1.0, %v938
        %v941 = vsub.f32 1.0, %v939
        %v942 = vstv %s861
        %v943 = vmul.f32 %v942, %v933
        %v944 = vmul.f32 %v942, %v934
        %v945 = vmul.f32 %v940, %v943
        %v946 = vmul.f32 %v941, %v944
        %v947 = vsub.f32 1.0, %v945
        %v948 = vsub.f32 1.0, %v946
        %v949 = vstv %s863
        %v950 = vmul.f32 %v949, %v914
        %v951 = vmul.f32 %v949, %v915
        %v952 = vmul.f32 %v947, %v950
        %v953 = vmul.f32 %v948, %v951
        %v954 = vsub.f32 1.0, %v952
        %v955 = vsub.f32 1.0, %v953
        %v956 = vstv %s865
        %v957 = vmul.f32 %v956, %v895
        %v958 = vmul.f32 %v956, %v896
        %v959 = vmul.f32 %v954, %v957
        %v960 = vmul.f32 %v955, %v958
        %v961 = vsub.f32 1.0, %v959
        %v962 = vsub.f32 1.0, %v960
        %v963 = vmul.f32 %v961, %v872
        %v964 = vmul.f32 %v962, %v873
        %s965 = scalar_lea.vmem %s210, 64 [#allocation9]
        %966 = vst [vmem:[%s965] sm:$0xff] %v963
        %967 = vst [vmem:[%s965 + $0x8] sm:$0xff] %v964
        %968 = vst [vmem:[%s871] sm:$0xff] %v867
        %969 = vst [vmem:[%s871 + $0x8] sm:$0xff] %v868
        %970 = vst [vmem:[%s894] sm:$0xff] %v935
        %971 = vst [vmem:[%s894 + $0x8] sm:$0xff] %v936
        %s972 = sadd.s32 %s269, 5
        %s973 = sadd.s32 %s270, 5
        %p974 = scmp.lt.s32.totalorder %s973, 0
        %s975 = ssub.s32 0, %s973
        %s976 = scalar_select %p974, %s975, %s973
        %s977 = sand.u32 %s976, 7
        %s978 = ssub.s32 0, %s977
        %s979 = scalar_select %p974, %s978, %s977
        %p980 = scmp.ne.s32.totalorder %s979, 0
        %p981 = scmp.lt.s32.totalorder %s979, 0
        %p982 = pnand %p981, %p980
        %p983 = pneg %p982
        %s984 = sadd.s32 %s979, 8
        %s985 = scalar_select %p983, %s984, %s979
        %p986 = scmp.lt.s32.totalorder %s973, 0
        %s987 = ssub.s32 0, %s973
        %s988 = scalar_select %p986, %s987, %s973
        %s989 = sdiv.u32.pop %s988, 3
        %s990 = srem.u32.pop %s988, 3
        %s991 = ssub.s32 0, %s990
        %s992 = scalar_select %p986, %s991, %s990
        %p993 = scmp.ne.s32.totalorder %s992, 0
        %p994 = scmp.lt.s32.totalorder %s992, 0
        %p995 = pnand %p994, %p993
        %p996 = pneg %p995
        %s997 = sadd.s32 %s992, 3
        %s998 = scalar_select %p996, %s997, %s992
        %s999 = smul.u32 %s972, 4
        %s1000 = sld [smem:[#allocation6 + %s999]]
        %s1001 = sadd.s32 %s999, 1
        %s1002 = sld [smem:[#allocation6 + %s1001]]
        %s1003 = sadd.s32 %s999, 2
        %s1004 = sld [smem:[#allocation6 + %s1003]]
        %s1005 = sadd.s32 %s999, 3
        %s1006 = sld [smem:[#allocation6 + %s1005]]
        %s1007 = scalar_lea.vmem %s220, 80
        %v1008 = vld [vmem:[%s1007] sm:$0xff]
        %v1009 = vld [vmem:[%s1007 + $0x8] sm:$0xff]
        %s1010 = smul.u32 %s985, 2
        %s1011 = smul.addr %s1010, 8
        %s1012 = scalar_lea.vmem [#allocation2], %s1011
        %v1013 = vld [vmem:[%s1012] sm:$0xff]
        %v1014 = vld [vmem:[%s1012 + $0x8] sm:$0xff]
        %s1015 = sadd.s32 %s985, 4
        %p1016 = scmp.lt.s32.totalorder %s1015, 0
        %s1017 = ssub.s32 0, %s1015
        %s1018 = scalar_select %p1016, %s1017, %s1015
        %s1019 = sand.u32 %s1018, 7
        %s1020 = ssub.s32 0, %s1019
        %s1021 = scalar_select %p1016, %s1020, %s1019
        %p1022 = scmp.ne.s32.totalorder %s1021, 0
        %p1023 = scmp.lt.s32.totalorder %s1021, 0
        %p1024 = pnand %p1023, %p1022
        %p1025 = pneg %p1024
        %s1026 = sadd.s32 %s1021, 8
        %s1027 = scalar_select %p1025, %s1026, %s1021
        %s1028 = smul.u32 %s1027, 2
        %s1029 = smul.addr %s1028, 8
        %s1030 = scalar_lea.vmem [#allocation2], %s1029
        %v1031 = vld [vmem:[%s1030] sm:$0xff]
        %v1032 = vld [vmem:[%s1030 + $0x8] sm:$0xff]
        %s1033 = smul.u32 %s998, 2
        %s1034 = smul.addr %s1033, 8
        %s1035 = scalar_lea.vmem [#allocation3], %s1034
        %v1036 = vld [vmem:[%s1035] sm:$0xff]
        %v1037 = vld [vmem:[%s1035 + $0x8] sm:$0xff]
        %s1038 = sadd.s32 %s998, 1
        %p1039 = scmp.lt.s32.totalorder %s1038, 0
        %s1040 = ssub.s32 0, %s1038
        %s1041 = scalar_select %p1039, %s1040, %s1038
        %s1042 = sdiv.u32.pop %s1041, 3
        %s1043 = srem.u32.pop %s1041, 3
        %s1044 = ssub.s32 0, %s1043
        %s1045 = scalar_select %p1039, %s1044, %s1043
        %p1046 = scmp.ne.s32.totalorder %s1045, 0
        %p1047 = scmp.lt.s32.totalorder %s1045, 0
        %p1048 = pnand %p1047, %p1046
        %p1049 = pneg %p1048
        %s1050 = sadd.s32 %s1045, 3
        %s1051 = scalar_select %p1049, %s1050, %s1045
        %s1052 = smul.u32 %s1051, 2
        %s1053 = smul.addr %s1052, 8
        %s1054 = scalar_lea.vmem [#allocation3], %s1053
        %v1055 = vld [vmem:[%s1054] sm:$0xff]
        %v1056 = vld [vmem:[%s1054 + $0x8] sm:$0xff]
        %s1057 = sadd.s32 %s998, 2
        %p1058 = scmp.lt.s32.totalorder %s1057, 0
        %s1059 = ssub.s32 0, %s1057
        %s1060 = scalar_select %p1058, %s1059, %s1057
        %s1061 = sdiv.u32.pop %s1060, 3
        %s1062 = srem.u32.pop %s1060, 3
        %s1063 = ssub.s32 0, %s1062
        %s1064 = scalar_select %p1058, %s1063, %s1062
        %p1065 = scmp.ne.s32.totalorder %s1064, 0
        %p1066 = scmp.lt.s32.totalorder %s1064, 0
        %p1067 = pnand %p1066, %p1065
        %p1068 = pneg %p1067
        %s1069 = sadd.s32 %s1064, 3
        %s1070 = scalar_select %p1068, %s1069, %s1064
        %s1071 = smul.u32 %s1070, 2
        %s1072 = smul.addr %s1071, 8
        %s1073 = scalar_lea.vmem [#allocation3], %s1072
        %v1074 = vld [vmem:[%s1073] sm:$0xff]
        %v1075 = vld [vmem:[%s1073 + $0x8] sm:$0xff]
        %v1076 = vmul.f32 %v1008, %v1031
        %v1077 = vmul.f32 %v1009, %v1032
        %v1078 = vstv %s1000
        %v1079 = vmul.f32 %v1078, %v1076
        %v1080 = vmul.f32 %v1078, %v1077
        %v1081 = vsub.f32 1.0, %v1079
        %v1082 = vsub.f32 1.0, %v1080
        %v1083 = vstv %s1002
        %v1084 = vmul.f32 %v1083, %v1074
        %v1085 = vmul.f32 %v1083, %v1075
        %v1086 = vmul.f32 %v1081, %v1084
        %v1087 = vmul.f32 %v1082, %v1085
        %v1088 = vsub.f32 1.0, %v1086
        %v1089 = vsub.f32 1.0, %v1087
        %v1090 = vstv %s1004
        %v1091 = vmul.f32 %v1090, %v1055
        %v1092 = vmul.f32 %v1090, %v1056
        %v1093 = vmul.f32 %v1088, %v1091
        %v1094 = vmul.f32 %v1089, %v1092
        %v1095 = vsub.f32 1.0, %v1093
        %v1096 = vsub.f32 1.0, %v1094
        %v1097 = vstv %s1006
        %v1098 = vmul.f32 %v1097, %v1036
        %v1099 = vmul.f32 %v1097, %v1037
        %v1100 = vmul.f32 %v1095, %v1098
        %v1101 = vmul.f32 %v1096, %v1099
        %v1102 = vsub.f32 1.0, %v1100
        %v1103 = vsub.f32 1.0, %v1101
        %v1104 = vmul.f32 %v1102, %v1013
        %v1105 = vmul.f32 %v1103, %v1014
        %s1106 = scalar_lea.vmem %s210, 80 [#allocation9]
        %1107 = vst [vmem:[%s1106] sm:$0xff] %v1104
        %1108 = vst [vmem:[%s1106 + $0x8] sm:$0xff] %v1105
        %1109 = vst [vmem:[%s1012] sm:$0xff] %v1008
        %1110 = vst [vmem:[%s1012 + $0x8] sm:$0xff] %v1009
        %1111 = vst [vmem:[%s1035] sm:$0xff] %v1076
        %1112 = vst [vmem:[%s1035 + $0x8] sm:$0xff] %v1077
        %s1113 = sadd.s32 %s269, 6
        %s1114 = sadd.s32 %s270, 6
        %p1115 = scmp.lt.s32.totalorder %s1114, 0
        %s1116 = ssub.s32 0, %s1114
        %s1117 = scalar_select %p1115, %s1116, %s1114
        %s1118 = sand.u32 %s1117, 7
        %s1119 = ssub.s32 0, %s1118
        %s1120 = scalar_select %p1115, %s1119, %s1118
        %p1121 = scmp.ne.s32.totalorder %s1120, 0
        %p1122 = scmp.lt.s32.totalorder %s1120, 0
        %p1123 = pnand %p1122, %p1121
        %p1124 = pneg %p1123
        %s1125 = sadd.s32 %s1120, 8
        %s1126 = scalar_select %p1124, %s1125, %s1120
        %p1127 = scmp.lt.s32.totalorder %s1114, 0
        %s1128 = ssub.s32 0, %s1114
        %s1129 = scalar_select %p1127, %s1128, %s1114
        %s1130 = sdiv.u32.pop %s1129, 3
        %s1131 = srem.u32.pop %s1129, 3
        %s1132 = ssub.s32 0, %s1131
        %s1133 = scalar_select %p1127, %s1132, %s1131
        %p1134 = scmp.ne.s32.totalorder %s1133, 0
        %p1135 = scmp.lt.s32.totalorder %s1133, 0
        %p1136 = pnand %p1135, %p1134
        %p1137 = pneg %p1136
        %s1138 = sadd.s32 %s1133, 3
        %s1139 = scalar_select %p1137, %s1138, %s1133
        %s1140 = smul.u32 %s1113, 4
        %s1141 = sld [smem:[#allocation6 + %s1140]]
        %s1142 = sadd.s32 %s1140, 1
        %s1143 = sld [smem:[#allocation6 + %s1142]]
        %s1144 = sadd.s32 %s1140, 2
        %s1145 = sld [smem:[#allocation6 + %s1144]]
        %s1146 = sadd.s32 %s1140, 3
        %s1147 = sld [smem:[#allocation6 + %s1146]]
        %s1148 = scalar_lea.vmem %s220, 96
        %v1149 = vld [vmem:[%s1148] sm:$0xff]
        %v1150 = vld [vmem:[%s1148 + $0x8] sm:$0xff]
        %s1151 = smul.u32 %s1126, 2
        %s1152 = smul.addr %s1151, 8
        %s1153 = scalar_lea.vmem [#allocation2], %s1152
        %v1154 = vld [vmem:[%s1153] sm:$0xff]
        %v1155 = vld [vmem:[%s1153 + $0x8] sm:$0xff]
        %s1156 = sadd.s32 %s1126, 4
        %p1157 = scmp.lt.s32.totalorder %s1156, 0
        %s1158 = ssub.s32 0, %s1156
        %s1159 = scalar_select %p1157, %s1158, %s1156
        %s1160 = sand.u32 %s1159, 7
        %s1161 = ssub.s32 0, %s1160
        %s1162 = scalar_select %p1157, %s1161, %s1160
        %p1163 = scmp.ne.s32.totalorder %s1162, 0
        %p1164 = scmp.lt.s32.totalorder %s1162, 0
        %p1165 = pnand %p1164, %p1163
        %p1166 = pneg %p1165
        %s1167 = sadd.s32 %s1162, 8
        %s1168 = scalar_select %p1166, %s1167, %s1162
        %s1169 = smul.u32 %s1168, 2
        %s1170 = smul.addr %s1169, 8
        %s1171 = scalar_lea.vmem [#allocation2], %s1170
        %v1172 = vld [vmem:[%s1171] sm:$0xff]
        %v1173 = vld [vmem:[%s1171 + $0x8] sm:$0xff]
        %s1174 = smul.u32 %s1139, 2
        %s1175 = smul.addr %s1174, 8
        %s1176 = scalar_lea.vmem [#allocation3], %s1175
        %v1177 = vld [vmem:[%s1176] sm:$0xff]
        %v1178 = vld [vmem:[%s1176 + $0x8] sm:$0xff]
        %s1179 = sadd.s32 %s1139, 1
        %p1180 = scmp.lt.s32.totalorder %s1179, 0
        %s1181 = ssub.s32 0, %s1179
        %s1182 = scalar_select %p1180, %s1181, %s1179
        %s1183 = sdiv.u32.pop %s1182, 3
        %s1184 = srem.u32.pop %s1182, 3
        %s1185 = ssub.s32 0, %s1184
        %s1186 = scalar_select %p1180, %s1185, %s1184
        %p1187 = scmp.ne.s32.totalorder %s1186, 0
        %p1188 = scmp.lt.s32.totalorder %s1186, 0
        %p1189 = pnand %p1188, %p1187
        %p1190 = pneg %p1189
        %s1191 = sadd.s32 %s1186, 3
        %s1192 = scalar_select %p1190, %s1191, %s1186
        %s1193 = smul.u32 %s1192, 2
        %s1194 = smul.addr %s1193, 8
        %s1195 = scalar_lea.vmem [#allocation3], %s1194
        %v1196 = vld [vmem:[%s1195] sm:$0xff]
        %v1197 = vld [vmem:[%s1195 + $0x8] sm:$0xff]
        %s1198 = sadd.s32 %s1139, 2
        %p1199 = scmp.lt.s32.totalorder %s1198, 0
        %s1200 = ssub.s32 0, %s1198
        %s1201 = scalar_select %p1199, %s1200, %s1198
        %s1202 = sdiv.u32.pop %s1201, 3
        %s1203 = srem.u32.pop %s1201, 3
        %s1204 = ssub.s32 0, %s1203
        %s1205 = scalar_select %p1199, %s1204, %s1203
        %p1206 = scmp.ne.s32.totalorder %s1205, 0
        %p1207 = scmp.lt.s32.totalorder %s1205, 0
        %p1208 = pnand %p1207, %p1206
        %p1209 = pneg %p1208
        %s1210 = sadd.s32 %s1205, 3
        %s1211 = scalar_select %p1209, %s1210, %s1205
        %s1212 = smul.u32 %s1211, 2
        %s1213 = smul.addr %s1212, 8
        %s1214 = scalar_lea.vmem [#allocation3], %s1213
        %v1215 = vld [vmem:[%s1214] sm:$0xff]
        %v1216 = vld [vmem:[%s1214 + $0x8] sm:$0xff]
        %v1217 = vmul.f32 %v1149, %v1172
        %v1218 = vmul.f32 %v1150, %v1173
        %v1219 = vstv %s1141
        %v1220 = vmul.f32 %v1219, %v1217
        %v1221 = vmul.f32 %v1219, %v1218
        %v1222 = vsub.f32 1.0, %v1220
        %v1223 = vsub.f32 1.0, %v1221
        %v1224 = vstv %s1143
        %v1225 = vmul.f32 %v1224, %v1215
        %v1226 = vmul.f32 %v1224, %v1216
        %v1227 = vmul.f32 %v1222, %v1225
        %v1228 = vmul.f32 %v1223, %v1226
        %v1229 = vsub.f32 1.0, %v1227
        %v1230 = vsub.f32 1.0, %v1228
        %v1231 = vstv %s1145
        %v1232 = vmul.f32 %v1231, %v1196
        %v1233 = vmul.f32 %v1231, %v1197
        %v1234 = vmul.f32 %v1229, %v1232
        %v1235 = vmul.f32 %v1230, %v1233
        %v1236 = vsub.f32 1.0, %v1234
        %v1237 = vsub.f32 1.0, %v1235
        %v1238 = vstv %s1147
        %v1239 = vmul.f32 %v1238, %v1177
        %v1240 = vmul.f32 %v1238, %v1178
        %v1241 = vmul.f32 %v1236, %v1239
        %v1242 = vmul.f32 %v1237, %v1240
        %v1243 = vsub.f32 1.0, %v1241
        %v1244 = vsub.f32 1.0, %v1242
        %v1245 = vmul.f32 %v1243, %v1154
        %v1246 = vmul.f32 %v1244, %v1155
        %s1247 = scalar_lea.vmem %s210, 96 [#allocation9]
        %1248 = vst [vmem:[%s1247] sm:$0xff] %v1245
        %1249 = vst [vmem:[%s1247 + $0x8] sm:$0xff] %v1246
        %1250 = vst [vmem:[%s1153] sm:$0xff] %v1149
        %1251 = vst [vmem:[%s1153 + $0x8] sm:$0xff] %v1150
        %1252 = vst [vmem:[%s1176] sm:$0xff] %v1217
        %1253 = vst [vmem:[%s1176 + $0x8] sm:$0xff] %v1218
        %s1254 = sadd.s32 %s269, 7
        %s1255 = sadd.s32 %s270, 7
        %p1256 = scmp.lt.s32.totalorder %s1255, 0
        %s1257 = ssub.s32 0, %s1255
        %s1258 = scalar_select %p1256, %s1257, %s1255
        %s1259 = sand.u32 %s1258, 7
        %s1260 = ssub.s32 0, %s1259
        %s1261 = scalar_select %p1256, %s1260, %s1259
        %p1262 = scmp.ne.s32.totalorder %s1261, 0
        %p1263 = scmp.lt.s32.totalorder %s1261, 0
        %p1264 = pnand %p1263, %p1262
        %p1265 = pneg %p1264
        %s1266 = sadd.s32 %s1261, 8
        %s1267 = scalar_select %p1265, %s1266, %s1261
        %p1268 = scmp.lt.s32.totalorder %s1255, 0
        %s1269 = ssub.s32 0, %s1255
        %s1270 = scalar_select %p1268, %s1269, %s1255
        %s1271 = sdiv.u32.pop %s1270, 3
        %s1272 = srem.u32.pop %s1270, 3
        %s1273 = ssub.s32 0, %s1272
        %s1274 = scalar_select %p1268, %s1273, %s1272
        %p1275 = scmp.ne.s32.totalorder %s1274, 0
        %p1276 = scmp.lt.s32.totalorder %s1274, 0
        %p1277 = pnand %p1276, %p1275
        %p1278 = pneg %p1277
        %s1279 = sadd.s32 %s1274, 3
        %s1280 = scalar_select %p1278, %s1279, %s1274
        %s1281 = smul.u32 %s1254, 4
        %s1282 = sld [smem:[#allocation6 + %s1281]]
        %s1283 = sadd.s32 %s1281, 1
        %s1284 = sld [smem:[#allocation6 + %s1283]]
        %s1285 = sadd.s32 %s1281, 2
        %s1286 = sld [smem:[#allocation6 + %s1285]]
        %s1287 = sadd.s32 %s1281, 3
        %s1288 = sld [smem:[#allocation6 + %s1287]]
        %s1289 = scalar_lea.vmem %s220, 112
        %v1290 = vld [vmem:[%s1289] sm:$0xff]
        %v1291 = vld [vmem:[%s1289 + $0x8] sm:$0xff]
        %s1292 = smul.u32 %s1267, 2
        %s1293 = smul.addr %s1292, 8
        %s1294 = scalar_lea.vmem [#allocation2], %s1293
        %v1295 = vld [vmem:[%s1294] sm:$0xff]
        %v1296 = vld [vmem:[%s1294 + $0x8] sm:$0xff]
        %s1297 = sadd.s32 %s1267, 4
        %p1298 = scmp.lt.s32.totalorder %s1297, 0
        %s1299 = ssub.s32 0, %s1297
        %s1300 = scalar_select %p1298, %s1299, %s1297
        %s1301 = sand.u32 %s1300, 7
        %s1302 = ssub.s32 0, %s1301
        %s1303 = scalar_select %p1298, %s1302, %s1301
        %p1304 = scmp.ne.s32.totalorder %s1303, 0
        %p1305 = scmp.lt.s32.totalorder %s1303, 0
        %p1306 = pnand %p1305, %p1304
        %p1307 = pneg %p1306
        %s1308 = sadd.s32 %s1303, 8
        %s1309 = scalar_select %p1307, %s1308, %s1303
        %s1310 = smul.u32 %s1309, 2
        %s1311 = smul.addr %s1310, 8
        %s1312 = scalar_lea.vmem [#allocation2], %s1311
        %v1313 = vld [vmem:[%s1312] sm:$0xff]
        %v1314 = vld [vmem:[%s1312 + $0x8] sm:$0xff]
        %s1315 = smul.u32 %s1280, 2
        %s1316 = smul.addr %s1315, 8
        %s1317 = scalar_lea.vmem [#allocation3], %s1316
        %v1318 = vld [vmem:[%s1317] sm:$0xff]
        %v1319 = vld [vmem:[%s1317 + $0x8] sm:$0xff]
        %s1320 = sadd.s32 %s1280, 1
        %p1321 = scmp.lt.s32.totalorder %s1320, 0
        %s1322 = ssub.s32 0, %s1320
        %s1323 = scalar_select %p1321, %s1322, %s1320
        %s1324 = sdiv.u32.pop %s1323, 3
        %s1325 = srem.u32.pop %s1323, 3
        %s1326 = ssub.s32 0, %s1325
        %s1327 = scalar_select %p1321, %s1326, %s1325
        %p1328 = scmp.ne.s32.totalorder %s1327, 0
        %p1329 = scmp.lt.s32.totalorder %s1327, 0
        %p1330 = pnand %p1329, %p1328
        %p1331 = pneg %p1330
        %s1332 = sadd.s32 %s1327, 3
        %s1333 = scalar_select %p1331, %s1332, %s1327
        %s1334 = smul.u32 %s1333, 2
        %s1335 = smul.addr %s1334, 8
        %s1336 = scalar_lea.vmem [#allocation3], %s1335
        %v1337 = vld [vmem:[%s1336] sm:$0xff]
        %v1338 = vld [vmem:[%s1336 + $0x8] sm:$0xff]
        %s1339 = sadd.s32 %s1280, 2
        %p1340 = scmp.lt.s32.totalorder %s1339, 0
        %s1341 = ssub.s32 0, %s1339
        %s1342 = scalar_select %p1340, %s1341, %s1339
        %s1343 = sdiv.u32.pop %s1342, 3
        %s1344 = srem.u32.pop %s1342, 3
        %s1345 = ssub.s32 0, %s1344
        %s1346 = scalar_select %p1340, %s1345, %s1344
        %p1347 = scmp.ne.s32.totalorder %s1346, 0
        %p1348 = scmp.lt.s32.totalorder %s1346, 0
        %p1349 = pnand %p1348, %p1347
        %p1350 = pneg %p1349
        %s1351 = sadd.s32 %s1346, 3
        %s1352 = scalar_select %p1350, %s1351, %s1346
        %s1353 = smul.u32 %s1352, 2
        %s1354 = smul.addr %s1353, 8
        %s1355 = scalar_lea.vmem [#allocation3], %s1354
        %v1356 = vld [vmem:[%s1355] sm:$0xff]
        %v1357 = vld [vmem:[%s1355 + $0x8] sm:$0xff]
        %v1358 = vmul.f32 %v1290, %v1313
        %v1359 = vmul.f32 %v1291, %v1314
        %v1360 = vstv %s1282
        %v1361 = vmul.f32 %v1360, %v1358
        %v1362 = vmul.f32 %v1360, %v1359
        %v1363 = vsub.f32 1.0, %v1361
        %v1364 = vsub.f32 1.0, %v1362
        %v1365 = vstv %s1284
        %v1366 = vmul.f32 %v1365, %v1356
        %v1367 = vmul.f32 %v1365, %v1357
        %v1368 = vmul.f32 %v1363, %v1366
        %v1369 = vmul.f32 %v1364, %v1367
        %v1370 = vsub.f32 1.0, %v1368
        %v1371 = vsub.f32 1.0, %v1369
        %v1372 = vstv %s1286
        %v1373 = vmul.f32 %v1372, %v1337
        %v1374 = vmul.f32 %v1372, %v1338
        %v1375 = vmul.f32 %v1370, %v1373
        %v1376 = vmul.f32 %v1371, %v1374
        %v1377 = vsub.f32 1.0, %v1375
        %v1378 = vsub.f32 1.0, %v1376
        %v1379 = vstv %s1288
        %v1380 = vmul.f32 %v1379, %v1318
        %v1381 = vmul.f32 %v1379, %v1319
        %v1382 = vmul.f32 %v1377, %v1380
        %v1383 = vmul.f32 %v1378, %v1381
        %v1384 = vsub.f32 1.0, %v1382
        %v1385 = vsub.f32 1.0, %v1383
        %v1386 = vmul.f32 %v1384, %v1295
        %v1387 = vmul.f32 %v1385, %v1296
        %s1388 = scalar_lea.vmem %s210, 112 [#allocation9]
        %1389 = vst [vmem:[%s1388] sm:$0xff] %v1386
        %1390 = vst [vmem:[%s1388 + $0x8] sm:$0xff] %v1387
        %1391 = vst [vmem:[%s1294] sm:$0xff] %v1290
        %1392 = vst [vmem:[%s1294 + $0x8] sm:$0xff] %v1291
        %1393 = vst [vmem:[%s1317] sm:$0xff] %v1358
        %1394 = vst [vmem:[%s1317 + $0x8] sm:$0xff] %v1359
        %p1395 = scmp.eq.s32.totalorder %s29, 1
        // Predicated region
        $region49: #{tpu_custom_call.1} parent=31 // pred_check
          %p1396 = pneg %p1395
        $region50: #{tpu_custom_call.1} parent=31 // pred_check_branch
          %1398 = sbr.rel (%p1396) target = $region52
        $region51: #{tpu_custom_call.1} parent=31 // pred_region
          %s1399 = sshra.s32 %s223, 3
          %s1400 = sand.u32 %s223, 7
          %s1401 = smul.u32 %s1399, 2
          %s1402 = smul.addr %s1401, 128
          %s1403 = scalar_lea.hbm %s6, %s1402
          // Predicated region
          $region53: #{tpu_custom_call.1} parent=51 // pred_check
            _
          $region54: #{tpu_custom_call.1} parent=51 // pred_check_branch
            %1405 = sbr.rel target = $region56
          $region55: #{tpu_custom_call.1} parent=51 // pred_region
            %1406 = sst [smem:[#allocation12]] [#allocation17]
            %1407 = sst [smem:[#allocation13]] [#allocation16]
          $region56: #{tpu_custom_call.1} parent=51 // pred_fallthru
            _
          %1409 = shalt.err (0)
          %s1411 = sshll.u32 [#allocation2], 4
          %s1412 = int_to_ptr.vmem [resolvable:$true] %s1411
          %1414 = dma.vmem_to_hbm [thread:$0]  %s1412, 2048, %s1403, [#allocation4]
          %s1415 = smul.addr %s1401, 128
          %s1416 = scalar_lea.hbm %s7, %s1415
          %s1417 = scalar_lea.sflag [#allocation4], 1
          // Predicated region
          $region57: #{tpu_custom_call.1} parent=51 // pred_check
            _
          $region58: #{tpu_custom_call.1} parent=51 // pred_check_branch
            %1419 = sbr.rel target = $region60
          $region59: #{tpu_custom_call.1} parent=51 // pred_region
            %1420 = sst [smem:[#allocation12]] [#allocation19]
            %1421 = sst [smem:[#allocation13]] [#allocation18]
          $region60: #{tpu_custom_call.1} parent=51 // pred_fallthru
            _
          %1423 = shalt.err (0)
          %s1425 = sshll.u32 [#allocation3], 4
          %s1426 = int_to_ptr.vmem [resolvable:$true] %s1425
          %1428 = dma.vmem_to_hbm [thread:$0]  %s1426, 768, %s1416, %s1417
          %s1429 = smul.u32 8, 8
          %s1430 = smul.u32 %s1429, 1
          %s1431 = smul.u32 %s1430, 2
          %s1432 = sshll.u32 %s1431, 4
          %1433 = dma.done [#allocation4], %s1432
          %s1434 = smul.u32 8, 3
          %s1435 = smul.u32 %s1434, 1
          %s1436 = smul.u32 %s1435, 2
          %s1437 = sshll.u32 %s1436, 4
          %1438 = dma.done %s1417, %s1437
        $region52: #{tpu_custom_call.1} parent=31 // pred_fallthru
          _
        %s1439 = sand.u32 %s116, 1
        %s1440 = scalar_lea.sflag [#allocation7], %s1439
        %s1441 = sand.u32 %s116, 1
        %s1442 = smul.addr %s1441, 128
        %s1443 = scalar_lea.vmem [#allocation9], %s1442
        // Predicated region
        $region61: #{tpu_custom_call.1} parent=31 // pred_check
          %p1444 = pneg %p126
        $region62: #{tpu_custom_call.1} parent=31 // pred_check_branch
          %1446 = sbr.rel (%p1444) target = $region64
        $region63: #{tpu_custom_call.1} parent=31 // pred_region
          %s1447 = smul.u32 8, %s29
          %s1449 = ssub.s32 2048, 2048
          %1450 = vsyncadd %s1440, %s1449
          %s1451 = smul.addr %s28, 2
          %s1452 = smul.addr %s1447, 2
          %s1453 = sadd.s32 %s1451, %s1452
          %s1454 = smul.addr %s1453, 128
          %s1455 = scalar_lea.hbm %s5, %s1454
          %s1456 = sshll.u32 %s1443, 4
          %s1457 = int_to_ptr.vmem [resolvable:$true] %s1456
          %1462 = dma.vmem_to_hbm [thread:$0]  %s1457, 2048, %s1455, %s1440, 256, 256, 16
        $region64: #{tpu_custom_call.1} parent=31 // pred_fallthru
          _
      $region32: #{tpu_custom_call.1} parent=5 // pred_fallthru
        _
      %p1463 = scmp.le.s32.totalorder 2, %s19
      // Predicated region
      $region65: #{tpu_custom_call.1} parent=5 // pred_check
        %p1464 = pneg %p1463
      $region66: #{tpu_custom_call.1} parent=5 // pred_check_branch
        %1466 = sbr.rel (%p1464) target = $region68
      $region67: #{tpu_custom_call.1} parent=5 // pred_region
        %s1467 = ssub.s32 %s19, 2
        // Predicated region
        $region69: #{tpu_custom_call.1} parent=67 // pred_check
          %p1468 = pneg %p132
        $region70: #{tpu_custom_call.1} parent=67 // pred_check_branch
          %1470 = sbr.rel (%p1468) target = $region72
        $region71: #{tpu_custom_call.1} parent=67 // pred_region
          %s1471 = sand.u32 %s117, 1
          %s1472 = scalar_lea.sflag [#allocation7], %s1471
          %s1473 = sand.u32 %s117, 1
          %s1474 = smul.addr %s1473, 128
          %s1475 = scalar_lea.vmem [#allocation9], %s1474
          %1476 = dma.done %s1472, 2048
        $region72: #{tpu_custom_call.1} parent=67 // pred_fallthru
          _
      $region68: #{tpu_custom_call.1} parent=5 // pred_fallthru
        _
    $region6: #{tpu_custom_call.1} parent=1 // loop_footer
      %s23 = sadd.s32 1, %s19
    $region7: #{tpu_custom_call.1} parent=1 // loop_footer_branch
      %18 = sbr.rel target = $region3
    $region8: #{tpu_custom_call.1} parent=1 // loop_exit
      _
    %1477 = vsyncpa [#allocation7], 1
    %s1478 = scalar_lea.sflag [#allocation7], 1
    %1479 = vsyncpa %s1478, 1
    %1480 = vsyncpa [#allocation8], 1
    %s1481 = scalar_lea.sflag [#allocation8], 1
    %1482 = vsyncpa %s1481, 1
  %1483 = vsyncmov [#allocation4]
  %s1484 = vpop.sfrf %1483
  %p1485 = scmp.eq.s32.totalorder %s1484, 0
  %p1486 = pneg %p1485
  %1488 = shalt.err (%p1486)
  %s1489 = scalar_lea.sflag [#allocation4], 1
  %1490 = vsyncmov %s1489
  %s1491 = vpop.sfrf %1490
  %p1492 = scmp.eq.s32.totalorder %s1491, 0
  %p1493 = pneg %p1492
  %1495 = shalt.err (%p1493)

</llo_original>
